<compile_context>
chip_gen: v7x
topology: tpu7x:2x2x1
jax: 0.10.0
libtpu: 0.0.40
codegen_flags: <defaults>
</compile_context>

<pallas_src>
import functools
import math

import jax
import jax.numpy as jnp
import numpy as np
from jax.experimental import pallas as pl
from jax.experimental.pallas import tpu as pltpu


# ----------------------------------------------------------------------------
# Fused kernel: whole TCN forward (all temporal blocks + final linear).
# ----------------------------------------------------------------------------
def _fused_tcn_kernel(*args, B, T, k, dilations, has_ds, leaky_slope):
    n_convs = 2 * len(dilations)
    n_in = len(args) - 1 - n_convs
    in_refs = args[:n_in]
    out_ref = args[n_in]
    bufs = args[n_in + 1:]                     # one VMEM staging buf per conv

    refs = iter(in_refs)
    x_ref = next(refs)
    rows = B * T

    # time-within-sample index for each of the B*T folded rows (used to zero
    # tap contributions that would cross a sample boundary).
    r_idx = jax.lax.broadcasted_iota(jnp.int32, (rows, 1), 0)
    if T & (T - 1) == 0:
        t_idx = jnp.bitwise_and(r_idx, T - 1)
    else:
        t_idx = r_idx % T

    mask_cache = {}

    def causal_mask(s):                        # 1.0 where tap stays in-sample
        if s not in mask_cache:
            mask_cache[s] = (t_idx >= s).astype(jnp.float32)
        return mask_cache[s]

    conv_state = [0]

    def causal_conv(h, w_ref, b_ref, d):
        """Causal dilated conv: h (B*T, Cin), w (k, Cin, Cout) -> (B*T, Cout)."""
        buf = bufs[conv_state[0]]
        conv_state[0] += 1
        pad = (k - 1) * d
        # stage h once behind `pad` causal zero rows
        buf[0:pad, :] = jnp.zeros((pad, h.shape[1]), jnp.float32)
        buf[pad:pad + rows, :] = h
        # undelayed tap seeds the accumulator; (BN-folded) bias added here
        acc = jnp.dot(h, w_ref[k - 1],
                      preferred_element_type=jnp.float32) + b_ref[0]
        for j in range(k - 1):
            s = (k - 1 - j) * d                # causal shift of tap j
            tap = buf[j * d:j * d + rows, :] * causal_mask(s)
            acc = acc + jnp.dot(tap, w_ref[j],
                                preferred_element_type=jnp.float32)
        return acc

    h = x_ref[...]
    for blk, d in enumerate(dilations):
        wa, ba, wb, bb = next(refs), next(refs), next(refs), next(refs)
        y = causal_conv(h, wa, ba, d)
        y = jnp.where(y > 0, y, leaky_slope * y)     # LeakyReLU (dropout: id)
        y = causal_conv(y, wb, bb, d)
        y = jnp.where(y > 0, y, leaky_slope * y)     # LeakyReLU (dropout: id)
        if has_ds[blk]:                              # 1x1-conv residual path
            wd, bd = next(refs), next(refs)
            res = jnp.dot(h, wd[...],
                          preferred_element_type=jnp.float32) + bd[0]
        else:
            res = h
        h = jnp.maximum(y + res, 0.0)                # ReLU(out + res)

    # final Linear, then keep only the last time step of every sample
    wl, bl = next(refs), next(refs)
    out_all = jnp.dot(h, wl[...], preferred_element_type=jnp.float32) + bl[0]
    for b in range(B):
        r = b * T + T - 1
        out_ref[b:b + 1, :] = out_all[r:r + 1, :]


# ----------------------------------------------------------------------------
# Wrapper: fold eval-BN into weights, pad channels, single pallas_call.
# ----------------------------------------------------------------------------
def fold_params(params, *, pad_in_to=None, eps=1e-5):
    """Fold eval-mode BatchNorm into conv weights/biases and pad block-0 Cin."""
    def bn_fold(bn):
        scale = bn['gamma'] / jnp.sqrt(bn['var'] + eps)
        shift = bn['beta'] - bn['mean'] * scale
        return scale, shift

    ops, dilations, has_ds = [], [], []
    for i, p in enumerate(params['blocks']):
        s1, t1 = bn_fold(p['bn1'])
        s2, t2 = bn_fold(p['bn2'])
        w1 = p['w1'] * s1[None, None, :]
        b1 = p['b1'] * s1[None, :] + t1[None, :]
        w2 = p['w2'] * s2[None, None, :]
        b2 = p['b2'] * s2[None, :] + t2[None, :]
        wd, bd = p['wd'], p['bd']
        if i == 0 and pad_in_to is not None:
            c_in = w1.shape[1]
            if pad_in_to > c_in:
                w1 = jnp.pad(w1, ((0, 0), (0, pad_in_to - c_in), (0, 0)))
                if wd is not None:
                    wd = jnp.pad(wd, ((0, pad_in_to - c_in), (0, 0)))
        ops += [w1, b1, w2, b2]
        if wd is not None:
            ops += [wd, bd]
        dilations.append(2 ** i)
        has_ds.append(wd is not None)
    ops += [params['wl'], params['bl']]
    return ops, tuple(dilations), tuple(has_ds)


def tcn_model_forward(x, params, *, kernel_size, leaky_slope):
    """Fused Pallas forward of TCNModel (eval mode).  x: (B, T, input_size)."""
    B, T, c_in = x.shape
    rows = B * T
    c_pad = -(-c_in // 8) * 8                       # 63 -> 64: 8-aligned lanes
    if c_pad != c_in:
        x = jnp.pad(x, ((0, 0), (0, 0), (0, c_pad - c_in)))
    x2 = x.reshape(rows, c_pad)

    operands, dilations, has_ds = fold_params(params, pad_in_to=c_pad)
    operands = [x2] + operands

    # per-conv VMEM staging buffers: (k-1)*d causal zero rows + B*T data rows
    widths = [c_pad] + [int(p['w1'].shape[2]) for p in params['blocks']]
    scratch = []
    for i in range(len(params['blocks'])):
        d = 2 ** i
        pad = (kernel_size - 1) * d
        scratch.append(pltpu.VMEM((pad + rows, widths[i]), jnp.float32))
        scratch.append(pltpu.VMEM((pad + rows, widths[i + 1]), jnp.float32))

    out_dim = params['wl'].shape[1]
    kernel = functools.partial(
        _fused_tcn_kernel, B=B, T=T, k=kernel_size, dilations=dilations,
        has_ds=has_ds, leaky_slope=leaky_slope)

    def full_spec(a):
        return pl.BlockSpec(a.shape, lambda i, _nd=a.ndim: (0,) * _nd)

    return pl.pallas_call(
        kernel,
        out_shape=jax.ShapeDtypeStruct((B, out_dim), jnp.float32),
        grid_spec=pltpu.PrefetchScalarGridSpec(
            num_scalar_prefetch=0,
            grid=(1,),
            in_specs=[full_spec(a) for a in operands],
            out_specs=pl.BlockSpec((B, out_dim), lambda i: (0, 0)),
            scratch_shapes=scratch),
        compiler_params=pltpu.CompilerParams(
            dimension_semantics=("arbitrary",)),
    )(*operands)


# ----------------------------------------------------------------------------
# Parameter init (deterministic, mirrors the PyTorch __init__ shapes)
# ----------------------------------------------------------------------------
def _bn_init(out_c):
    return dict(gamma=jnp.ones((out_c,), jnp.float32),
                beta=jnp.zeros((out_c,), jnp.float32),
                mean=jnp.zeros((out_c,), jnp.float32),
                var=jnp.ones((out_c,), jnp.float32))


def init_params(key, input_size, num_channels, kernel_size, output_size):
    blocks = []
    in_c = input_size
    for out_c in num_channels:
        key, k1, k2, k3, k4, k5, k6 = jax.random.split(key, 7)
        std1 = math.sqrt(2.0 / (in_c * kernel_size))   # kaiming_normal (relu)
        std2 = math.sqrt(2.0 / (out_c * kernel_size))
        stdd = math.sqrt(2.0 / in_c)
        bb1 = 1.0 / math.sqrt(in_c * kernel_size)
        bb2 = 1.0 / math.sqrt(out_c * kernel_size)
        bbd = 1.0 / math.sqrt(in_c)
        has_ds = in_c != out_c
        blocks.append(dict(
            w1=std1 * jax.random.normal(k1, (kernel_size, in_c, out_c), jnp.float32),
            b1=jax.random.uniform(k2, (1, out_c), jnp.float32, -bb1, bb1),
            bn1=_bn_init(out_c),
            w2=std2 * jax.random.normal(k3, (kernel_size, out_c, out_c), jnp.float32),
            b2=jax.random.uniform(k4, (1, out_c), jnp.float32, -bb2, bb2),
            bn2=_bn_init(out_c),
            wd=(stdd * jax.random.normal(k5, (in_c, out_c), jnp.float32)) if has_ds else None,
            bd=jax.random.uniform(k6, (1, out_c), jnp.float32, -bbd, bbd) if has_ds else None,
        ))
        in_c = out_c
    key, kl1, kl2 = jax.random.split(key, 3)
    bound = 1.0 / math.sqrt(in_c)
    wl = jax.random.uniform(kl1, (in_c, output_size), jnp.float32, -bound, bound)
    bl = jax.random.uniform(kl2, (1, output_size), jnp.float32, -bound, bound)
    return dict(blocks=blocks, wl=wl, bl=bl)


# ----------------------------------------------------------------------------
# Pure-JAX reference (mirrors PyTorch eval-mode forward) for verification
# ----------------------------------------------------------------------------
def ref_forward(x, params, *, kernel_size, leaky_slope, eps=1e-5):
    h = jnp.transpose(x, (0, 2, 1))                     # (B, C, T) like PyTorch
    for i, p in enumerate(params['blocks']):
        d = 2 ** i
        pad = (kernel_size - 1) * d

        def conv(inp, w, b):
            w_oik = jnp.transpose(w, (2, 1, 0))         # (Cout, Cin, k)
            y = jax.lax.conv_general_dilated(
                inp, w_oik, window_strides=(1,), padding=[(pad, pad)],
                rhs_dilation=(d,), dimension_numbers=('NCH', 'OIH', 'NCH'))
            return y + b[0][None, :, None]

        def bn(y, s):
            scale = s['gamma'] / jnp.sqrt(s['var'] + eps)
            shift = s['beta'] - s['mean'] * scale
            return y * scale[None, :, None] + shift[None, :, None]

        y = bn(conv(h, p['w1'], p['b1'])[:, :, :-pad], p['bn1'])
        y = jnp.where(y > 0, y, leaky_slope * y)
        y2 = bn(conv(y, p['w2'], p['b2'])[:, :, :-pad], p['bn2'])
        y2 = jnp.where(y2 > 0, y2, leaky_slope * y2)
        if p['wd'] is not None:
            res = jnp.einsum('bct,co->bot', h, p['wd']) + p['bd'][0][None, :, None]
        else:
            res = h
        h = jnp.maximum(y2 + res, 0.0)
    return h[:, :, -1] @ params['wl'] + params['bl'][0]


if __name__ == "__main__":
    INPUT_SIZE = 63
    OUTPUT_SIZE = 4
    NUM_CHANNELS = [32, 64]
    KERNEL_SIZE = 5
    LEAKY_SLOPE = 0.2608152750046324
    B, T = 2, 16

    key = jax.random.PRNGKey(0)
    key, kx, kp = jax.random.split(key, 3)
    x = jax.random.normal(kx, (B, T, INPUT_SIZE), jnp.float32)
    params = init_params(kp, INPUT_SIZE, NUM_CHANNELS, KERNEL_SIZE, OUTPUT_SIZE)

    fwd = jax.jit(functools.partial(tcn_model_forward,
                                    kernel_size=KERNEL_SIZE,
                                    leaky_slope=LEAKY_SLOPE))
    out = jax.block_until_ready(fwd(x, params))
    assert out.shape == (B, OUTPUT_SIZE)

    ref = jax.block_until_ready(
        ref_forward(x, params, kernel_size=KERNEL_SIZE, leaky_slope=LEAKY_SLOPE))
    # Tolerance is bounded by default TPU f32 matmul/conv precision (bf16 MXU
    # passes) differing between the Pallas matmul formulation and XLA's conv,
    # not by kernel structure; any tap/offset regression produces O(1) errors.
    np.testing.assert_allclose(np.asarray(out), np.asarray(ref),
                               rtol=1e-2, atol=1e-2)
    print("KERNEL_OK")
</pallas_src>

<mosaic_0001>
module attributes {stable_mosaic.version = 11 : i64} {
  func.func @_fused_tcn_kernel(%arg0: i32, %arg1: memref<32x64xf32, #tpu.memory_space<vmem>>, %arg2: memref<5x64x32xf32, #tpu.memory_space<vmem>>, %arg3: memref<1x32xf32, #tpu.memory_space<vmem>>, %arg4: memref<5x32x32xf32, #tpu.memory_space<vmem>>, %arg5: memref<1x32xf32, #tpu.memory_space<vmem>>, %arg6: memref<64x32xf32, #tpu.memory_space<vmem>>, %arg7: memref<1x32xf32, #tpu.memory_space<vmem>>, %arg8: memref<5x32x64xf32, #tpu.memory_space<vmem>>, %arg9: memref<1x64xf32, #tpu.memory_space<vmem>>, %arg10: memref<5x64x64xf32, #tpu.memory_space<vmem>>, %arg11: memref<1x64xf32, #tpu.memory_space<vmem>>, %arg12: memref<32x64xf32, #tpu.memory_space<vmem>>, %arg13: memref<1x64xf32, #tpu.memory_space<vmem>>, %arg14: memref<64x4xf32, #tpu.memory_space<vmem>>, %arg15: memref<1x4xf32, #tpu.memory_space<vmem>>, %arg16: memref<2x4xf32, #tpu.memory_space<vmem>>, %arg17: memref<36x64xf32, #tpu.memory_space<vmem>>, %arg18: memref<36x32xf32, #tpu.memory_space<vmem>>, %arg19: memref<40x32xf32, #tpu.memory_space<vmem>>, %arg20: memref<40x64xf32, #tpu.memory_space<vmem>>) attributes {dimension_semantics = [#tpu.dimension_semantics<arbitrary>], iteration_bounds = array<i64: 1>, scalar_prefetch = 0 : i64, scratch_operands = 4 : i64, tpu.core_type = #tpu.core_type<tc>, window_params = [{pipeline_mode = #tpu.pipeline_mode<synchronous>, transform_indices = @transform_0, window_bounds = array<i64: 32, 64>}, {pipeline_mode = #tpu.pipeline_mode<synchronous>, transform_indices = @transform_1, window_bounds = array<i64: 5, 64, 32>}, {pipeline_mode = #tpu.pipeline_mode<synchronous>, transform_indices = @transform_2, window_bounds = array<i64: 1, 32>}, {pipeline_mode = #tpu.pipeline_mode<synchronous>, transform_indices = @transform_3, window_bounds = array<i64: 5, 32, 32>}, {pipeline_mode = #tpu.pipeline_mode<synchronous>, transform_indices = @transform_4, window_bounds = array<i64: 1, 32>}, {pipeline_mode = #tpu.pipeline_mode<synchronous>, transform_indices = @transform_5, window_bounds = array<i64: 64, 32>}, {pipeline_mode = #tpu.pipeline_mode<synchronous>, transform_indices = @transform_6, window_bounds = array<i64: 1, 32>}, {pipeline_mode = #tpu.pipeline_mode<synchronous>, transform_indices = @transform_7, window_bounds = array<i64: 5, 32, 64>}, {pipeline_mode = #tpu.pipeline_mode<synchronous>, transform_indices = @transform_8, window_bounds = array<i64: 1, 64>}, {pipeline_mode = #tpu.pipeline_mode<synchronous>, transform_indices = @transform_9, window_bounds = array<i64: 5, 64, 64>}, {pipeline_mode = #tpu.pipeline_mode<synchronous>, transform_indices = @transform_10, window_bounds = array<i64: 1, 64>}, {pipeline_mode = #tpu.pipeline_mode<synchronous>, transform_indices = @transform_11, window_bounds = array<i64: 32, 64>}, {pipeline_mode = #tpu.pipeline_mode<synchronous>, transform_indices = @transform_12, window_bounds = array<i64: 1, 64>}, {pipeline_mode = #tpu.pipeline_mode<synchronous>, transform_indices = @transform_13, window_bounds = array<i64: 64, 4>}, {pipeline_mode = #tpu.pipeline_mode<synchronous>, transform_indices = @transform_14, window_bounds = array<i64: 1, 4>}, {pipeline_mode = #tpu.pipeline_mode<synchronous>, transform_indices = @transform_15, window_bounds = array<i64: 2, 4>}]} {
    %0 = tpu.iota {dimensions = array<i32: 0>} : vector<32x1xi32>
    %c15_i32 = arith.constant 15 : i32
    %1 = vector.broadcast %c15_i32 : i32 to vector<32x1xi32>
    %2 = arith.andi %0, %1 : vector<32x1xi32>
    %c0 = arith.constant 0 : index
    %c0_0 = arith.constant 0 : index
    %3 = vector.load %arg1[%c0, %c0_0] : memref<32x64xf32, #tpu.memory_space<vmem>>, vector<32x64xf32>
    %cst = arith.constant 0.000000e+00 : f32
    %4 = vector.broadcast %cst : f32 to vector<4x64xf32>
    %c0_1 = arith.constant 0 : index
    %c0_2 = arith.constant 0 : index
    %5 = vector.load %arg17[%c0_1, %c0_2] : memref<36x64xf32, #tpu.memory_space<vmem>>, vector<4x64xf32>
    tpu.vector_store %arg17[%c0_1, %c0_2], %4 {strides = array<i32>} : memref<36x64xf32, #tpu.memory_space<vmem>>, vector<4x64xf32>,
    %c4 = arith.constant 4 : index
    %c0_3 = arith.constant 0 : index
    %6 = vector.load %arg17[%c4, %c0_3] : memref<36x64xf32, #tpu.memory_space<vmem>>, vector<32x64xf32>
    tpu.vector_store %arg17[%c4, %c0_3], %3 {strides = array<i32>} : memref<36x64xf32, #tpu.memory_space<vmem>>, vector<32x64xf32>,
    %c4_4 = arith.constant 4 : index
    %c0_5 = arith.constant 0 : index
    %c0_6 = arith.constant 0 : index
    %7 = vector.load %arg2[%c4_4, %c0_5, %c0_6] : memref<5x64x32xf32, #tpu.memory_space<vmem>>, vector<1x64x32xf32>
    %8 = vector.shape_cast %7 : vector<1x64x32xf32> to vector<64x32xf32>
    %cst_7 = arith.constant dense<0.000000e+00> : vector<32x32xf32>
    %9 = tpu.matmul %3, %8, %cst_7 {dimension_numbers = #tpu.dot_dimension_numbers<[1], [0], [0], [1], [0, 0, 1, 1], [], []>} : vector<32x64xf32>, vector<64x32xf32>, vector<32x32xf32> -> vector<32x32xf32>
    %c0_8 = arith.constant 0 : index
    %c0_9 = arith.constant 0 : index
    %10 = vector.load %arg3[%c0_8, %c0_9] : memref<1x32xf32, #tpu.memory_space<vmem>>, vector<1x32xf32>
    %11 = vector.shape_cast %10 : vector<1x32xf32> to vector<32xf32>
    %12 = vector.shape_cast %11 : vector<32xf32> to vector<1x32xf32>
    %13 = vector.broadcast %12 : vector<1x32xf32> to vector<32x32xf32>
    %14 = arith.addf %9, %13 : vector<32x32xf32>
    %c0_10 = arith.constant 0 : index
    %c0_11 = arith.constant 0 : index
    %15 = vector.load %arg17[%c0_10, %c0_11] : memref<36x64xf32, #tpu.memory_space<vmem>>, vector<32x64xf32>
    %c4_i32 = arith.constant 4 : i32
    %16 = vector.broadcast %c4_i32 : i32 to vector<32x1xi32>
    %17 = arith.cmpi sge, %2, %16 : vector<32x1xi32>
    %18 = arith.extui %17 : vector<32x1xi1> to vector<32x1xi32>
    %19 = arith.sitofp %18 : vector<32x1xi32> to vector<32x1xf32>
    %20 = vector.broadcast %19 : vector<32x1xf32> to vector<32x64xf32>
    %21 = arith.mulf %15, %20 : vector<32x64xf32>
    %c0_12 = arith.constant 0 : index
    %c0_13 = arith.constant 0 : index
    %c0_14 = arith.constant 0 : index
    %22 = vector.load %arg2[%c0_12, %c0_13, %c0_14] : memref<5x64x32xf32, #tpu.memory_space<vmem>>, vector<1x64x32xf32>
    %23 = vector.shape_cast %22 : vector<1x64x32xf32> to vector<64x32xf32>
    %cst_15 = arith.constant dense<0.000000e+00> : vector<32x32xf32>
    %24 = tpu.matmul %21, %23, %cst_15 {dimension_numbers = #tpu.dot_dimension_numbers<[1], [0], [0], [1], [0, 0, 1, 1], [], []>} : vector<32x64xf32>, vector<64x32xf32>, vector<32x32xf32> -> vector<32x32xf32>
    %25 = arith.addf %14, %24 : vector<32x32xf32>
    %c1 = arith.constant 1 : index
    %c0_16 = arith.constant 0 : index
    %26 = vector.load %arg17[%c1, %c0_16] : memref<36x64xf32, #tpu.memory_space<vmem>>, vector<32x64xf32>
    %c3_i32 = arith.constant 3 : i32
    %27 = vector.broadcast %c3_i32 : i32 to vector<32x1xi32>
    %28 = arith.cmpi sge, %2, %27 : vector<32x1xi32>
    %29 = arith.extui %28 : vector<32x1xi1> to vector<32x1xi32>
    %30 = arith.sitofp %29 : vector<32x1xi32> to vector<32x1xf32>
    %31 = vector.broadcast %30 : vector<32x1xf32> to vector<32x64xf32>
    %32 = arith.mulf %26, %31 : vector<32x64xf32>
    %c1_17 = arith.constant 1 : index
    %c0_18 = arith.constant 0 : index
    %c0_19 = arith.constant 0 : index
    %33 = vector.load %arg2[%c1_17, %c0_18, %c0_19] : memref<5x64x32xf32, #tpu.memory_space<vmem>>, vector<1x64x32xf32>
    %34 = vector.shape_cast %33 : vector<1x64x32xf32> to vector<64x32xf32>
    %cst_20 = arith.constant dense<0.000000e+00> : vector<32x32xf32>
    %35 = tpu.matmul %32, %34, %cst_20 {dimension_numbers = #tpu.dot_dimension_numbers<[1], [0], [0], [1], [0, 0, 1, 1], [], []>} : vector<32x64xf32>, vector<64x32xf32>, vector<32x32xf32> -> vector<32x32xf32>
    %36 = arith.addf %25, %35 : vector<32x32xf32>
    %c2 = arith.constant 2 : index
    %c0_21 = arith.constant 0 : index
    %37 = vector.load %arg17[%c2, %c0_21] : memref<36x64xf32, #tpu.memory_space<vmem>>, vector<32x64xf32>
    %c2_i32 = arith.constant 2 : i32
    %38 = vector.broadcast %c2_i32 : i32 to vector<32x1xi32>
    %39 = arith.cmpi sge, %2, %38 : vector<32x1xi32>
    %40 = arith.extui %39 : vector<32x1xi1> to vector<32x1xi32>
    %41 = arith.sitofp %40 : vector<32x1xi32> to vector<32x1xf32>
    %42 = vector.broadcast %41 : vector<32x1xf32> to vector<32x64xf32>
    %43 = arith.mulf %37, %42 : vector<32x64xf32>
    %c2_22 = arith.constant 2 : index
    %c0_23 = arith.constant 0 : index
    %c0_24 = arith.constant 0 : index
    %44 = vector.load %arg2[%c2_22, %c0_23, %c0_24] : memref<5x64x32xf32, #tpu.memory_space<vmem>>, vector<1x64x32xf32>
    %45 = vector.shape_cast %44 : vector<1x64x32xf32> to vector<64x32xf32>
    %cst_25 = arith.constant dense<0.000000e+00> : vector<32x32xf32>
    %46 = tpu.matmul %43, %45, %cst_25 {dimension_numbers = #tpu.dot_dimension_numbers<[1], [0], [0], [1], [0, 0, 1, 1], [], []>} : vector<32x64xf32>, vector<64x32xf32>, vector<32x32xf32> -> vector<32x32xf32>
    %47 = arith.addf %36, %46 : vector<32x32xf32>
    %c3 = arith.constant 3 : index
    %c0_26 = arith.constant 0 : index
    %48 = vector.load %arg17[%c3, %c0_26] : memref<36x64xf32, #tpu.memory_space<vmem>>, vector<32x64xf32>
    %c1_i32 = arith.constant 1 : i32
    %49 = vector.broadcast %c1_i32 : i32 to vector<32x1xi32>
    %50 = arith.cmpi sge, %2, %49 : vector<32x1xi32>
    %51 = arith.extui %50 : vector<32x1xi1> to vector<32x1xi32>
    %52 = arith.sitofp %51 : vector<32x1xi32> to vector<32x1xf32>
    %53 = vector.broadcast %52 : vector<32x1xf32> to vector<32x64xf32>
    %54 = arith.mulf %48, %53 : vector<32x64xf32>
    %c3_27 = arith.constant 3 : index
    %c0_28 = arith.constant 0 : index
    %c0_29 = arith.constant 0 : index
    %55 = vector.load %arg2[%c3_27, %c0_28, %c0_29] : memref<5x64x32xf32, #tpu.memory_space<vmem>>, vector<1x64x32xf32>
    %56 = vector.shape_cast %55 : vector<1x64x32xf32> to vector<64x32xf32>
    %cst_30 = arith.constant dense<0.000000e+00> : vector<32x32xf32>
    %57 = tpu.matmul %54, %56, %cst_30 {dimension_numbers = #tpu.dot_dimension_numbers<[1], [0], [0], [1], [0, 0, 1, 1], [], []>} : vector<32x64xf32>, vector<64x32xf32>, vector<32x32xf32> -> vector<32x32xf32>
    %58 = arith.addf %47, %57 : vector<32x32xf32>
    %cst_31 = arith.constant 0.000000e+00 : f32
    %59 = vector.broadcast %cst_31 : f32 to vector<32x32xf32>
    %60 = arith.cmpf ogt, %58, %59 : vector<32x32xf32>
    %cst_32 = arith.constant 0.260815263 : f32
    %61 = vector.broadcast %cst_32 : f32 to vector<32x32xf32>
    %62 = arith.mulf %61, %58 : vector<32x32xf32>
    %63 = arith.select %60, %58, %62 : vector<32x32xi1>, vector<32x32xf32>
    %cst_33 = arith.constant 0.000000e+00 : f32
    %64 = vector.broadcast %cst_33 : f32 to vector<4x32xf32>
    %c0_34 = arith.constant 0 : index
    %c0_35 = arith.constant 0 : index
    %65 = vector.load %arg18[%c0_34, %c0_35] : memref<36x32xf32, #tpu.memory_space<vmem>>, vector<4x32xf32>
    tpu.vector_store %arg18[%c0_34, %c0_35], %64 {strides = array<i32>} : memref<36x32xf32, #tpu.memory_space<vmem>>, vector<4x32xf32>,
    %c4_36 = arith.constant 4 : index
    %c0_37 = arith.constant 0 : index
    %66 = vector.load %arg18[%c4_36, %c0_37] : memref<36x32xf32, #tpu.memory_space<vmem>>, vector<32x32xf32>
    tpu.vector_store %arg18[%c4_36, %c0_37], %63 {strides = array<i32>} : memref<36x32xf32, #tpu.memory_space<vmem>>, vector<32x32xf32>,
    %c4_38 = arith.constant 4 : index
    %c0_39 = arith.constant 0 : index
    %c0_40 = arith.constant 0 : index
    %67 = vector.load %arg4[%c4_38, %c0_39, %c0_40] : memref<5x32x32xf32, #tpu.memory_space<vmem>>, vector<1x32x32xf32>
    %68 = vector.shape_cast %67 : vector<1x32x32xf32> to vector<32x32xf32>
    %cst_41 = arith.constant dense<0.000000e+00> : vector<32x32xf32>
    %69 = tpu.matmul %63, %68, %cst_41 {dimension_numbers = #tpu.dot_dimension_numbers<[1], [0], [0], [1], [0, 0, 1, 1], [], []>} : vector<32x32xf32>, vector<32x32xf32>, vector<32x32xf32> -> vector<32x32xf32>
    %c0_42 = arith.constant 0 : index
    %c0_43 = arith.constant 0 : index
    %70 = vector.load %arg5[%c0_42, %c0_43] : memref<1x32xf32, #tpu.memory_space<vmem>>, vector<1x32xf32>
    %71 = vector.shape_cast %70 : vector<1x32xf32> to vector<32xf32>
    %72 = vector.shape_cast %71 : vector<32xf32> to vector<1x32xf32>
    %73 = vector.broadcast %72 : vector<1x32xf32> to vector<32x32xf32>
    %74 = arith.addf %69, %73 : vector<32x32xf32>
    %c0_44 = arith.constant 0 : index
    %c0_45 = arith.constant 0 : index
    %75 = vector.load %arg18[%c0_44, %c0_45] : memref<36x32xf32, #tpu.memory_space<vmem>>, vector<32x32xf32>
    %76 = vector.broadcast %19 : vector<32x1xf32> to vector<32x32xf32>
    %77 = arith.mulf %75, %76 : vector<32x32xf32>
    %c0_46 = arith.constant 0 : index
    %c0_47 = arith.constant 0 : index
    %c0_48 = arith.constant 0 : index
    %78 = vector.load %arg4[%c0_46, %c0_47, %c0_48] : memref<5x32x32xf32, #tpu.memory_space<vmem>>, vector<1x32x32xf32>
    %79 = vector.shape_cast %78 : vector<1x32x32xf32> to vector<32x32xf32>
    %cst_49 = arith.constant dense<0.000000e+00> : vector<32x32xf32>
    %80 = tpu.matmul %77, %79, %cst_49 {dimension_numbers = #tpu.dot_dimension_numbers<[1], [0], [0], [1], [0, 0, 1, 1], [], []>} : vector<32x32xf32>, vector<32x32xf32>, vector<32x32xf32> -> vector<32x32xf32>
    %81 = arith.addf %74, %80 : vector<32x32xf32>
    %c1_50 = arith.constant 1 : index
    %c0_51 = arith.constant 0 : index
    %82 = vector.load %arg18[%c1_50, %c0_51] : memref<36x32xf32, #tpu.memory_space<vmem>>, vector<32x32xf32>
    %83 = vector.broadcast %30 : vector<32x1xf32> to vector<32x32xf32>
    %84 = arith.mulf %82, %83 : vector<32x32xf32>
    %c1_52 = arith.constant 1 : index
    %c0_53 = arith.constant 0 : index
    %c0_54 = arith.constant 0 : index
    %85 = vector.load %arg4[%c1_52, %c0_53, %c0_54] : memref<5x32x32xf32, #tpu.memory_space<vmem>>, vector<1x32x32xf32>
    %86 = vector.shape_cast %85 : vector<1x32x32xf32> to vector<32x32xf32>
    %cst_55 = arith.constant dense<0.000000e+00> : vector<32x32xf32>
    %87 = tpu.matmul %84, %86, %cst_55 {dimension_numbers = #tpu.dot_dimension_numbers<[1], [0], [0], [1], [0, 0, 1, 1], [], []>} : vector<32x32xf32>, vector<32x32xf32>, vector<32x32xf32> -> vector<32x32xf32>
    %88 = arith.addf %81, %87 : vector<32x32xf32>
    %c2_56 = arith.constant 2 : index
    %c0_57 = arith.constant 0 : index
    %89 = vector.load %arg18[%c2_56, %c0_57] : memref<36x32xf32, #tpu.memory_space<vmem>>, vector<32x32xf32>
    %90 = vector.broadcast %41 : vector<32x1xf32> to vector<32x32xf32>
    %91 = arith.mulf %89, %90 : vector<32x32xf32>
    %c2_58 = arith.constant 2 : index
    %c0_59 = arith.constant 0 : index
    %c0_60 = arith.constant 0 : index
    %92 = vector.load %arg4[%c2_58, %c0_59, %c0_60] : memref<5x32x32xf32, #tpu.memory_space<vmem>>, vector<1x32x32xf32>
    %93 = vector.shape_cast %92 : vector<1x32x32xf32> to vector<32x32xf32>
    %cst_61 = arith.constant dense<0.000000e+00> : vector<32x32xf32>
    %94 = tpu.matmul %91, %93, %cst_61 {dimension_numbers = #tpu.dot_dimension_numbers<[1], [0], [0], [1], [0, 0, 1, 1], [], []>} : vector<32x32xf32>, vector<32x32xf32>, vector<32x32xf32> -> vector<32x32xf32>
    %95 = arith.addf %88, %94 : vector<32x32xf32>
    %c3_62 = arith.constant 3 : index
    %c0_63 = arith.constant 0 : index
    %96 = vector.load %arg18[%c3_62, %c0_63] : memref<36x32xf32, #tpu.memory_space<vmem>>, vector<32x32xf32>
    %97 = vector.broadcast %52 : vector<32x1xf32> to vector<32x32xf32>
    %98 = arith.mulf %96, %97 : vector<32x32xf32>
    %c3_64 = arith.constant 3 : index
    %c0_65 = arith.constant 0 : index
    %c0_66 = arith.constant 0 : index
    %99 = vector.load %arg4[%c3_64, %c0_65, %c0_66] : memref<5x32x32xf32, #tpu.memory_space<vmem>>, vector<1x32x32xf32>
    %100 = vector.shape_cast %99 : vector<1x32x32xf32> to vector<32x32xf32>
    %cst_67 = arith.constant dense<0.000000e+00> : vector<32x32xf32>
    %101 = tpu.matmul %98, %100, %cst_67 {dimension_numbers = #tpu.dot_dimension_numbers<[1], [0], [0], [1], [0, 0, 1, 1], [], []>} : vector<32x32xf32>, vector<32x32xf32>, vector<32x32xf32> -> vector<32x32xf32>
    %102 = arith.addf %95, %101 : vector<32x32xf32>
    %cst_68 = arith.constant 0.000000e+00 : f32
    %103 = vector.broadcast %cst_68 : f32 to vector<32x32xf32>
    %104 = arith.cmpf ogt, %102, %103 : vector<32x32xf32>
    %cst_69 = arith.constant 0.260815263 : f32
    %105 = vector.broadcast %cst_69 : f32 to vector<32x32xf32>
    %106 = arith.mulf %105, %102 : vector<32x32xf32>
    %107 = arith.select %104, %102, %106 : vector<32x32xi1>, vector<32x32xf32>
    %c0_70 = arith.constant 0 : index
    %c0_71 = arith.constant 0 : index
    %108 = vector.load %arg6[%c0_70, %c0_71] : memref<64x32xf32, #tpu.memory_space<vmem>>, vector<64x32xf32>
    %cst_72 = arith.constant dense<0.000000e+00> : vector<32x32xf32>
    %109 = tpu.matmul %3, %108, %cst_72 {dimension_numbers = #tpu.dot_dimension_numbers<[1], [0], [0], [1], [0, 0, 1, 1], [], []>} : vector<32x64xf32>, vector<64x32xf32>, vector<32x32xf32> -> vector<32x32xf32>
    %c0_73 = arith.constant 0 : index
    %c0_74 = arith.constant 0 : index
    %110 = vector.load %arg7[%c0_73, %c0_74] : memref<1x32xf32, #tpu.memory_space<vmem>>, vector<1x32xf32>
    %111 = vector.shape_cast %110 : vector<1x32xf32> to vector<32xf32>
    %112 = vector.shape_cast %111 : vector<32xf32> to vector<1x32xf32>
    %113 = vector.broadcast %112 : vector<1x32xf32> to vector<32x32xf32>
    %114 = arith.addf %109, %113 : vector<32x32xf32>
    %115 = arith.addf %107, %114 : vector<32x32xf32>
    %cst_75 = arith.constant 0.000000e+00 : f32
    %116 = vector.broadcast %cst_75 : f32 to vector<32x32xf32>
    %117 = arith.maximumf %115, %116 : vector<32x32xf32>
    %cst_76 = arith.constant 0.000000e+00 : f32
    %118 = vector.broadcast %cst_76 : f32 to vector<8x32xf32>
    %c0_77 = arith.constant 0 : index
    %c0_78 = arith.constant 0 : index
    %119 = vector.load %arg19[%c0_77, %c0_78] : memref<40x32xf32, #tpu.memory_space<vmem>>, vector<8x32xf32>
    tpu.vector_store %arg19[%c0_77, %c0_78], %118 {strides = array<i32>} : memref<40x32xf32, #tpu.memory_space<vmem>>, vector<8x32xf32>,
    %c8 = arith.constant 8 : index
    %c0_79 = arith.constant 0 : index
    %120 = vector.load %arg19[%c8, %c0_79] : memref<40x32xf32, #tpu.memory_space<vmem>>, vector<32x32xf32>
    tpu.vector_store %arg19[%c8, %c0_79], %117 {strides = array<i32>} : memref<40x32xf32, #tpu.memory_space<vmem>>, vector<32x32xf32>,
    %c4_80 = arith.constant 4 : index
    %c0_81 = arith.constant 0 : index
    %c0_82 = arith.constant 0 : index
    %121 = vector.load %arg8[%c4_80, %c0_81, %c0_82] : memref<5x32x64xf32, #tpu.memory_space<vmem>>, vector<1x32x64xf32>
    %122 = vector.shape_cast %121 : vector<1x32x64xf32> to vector<32x64xf32>
    %cst_83 = arith.constant dense<0.000000e+00> : vector<32x64xf32>
    %123 = tpu.matmul %117, %122, %cst_83 {dimension_numbers = #tpu.dot_dimension_numbers<[1], [0], [0], [1], [0, 0, 1, 1], [], []>} : vector<32x32xf32>, vector<32x64xf32>, vector<32x64xf32> -> vector<32x64xf32>
    %c0_84 = arith.constant 0 : index
    %c0_85 = arith.constant 0 : index
    %124 = vector.load %arg9[%c0_84, %c0_85] : memref<1x64xf32, #tpu.memory_space<vmem>>, vector<1x64xf32>
    %125 = vector.shape_cast %124 : vector<1x64xf32> to vector<64xf32>
    %126 = vector.shape_cast %125 : vector<64xf32> to vector<1x64xf32>
    %127 = vector.broadcast %126 : vector<1x64xf32> to vector<32x64xf32>
    %128 = arith.addf %123, %127 : vector<32x64xf32>
    %c0_86 = arith.constant 0 : index
    %c0_87 = arith.constant 0 : index
    %129 = vector.load %arg19[%c0_86, %c0_87] : memref<40x32xf32, #tpu.memory_space<vmem>>, vector<32x32xf32>
    %c8_i32 = arith.constant 8 : i32
    %130 = vector.broadcast %c8_i32 : i32 to vector<32x1xi32>
    %131 = arith.cmpi sge, %2, %130 : vector<32x1xi32>
    %132 = arith.extui %131 : vector<32x1xi1> to vector<32x1xi32>
    %133 = arith.sitofp %132 : vector<32x1xi32> to vector<32x1xf32>
    %134 = vector.broadcast %133 : vector<32x1xf32> to vector<32x32xf32>
    %135 = arith.mulf %129, %134 : vector<32x32xf32>
    %c0_88 = arith.constant 0 : index
    %c0_89 = arith.constant 0 : index
    %c0_90 = arith.constant 0 : index
    %136 = vector.load %arg8[%c0_88, %c0_89, %c0_90] : memref<5x32x64xf32, #tpu.memory_space<vmem>>, vector<1x32x64xf32>
    %137 = vector.shape_cast %136 : vector<1x32x64xf32> to vector<32x64xf32>
    %cst_91 = arith.constant dense<0.000000e+00> : vector<32x64xf32>
    %138 = tpu.matmul %135, %137, %cst_91 {dimension_numbers = #tpu.dot_dimension_numbers<[1], [0], [0], [1], [0, 0, 1, 1], [], []>} : vector<32x32xf32>, vector<32x64xf32>, vector<32x64xf32> -> vector<32x64xf32>
    %139 = arith.addf %128, %138 : vector<32x64xf32>
    %c2_92 = arith.constant 2 : index
    %c0_93 = arith.constant 0 : index
    %140 = vector.load %arg19[%c2_92, %c0_93] : memref<40x32xf32, #tpu.memory_space<vmem>>, vector<32x32xf32>
    %c6_i32 = arith.constant 6 : i32
    %141 = vector.broadcast %c6_i32 : i32 to vector<32x1xi32>
    %142 = arith.cmpi sge, %2, %141 : vector<32x1xi32>
    %143 = arith.extui %142 : vector<32x1xi1> to vector<32x1xi32>
    %144 = arith.sitofp %143 : vector<32x1xi32> to vector<32x1xf32>
    %145 = vector.broadcast %144 : vector<32x1xf32> to vector<32x32xf32>
    %146 = arith.mulf %140, %145 : vector<32x32xf32>
    %c1_94 = arith.constant 1 : index
    %c0_95 = arith.constant 0 : index
    %c0_96 = arith.constant 0 : index
    %147 = vector.load %arg8[%c1_94, %c0_95, %c0_96] : memref<5x32x64xf32, #tpu.memory_space<vmem>>, vector<1x32x64xf32>
    %148 = vector.shape_cast %147 : vector<1x32x64xf32> to vector<32x64xf32>
    %cst_97 = arith.constant dense<0.000000e+00> : vector<32x64xf32>
    %149 = tpu.matmul %146, %148, %cst_97 {dimension_numbers = #tpu.dot_dimension_numbers<[1], [0], [0], [1], [0, 0, 1, 1], [], []>} : vector<32x32xf32>, vector<32x64xf32>, vector<32x64xf32> -> vector<32x64xf32>
    %150 = arith.addf %139, %149 : vector<32x64xf32>
    %c4_98 = arith.constant 4 : index
    %c0_99 = arith.constant 0 : index
    %151 = vector.load %arg19[%c4_98, %c0_99] : memref<40x32xf32, #tpu.memory_space<vmem>>, vector<32x32xf32>
    %152 = vector.broadcast %19 : vector<32x1xf32> to vector<32x32xf32>
    %153 = arith.mulf %151, %152 : vector<32x32xf32>
    %c2_100 = arith.constant 2 : index
    %c0_101 = arith.constant 0 : index
    %c0_102 = arith.constant 0 : index
    %154 = vector.load %arg8[%c2_100, %c0_101, %c0_102] : memref<5x32x64xf32, #tpu.memory_space<vmem>>, vector<1x32x64xf32>
    %155 = vector.shape_cast %154 : vector<1x32x64xf32> to vector<32x64xf32>
    %cst_103 = arith.constant dense<0.000000e+00> : vector<32x64xf32>
    %156 = tpu.matmul %153, %155, %cst_103 {dimension_numbers = #tpu.dot_dimension_numbers<[1], [0], [0], [1], [0, 0, 1, 1], [], []>} : vector<32x32xf32>, vector<32x64xf32>, vector<32x64xf32> -> vector<32x64xf32>
    %157 = arith.addf %150, %156 : vector<32x64xf32>
    %c6 = arith.constant 6 : index
    %c0_104 = arith.constant 0 : index
    %158 = vector.load %arg19[%c6, %c0_104] : memref<40x32xf32, #tpu.memory_space<vmem>>, vector<32x32xf32>
    %159 = vector.broadcast %41 : vector<32x1xf32> to vector<32x32xf32>
    %160 = arith.mulf %158, %159 : vector<32x32xf32>
    %c3_105 = arith.constant 3 : index
    %c0_106 = arith.constant 0 : index
    %c0_107 = arith.constant 0 : index
    %161 = vector.load %arg8[%c3_105, %c0_106, %c0_107] : memref<5x32x64xf32, #tpu.memory_space<vmem>>, vector<1x32x64xf32>
    %162 = vector.shape_cast %161 : vector<1x32x64xf32> to vector<32x64xf32>
    %cst_108 = arith.constant dense<0.000000e+00> : vector<32x64xf32>
    %163 = tpu.matmul %160, %162, %cst_108 {dimension_numbers = #tpu.dot_dimension_numbers<[1], [0], [0], [1], [0, 0, 1, 1], [], []>} : vector<32x32xf32>, vector<32x64xf32>, vector<32x64xf32> -> vector<32x64xf32>
    %164 = arith.addf %157, %163 : vector<32x64xf32>
    %cst_109 = arith.constant 0.000000e+00 : f32
    %165 = vector.broadcast %cst_109 : f32 to vector<32x64xf32>
    %166 = arith.cmpf ogt, %164, %165 : vector<32x64xf32>
    %cst_110 = arith.constant 0.260815263 : f32
    %167 = vector.broadcast %cst_110 : f32 to vector<32x64xf32>
    %168 = arith.mulf %167, %164 : vector<32x64xf32>
    %169 = arith.select %166, %164, %168 : vector<32x64xi1>, vector<32x64xf32>
    %cst_111 = arith.constant 0.000000e+00 : f32
    %170 = vector.broadcast %cst_111 : f32 to vector<8x64xf32>
    %c0_112 = arith.constant 0 : index
    %c0_113 = arith.constant 0 : index
    %171 = vector.load %arg20[%c0_112, %c0_113] : memref<40x64xf32, #tpu.memory_space<vmem>>, vector<8x64xf32>
    tpu.vector_store %arg20[%c0_112, %c0_113], %170 {strides = array<i32>} : memref<40x64xf32, #tpu.memory_space<vmem>>, vector<8x64xf32>,
    %c8_114 = arith.constant 8 : index
    %c0_115 = arith.constant 0 : index
    %172 = vector.load %arg20[%c8_114, %c0_115] : memref<40x64xf32, #tpu.memory_space<vmem>>, vector<32x64xf32>
    tpu.vector_store %arg20[%c8_114, %c0_115], %169 {strides = array<i32>} : memref<40x64xf32, #tpu.memory_space<vmem>>, vector<32x64xf32>,
    %c4_116 = arith.constant 4 : index
    %c0_117 = arith.constant 0 : index
    %c0_118 = arith.constant 0 : index
    %173 = vector.load %arg10[%c4_116, %c0_117, %c0_118] : memref<5x64x64xf32, #tpu.memory_space<vmem>>, vector<1x64x64xf32>
    %174 = vector.shape_cast %173 : vector<1x64x64xf32> to vector<64x64xf32>
    %cst_119 = arith.constant dense<0.000000e+00> : vector<32x64xf32>
    %175 = tpu.matmul %169, %174, %cst_119 {dimension_numbers = #tpu.dot_dimension_numbers<[1], [0], [0], [1], [0, 0, 1, 1], [], []>} : vector<32x64xf32>, vector<64x64xf32>, vector<32x64xf32> -> vector<32x64xf32>
    %c0_120 = arith.constant 0 : index
    %c0_121 = arith.constant 0 : index
    %176 = vector.load %arg11[%c0_120, %c0_121] : memref<1x64xf32, #tpu.memory_space<vmem>>, vector<1x64xf32>
    %177 = vector.shape_cast %176 : vector<1x64xf32> to vector<64xf32>
    %178 = vector.shape_cast %177 : vector<64xf32> to vector<1x64xf32>
    %179 = vector.broadcast %178 : vector<1x64xf32> to vector<32x64xf32>
    %180 = arith.addf %175, %179 : vector<32x64xf32>
    %c0_122 = arith.constant 0 : index
    %c0_123 = arith.constant 0 : index
    %181 = vector.load %arg20[%c0_122, %c0_123] : memref<40x64xf32, #tpu.memory_space<vmem>>, vector<32x64xf32>
    %182 = vector.broadcast %133 : vector<32x1xf32> to vector<32x64xf32>
    %183 = arith.mulf %181, %182 : vector<32x64xf32>
    %c0_124 = arith.constant 0 : index
    %c0_125 = arith.constant 0 : index
    %c0_126 = arith.constant 0 : index
    %184 = vector.load %arg10[%c0_124, %c0_125, %c0_126] : memref<5x64x64xf32, #tpu.memory_space<vmem>>, vector<1x64x64xf32>
    %185 = vector.shape_cast %184 : vector<1x64x64xf32> to vector<64x64xf32>
    %cst_127 = arith.constant dense<0.000000e+00> : vector<32x64xf32>
    %186 = tpu.matmul %183, %185, %cst_127 {dimension_numbers = #tpu.dot_dimension_numbers<[1], [0], [0], [1], [0, 0, 1, 1], [], []>} : vector<32x64xf32>, vector<64x64xf32>, vector<32x64xf32> -> vector<32x64xf32>
    %187 = arith.addf %180, %186 : vector<32x64xf32>
    %c2_128 = arith.constant 2 : index
    %c0_129 = arith.constant 0 : index
    %188 = vector.load %arg20[%c2_128, %c0_129] : memref<40x64xf32, #tpu.memory_space<vmem>>, vector<32x64xf32>
    %189 = vector.broadcast %144 : vector<32x1xf32> to vector<32x64xf32>
    %190 = arith.mulf %188, %189 : vector<32x64xf32>
    %c1_130 = arith.constant 1 : index
    %c0_131 = arith.constant 0 : index
    %c0_132 = arith.constant 0 : index
    %191 = vector.load %arg10[%c1_130, %c0_131, %c0_132] : memref<5x64x64xf32, #tpu.memory_space<vmem>>, vector<1x64x64xf32>
    %192 = vector.shape_cast %191 : vector<1x64x64xf32> to vector<64x64xf32>
    %cst_133 = arith.constant dense<0.000000e+00> : vector<32x64xf32>
    %193 = tpu.matmul %190, %192, %cst_133 {dimension_numbers = #tpu.dot_dimension_numbers<[1], [0], [0], [1], [0, 0, 1, 1], [], []>} : vector<32x64xf32>, vector<64x64xf32>, vector<32x64xf32> -> vector<32x64xf32>
    %194 = arith.addf %187, %193 : vector<32x64xf32>
    %c4_134 = arith.constant 4 : index
    %c0_135 = arith.constant 0 : index
    %195 = vector.load %arg20[%c4_134, %c0_135] : memref<40x64xf32, #tpu.memory_space<vmem>>, vector<32x64xf32>
    %196 = vector.broadcast %19 : vector<32x1xf32> to vector<32x64xf32>
    %197 = arith.mulf %195, %196 : vector<32x64xf32>
    %c2_136 = arith.constant 2 : index
    %c0_137 = arith.constant 0 : index
    %c0_138 = arith.constant 0 : index
    %198 = vector.load %arg10[%c2_136, %c0_137, %c0_138] : memref<5x64x64xf32, #tpu.memory_space<vmem>>, vector<1x64x64xf32>
    %199 = vector.shape_cast %198 : vector<1x64x64xf32> to vector<64x64xf32>
    %cst_139 = arith.constant dense<0.000000e+00> : vector<32x64xf32>
    %200 = tpu.matmul %197, %199, %cst_139 {dimension_numbers = #tpu.dot_dimension_numbers<[1], [0], [0], [1], [0, 0, 1, 1], [], []>} : vector<32x64xf32>, vector<64x64xf32>, vector<32x64xf32> -> vector<32x64xf32>
    %201 = arith.addf %194, %200 : vector<32x64xf32>
    %c6_140 = arith.constant 6 : index
    %c0_141 = arith.constant 0 : index
    %202 = vector.load %arg20[%c6_140, %c0_141] : memref<40x64xf32, #tpu.memory_space<vmem>>, vector<32x64xf32>
    %203 = vector.broadcast %41 : vector<32x1xf32> to vector<32x64xf32>
    %204 = arith.mulf %202, %203 : vector<32x64xf32>
    %c3_142 = arith.constant 3 : index
    %c0_143 = arith.constant 0 : index
    %c0_144 = arith.constant 0 : index
    %205 = vector.load %arg10[%c3_142, %c0_143, %c0_144] : memref<5x64x64xf32, #tpu.memory_space<vmem>>, vector<1x64x64xf32>
    %206 = vector.shape_cast %205 : vector<1x64x64xf32> to vector<64x64xf32>
    %cst_145 = arith.constant dense<0.000000e+00> : vector<32x64xf32>
    %207 = tpu.matmul %204, %206, %cst_145 {dimension_numbers = #tpu.dot_dimension_numbers<[1], [0], [0], [1], [0, 0, 1, 1], [], []>} : vector<32x64xf32>, vector<64x64xf32>, vector<32x64xf32> -> vector<32x64xf32>
    %208 = arith.addf %201, %207 : vector<32x64xf32>
    %cst_146 = arith.constant 0.000000e+00 : f32
    %209 = vector.broadcast %cst_146 : f32 to vector<32x64xf32>
    %210 = arith.cmpf ogt, %208, %209 : vector<32x64xf32>
    %cst_147 = arith.constant 0.260815263 : f32
    %211 = vector.broadcast %cst_147 : f32 to vector<32x64xf32>
    %212 = arith.mulf %211, %208 : vector<32x64xf32>
    %213 = arith.select %210, %208, %212 : vector<32x64xi1>, vector<32x64xf32>
    %c0_148 = arith.constant 0 : index
    %c0_149 = arith.constant 0 : index
    %214 = vector.load %arg12[%c0_148, %c0_149] : memref<32x64xf32, #tpu.memory_space<vmem>>, vector<32x64xf32>
    %cst_150 = arith.constant dense<0.000000e+00> : vector<32x64xf32>
    %215 = tpu.matmul %117, %214, %cst_150 {dimension_numbers = #tpu.dot_dimension_numbers<[1], [0], [0], [1], [0, 0, 1, 1], [], []>} : vector<32x32xf32>, vector<32x64xf32>, vector<32x64xf32> -> vector<32x64xf32>
    %c0_151 = arith.constant 0 : index
    %c0_152 = arith.constant 0 : index
    %216 = vector.load %arg13[%c0_151, %c0_152] : memref<1x64xf32, #tpu.memory_space<vmem>>, vector<1x64xf32>
    %217 = vector.shape_cast %216 : vector<1x64xf32> to vector<64xf32>
    %218 = vector.shape_cast %217 : vector<64xf32> to vector<1x64xf32>
    %219 = vector.broadcast %218 : vector<1x64xf32> to vector<32x64xf32>
    %220 = arith.addf %215, %219 : vector<32x64xf32>
    %221 = arith.addf %213, %220 : vector<32x64xf32>
    %cst_153 = arith.constant 0.000000e+00 : f32
    %222 = vector.broadcast %cst_153 : f32 to vector<32x64xf32>
    %223 = arith.maximumf %221, %222 : vector<32x64xf32>
    %c0_154 = arith.constant 0 : index
    %c0_155 = arith.constant 0 : index
    %224 = vector.load %arg14[%c0_154, %c0_155] : memref<64x4xf32, #tpu.memory_space<vmem>>, vector<64x4xf32>
    %cst_156 = arith.constant dense<0.000000e+00> : vector<32x4xf32>
    %225 = tpu.matmul %223, %224, %cst_156 {dimension_numbers = #tpu.dot_dimension_numbers<[1], [0], [0], [1], [0, 0, 1, 1], [], []>} : vector<32x64xf32>, vector<64x4xf32>, vector<32x4xf32> -> vector<32x4xf32>
    %c0_157 = arith.constant 0 : index
    %c0_158 = arith.constant 0 : index
    %226 = vector.load %arg15[%c0_157, %c0_158] : memref<1x4xf32, #tpu.memory_space<vmem>>, vector<1x4xf32>
    %227 = vector.shape_cast %226 : vector<1x4xf32> to vector<4xf32>
    %228 = vector.shape_cast %227 : vector<4xf32> to vector<1x4xf32>
    %229 = vector.broadcast %228 : vector<1x4xf32> to vector<32x4xf32>
    %230 = arith.addf %225, %229 : vector<32x4xf32>
    %231 = vector.extract_strided_slice %230 {offsets = [15, 0], sizes = [1, 4], strides = [1, 1]} : vector<32x4xf32> to vector<1x4xf32>
    %c0_159 = arith.constant 0 : index
    %c0_160 = arith.constant 0 : index
    %232 = vector.load %arg16[%c0_159, %c0_160] : memref<2x4xf32, #tpu.memory_space<vmem>>, vector<1x4xf32>
    tpu.vector_store %arg16[%c0_159, %c0_160], %231 {strides = array<i32>} : memref<2x4xf32, #tpu.memory_space<vmem>>, vector<1x4xf32>,
    %233 = vector.extract_strided_slice %230 {offsets = [31, 0], sizes = [1, 4], strides = [1, 1]} : vector<32x4xf32> to vector<1x4xf32>
    %c1_161 = arith.constant 1 : index
    %c0_162 = arith.constant 0 : index
    %234 = vector.load %arg16[%c1_161, %c0_162] : memref<2x4xf32, #tpu.memory_space<vmem>>, vector<1x4xf32>
    tpu.vector_store %arg16[%c1_161, %c0_162], %233 {strides = array<i32>} : memref<2x4xf32, #tpu.memory_space<vmem>>, vector<1x4xf32>,
    return
  }
  func.func @transform_0(%arg0: i32) -> (i32, i32) {
    %c0_i32 = arith.constant 0 : i32
    %c0_i32_0 = arith.constant 0 : i32
    %c0_i32_1 = arith.constant 0 : i32
    return %c0_i32, %c0_i32_0 : i32, i32
  }
  func.func @transform_1(%arg0: i32) -> (i32, i32, i32) {
    %c0_i32 = arith.constant 0 : i32
    %c0_i32_0 = arith.constant 0 : i32
    %c0_i32_1 = arith.constant 0 : i32
    %c0_i32_2 = arith.constant 0 : i32
    return %c0_i32, %c0_i32_0, %c0_i32_1 : i32, i32, i32
  }
  func.func @transform_2(%arg0: i32) -> (i32, i32) {
    %c0_i32 = arith.constant 0 : i32
    %c0_i32_0 = arith.constant 0 : i32
    %c0_i32_1 = arith.constant 0 : i32
    return %c0_i32, %c0_i32_0 : i32, i32
  }
  func.func @transform_3(%arg0: i32) -> (i32, i32, i32) {
    %c0_i32 = arith.constant 0 : i32
    %c0_i32_0 = arith.constant 0 : i32
    %c0_i32_1 = arith.constant 0 : i32
    %c0_i32_2 = arith.constant 0 : i32
    return %c0_i32, %c0_i32_0, %c0_i32_1 : i32, i32, i32
  }
  func.func @transform_4(%arg0: i32) -> (i32, i32) {
    %c0_i32 = arith.constant 0 : i32
    %c0_i32_0 = arith.constant 0 : i32
    %c0_i32_1 = arith.constant 0 : i32
    return %c0_i32, %c0_i32_0 : i32, i32
  }
  func.func @transform_5(%arg0: i32) -> (i32, i32) {
    %c0_i32 = arith.constant 0 : i32
    %c0_i32_0 = arith.constant 0 : i32
    %c0_i32_1 = arith.constant 0 : i32
    return %c0_i32, %c0_i32_0 : i32, i32
  }
  func.func @transform_6(%arg0: i32) -> (i32, i32) {
    %c0_i32 = arith.constant 0 : i32
    %c0_i32_0 = arith.constant 0 : i32
    %c0_i32_1 = arith.constant 0 : i32
    return %c0_i32, %c0_i32_0 : i32, i32
  }
  func.func @transform_7(%arg0: i32) -> (i32, i32, i32) {
    %c0_i32 = arith.constant 0 : i32
    %c0_i32_0 = arith.constant 0 : i32
    %c0_i32_1 = arith.constant 0 : i32
    %c0_i32_2 = arith.constant 0 : i32
    return %c0_i32, %c0_i32_0, %c0_i32_1 : i32, i32, i32
  }
  func.func @transform_8(%arg0: i32) -> (i32, i32) {
    %c0_i32 = arith.constant 0 : i32
    %c0_i32_0 = arith.constant 0 : i32
    %c0_i32_1 = arith.constant 0 : i32
    return %c0_i32, %c0_i32_0 : i32, i32
  }
  func.func @transform_9(%arg0: i32) -> (i32, i32, i32) {
    %c0_i32 = arith.constant 0 : i32
    %c0_i32_0 = arith.constant 0 : i32
    %c0_i32_1 = arith.constant 0 : i32
    %c0_i32_2 = arith.constant 0 : i32
    return %c0_i32, %c0_i32_0, %c0_i32_1 : i32, i32, i32
  }
  func.func @transform_10(%arg0: i32) -> (i32, i32) {
    %c0_i32 = arith.constant 0 : i32
    %c0_i32_0 = arith.constant 0 : i32
    %c0_i32_1 = arith.constant 0 : i32
    return %c0_i32, %c0_i32_0 : i32, i32
  }
  func.func @transform_11(%arg0: i32) -> (i32, i32) {
    %c0_i32 = arith.constant 0 : i32
    %c0_i32_0 = arith.constant 0 : i32
    %c0_i32_1 = arith.constant 0 : i32
    return %c0_i32, %c0_i32_0 : i32, i32
  }
  func.func @transform_12(%arg0: i32) -> (i32, i32) {
    %c0_i32 = arith.constant 0 : i32
    %c0_i32_0 = arith.constant 0 : i32
    %c0_i32_1 = arith.constant 0 : i32
    return %c0_i32, %c0_i32_0 : i32, i32
  }
  func.func @transform_13(%arg0: i32) -> (i32, i32) {
    %c0_i32 = arith.constant 0 : i32
    %c0_i32_0 = arith.constant 0 : i32
    %c0_i32_1 = arith.constant 0 : i32
    return %c0_i32, %c0_i32_0 : i32, i32
  }
  func.func @transform_14(%arg0: i32) -> (i32, i32) {
    %c0_i32 = arith.constant 0 : i32
    %c0_i32_0 = arith.constant 0 : i32
    %c0_i32_1 = arith.constant 0 : i32
    return %c0_i32, %c0_i32_0 : i32, i32
  }
  func.func @transform_15(%arg0: i32) -> (i32, i32) {
    %c0_i32 = arith.constant 0 : i32
    %c0_i32_0 = arith.constant 0 : i32
    %c0_i32_1 = arith.constant 0 : i32
    return %c0_i32, %c0_i32_0 : i32, i32
  }
}

</mosaic_0001>

<llo_original>
// kernel: tcn_model_forward.1
$region0: #{tcn_model_forward.1}
  #allocation0 [shape = 'u32[]', space=smem, size = 0x4, offset = 0x4, fixed_abs, tag = 'smem constant byte address 0x4 - core index']
  #allocation1 [shape = 'u32[144,128]{1,0:T(1,128)}', space=vmem, size = 0x12000, scoped, tag = 'internal scratch']
  #allocation2 [shape = 'f32[36,64]{1,0:T(8,128)}', space=vmem, size = 0x5000, scoped, tag = 'scratch operand']
  #allocation3 [shape = 'f32[36,32]{1,0:T(8,128)}', space=vmem, size = 0x5000, scoped, tag = 'scratch operand']
  #allocation4 [shape = 'f32[40,32]{1,0:T(8,128)}', space=vmem, size = 0x5000, scoped, tag = 'scratch operand']
  #allocation5 [shape = 'f32[40,64]{1,0:T(8,128)}', space=vmem, size = 0x5000, scoped, tag = 'scratch operand']
  %s0 = inlined_call_operand.vmem [shape: f32[32,64], index: 0, kind: input, shape index: {}]
  %s1 = inlined_call_operand.vmem [shape: f32[5,64,32], index: 1, kind: input, shape index: {}]
  %s2 = inlined_call_operand.vmem [shape: f32[1,32], index: 2, kind: input, shape index: {}]
  %s3 = inlined_call_operand.vmem [shape: f32[5,32,32], index: 3, kind: input, shape index: {}]
  %s4 = inlined_call_operand.vmem [shape: f32[1,32], index: 4, kind: input, shape index: {}]
  %s5 = inlined_call_operand.vmem [shape: f32[64,32], index: 5, kind: input, shape index: {}]
  %s6 = inlined_call_operand.vmem [shape: f32[1,32], index: 6, kind: input, shape index: {}]
  %s7 = inlined_call_operand.vmem [shape: f32[5,32,64], index: 7, kind: input, shape index: {}]
  %s8 = inlined_call_operand.vmem [shape: f32[1,64], index: 8, kind: input, shape index: {}]
  %s9 = inlined_call_operand.vmem [shape: f32[5,64,64], index: 9, kind: input, shape index: {}]
  %s10 = inlined_call_operand.vmem [shape: f32[1,64], index: 10, kind: input, shape index: {}]
  %s11 = inlined_call_operand.vmem [shape: f32[32,64], index: 11, kind: input, shape index: {}]
  %s12 = inlined_call_operand.vmem [shape: f32[1,64], index: 12, kind: input, shape index: {}]
  %s13 = inlined_call_operand.vmem [shape: f32[64,4], index: 13, kind: input, shape index: {}]
  %s14 = inlined_call_operand.vmem [shape: f32[1,4], index: 14, kind: input, shape index: {}]
  %s15 = inlined_call_operand.hbm [shape: f32[2,4], index: 15, kind: output, shape index: {}]
  %s16 = sld [smem:[#allocation0]]
  $region70: #{tcn_model_forward.1} parent=0
    _
  %s18 = ssub.s32 1, %s16
  %s19 = scalar_select 0, %s18, %s16
  $region1: #{tcn_model_forward.1} parent=0
    #allocation6 [shape = 'u8[1024]{0}', space=vmem, size = 0x400, scoped, tag = 'output window, operand 0, single buffered']
    #allocation7 [shape = 's32[1]{0}', space=sflag, size = 0x4, scoped, tag = 'scoped memory for tcn_model_forward.1']
    %20 = vsyncpa [#allocation7], 0
    // Predicated region
    $region2: #{tcn_model_forward.1} parent=1 // pred_check
      _
    $region3: #{tcn_model_forward.1} parent=1 // pred_check_branch
      %22 = sbr.rel (0) target = $region5
    $region4: #{tcn_model_forward.1} parent=1 // pred_region
      _
    $region5: #{tcn_model_forward.1} parent=1 // pred_fallthru
      _
    // Predicated region
    $region6: #{tcn_model_forward.1} parent=1 // pred_check
      _
    $region7: #{tcn_model_forward.1} parent=1 // pred_check_branch
      %24 = sbr.rel (0) target = $region9
    $region8: #{tcn_model_forward.1} parent=1 // pred_region
      _
    $region9: #{tcn_model_forward.1} parent=1 // pred_fallthru
      _
    // Predicated region
    $region10: #{tcn_model_forward.1} parent=1 // pred_check
      _
    $region11: #{tcn_model_forward.1} parent=1 // pred_check_branch
      %26 = sbr.rel (0) target = $region13
    $region12: #{tcn_model_forward.1} parent=1 // pred_region
      _
    $region13: #{tcn_model_forward.1} parent=1 // pred_fallthru
      _
    // Predicated region
    $region14: #{tcn_model_forward.1} parent=1 // pred_check
      _
    $region15: #{tcn_model_forward.1} parent=1 // pred_check_branch
      %28 = sbr.rel (0) target = $region17
    $region16: #{tcn_model_forward.1} parent=1 // pred_region
      _
    $region17: #{tcn_model_forward.1} parent=1 // pred_fallthru
      _
    // Predicated region
    $region18: #{tcn_model_forward.1} parent=1 // pred_check
      _
    $region19: #{tcn_model_forward.1} parent=1 // pred_check_branch
      %30 = sbr.rel (0) target = $region21
    $region20: #{tcn_model_forward.1} parent=1 // pred_region
      _
    $region21: #{tcn_model_forward.1} parent=1 // pred_fallthru
      _
    // Predicated region
    $region22: #{tcn_model_forward.1} parent=1 // pred_check
      _
    $region23: #{tcn_model_forward.1} parent=1 // pred_check_branch
      %32 = sbr.rel (0) target = $region25
    $region24: #{tcn_model_forward.1} parent=1 // pred_region
      _
    $region25: #{tcn_model_forward.1} parent=1 // pred_fallthru
      _
    // Predicated region
    $region26: #{tcn_model_forward.1} parent=1 // pred_check
      _
    $region27: #{tcn_model_forward.1} parent=1 // pred_check_branch
      %34 = sbr.rel (0) target = $region29
    $region28: #{tcn_model_forward.1} parent=1 // pred_region
      _
    $region29: #{tcn_model_forward.1} parent=1 // pred_fallthru
      _
    // Predicated region
    $region30: #{tcn_model_forward.1} parent=1 // pred_check
      _
    $region31: #{tcn_model_forward.1} parent=1 // pred_check_branch
      %36 = sbr.rel (0) target = $region33
    $region32: #{tcn_model_forward.1} parent=1 // pred_region
      _
    $region33: #{tcn_model_forward.1} parent=1 // pred_fallthru
      _
    // Predicated region
    $region34: #{tcn_model_forward.1} parent=1 // pred_check
      _
    $region35: #{tcn_model_forward.1} parent=1 // pred_check_branch
      %38 = sbr.rel (0) target = $region37
    $region36: #{tcn_model_forward.1} parent=1 // pred_region
      _
    $region37: #{tcn_model_forward.1} parent=1 // pred_fallthru
      _
    // Predicated region
    $region38: #{tcn_model_forward.1} parent=1 // pred_check
      _
    $region39: #{tcn_model_forward.1} parent=1 // pred_check_branch
      %40 = sbr.rel (0) target = $region41
    $region40: #{tcn_model_forward.1} parent=1 // pred_region
      _
    $region41: #{tcn_model_forward.1} parent=1 // pred_fallthru
      _
    // Predicated region
    $region42: #{tcn_model_forward.1} parent=1 // pred_check
      _
    $region43: #{tcn_model_forward.1} parent=1 // pred_check_branch
      %42 = sbr.rel (0) target = $region45
    $region44: #{tcn_model_forward.1} parent=1 // pred_region
      _
    $region45: #{tcn_model_forward.1} parent=1 // pred_fallthru
      _
    // Predicated region
    $region46: #{tcn_model_forward.1} parent=1 // pred_check
      _
    $region47: #{tcn_model_forward.1} parent=1 // pred_check_branch
      %44 = sbr.rel (0) target = $region49
    $region48: #{tcn_model_forward.1} parent=1 // pred_region
      _
    $region49: #{tcn_model_forward.1} parent=1 // pred_fallthru
      _
    // Predicated region
    $region50: #{tcn_model_forward.1} parent=1 // pred_check
      _
    $region51: #{tcn_model_forward.1} parent=1 // pred_check_branch
      %46 = sbr.rel (0) target = $region53
    $region52: #{tcn_model_forward.1} parent=1 // pred_region
      _
    $region53: #{tcn_model_forward.1} parent=1 // pred_fallthru
      _
    // Predicated region
    $region54: #{tcn_model_forward.1} parent=1 // pred_check
      _
    $region55: #{tcn_model_forward.1} parent=1 // pred_check_branch
      %48 = sbr.rel (0) target = $region57
    $region56: #{tcn_model_forward.1} parent=1 // pred_region
      _
    $region57: #{tcn_model_forward.1} parent=1 // pred_fallthru
      _
    // Predicated region
    $region58: #{tcn_model_forward.1} parent=1 // pred_check
      _
    $region59: #{tcn_model_forward.1} parent=1 // pred_check_branch
      %50 = sbr.rel (0) target = $region61
    $region60: #{tcn_model_forward.1} parent=1 // pred_region
      _
    $region61: #{tcn_model_forward.1} parent=1 // pred_fallthru
      _
    %v51 = vlaneseq
    %v52 = vshrl.u32 %v51, 7
    %v53 = vadd.s32 %v52, 8
    %v54 = vadd.s32 %v52, 16
    %v55 = vadd.s32 %v52, 24
    %v56 = vand.u32 %v52, 15
    %v57 = vand.u32 %v53, 15
    %v58 = vand.u32 %v54, 15
    %v59 = vand.u32 %v55, 15
    %v60 = vld [vmem:[%s0] sm:$0xff]
    %v61 = vld [vmem:[%s0 + $0x8] sm:$0xff]
    %v62 = vld [vmem:[%s0 + $0x10] sm:$0xff]
    %v63 = vld [vmem:[%s0 + $0x18] sm:$0xff]
    %vm64 = vcmask 519168
    %65 = vst.msk [vmem:[#allocation2] sm:$0xf] %vm64, 0.0
    %vm66 = vcmask 523264
    %67 = vst.msk [vmem:[#allocation2 + $0x4] sm:$0xff] %vm66, %v60
    %68 = vst.msk [vmem:[#allocation2 + $0xc] sm:$0xff] %vm66, %v61
    %69 = vst.msk [vmem:[#allocation2 + $0x14] sm:$0xff] %vm66, %v62
    %70 = vst.msk [vmem:[#allocation2 + $0x1c] sm:$0xff] %vm66, %v63
    %s71 = scalar_lea.vmem %s1, 256
    %v72 = vld [vmem:[%s71] sm:$0xff]
    %v73 = vld [vmem:[%s71 + $0x8] sm:$0xff]
    %v74 = vld [vmem:[%s71 + $0x10] sm:$0xff]
    %v75 = vld [vmem:[%s71 + $0x18] sm:$0xff]
    %v76 = vld [vmem:[%s71 + $0x20] sm:$0xff]
    %v77 = vld [vmem:[%s71 + $0x28] sm:$0xff]
    %v78 = vld [vmem:[%s71 + $0x30] sm:$0xff]
    %v79 = vld [vmem:[%s71 + $0x38] sm:$0xff]
    %v80 = vld [vmem:[%s2] sm:$0x1]
    %v82 = vlaneseq
    %v83 = vshrl.u32 %v82, 7
    %v84 = vsub.s32 0, %v83
    %v85 = vrot.slane %v80, %v84
    %v88 = vsel %vm66, %v60, 0
    %v91 = vsel %vm66, %v61, 0
    %v94 = vsel %vm66, %v62, 0
    %v97 = vsel %vm66, %v63, 0
    %99 = vmatprep.subr.mxu0 0.0
    %100 = vmatpush1.msra.mxu0 %v72
    %101 = vmatprep.subr.mxu0 0.0
    %102 = vmatpush1.msra.mxu0 %v73
    %103 = vmatprep.subr.mxu0 0.0
    %104 = vmatpush1.msra.mxu0 %v74
    %105 = vmatprep.subr.mxu0 0.0
    %106 = vmatpush1.msra.mxu0 %v75
    %107 = vmatprep.subr.mxu0 0.0
    %108 = vmatpush1.msra.mxu0 %v76
    %109 = vmatprep.subr.mxu0 0.0
    %110 = vmatpush1.msra.mxu0 %v77
    %111 = vmatprep.subr.mxu0 0.0
    %112 = vmatpush1.msra.mxu0 %v78
    %113 = vmatprep.subr.mxu0 0.0
    %114 = vmatpush1.msra.mxu0 %v79
    %115 = vmatprep.subr.mxu0 0.0
    %116 = vmatpush1.msra.mxu0 0.0
    %117 = vmatprep.subr.mxu0 0.0
    %118 = vmatpush1.msra.mxu0 0.0
    %119 = vmatprep.subr.mxu0 0.0
    %120 = vmatpush1.msra.mxu0 0.0
    %121 = vmatprep.subr.mxu0 0.0
    %122 = vmatpush1.msra.mxu0 0.0
    %123 = vmatprep.subr.mxu0 0.0
    %124 = vmatpush1.msra.mxu0 0.0
    %125 = vmatprep.subr.mxu0 0.0
    %126 = vmatpush1.msra.mxu0 0.0
    %127 = vmatprep.subr.mxu0 0.0
    %128 = vmatpush1.msra.mxu0 0.0
    %129 = vmatprep.subr.mxu0 0.0
    %130 = vmatpush1.msra.mxu0 0.0
    %131 = vmatprep.subr.mxu0 0.0
    %132 = vmatpush1.msra.mxu0 0.0
    %133 = vmatprep.subr.mxu0 0.0
    %134 = vmatpush1.msra.mxu0 0.0
    %135 = vmatprep.subr.mxu0 0.0
    %136 = vmatpush1.msra.mxu0 0.0
    %137 = vmatprep.subr.mxu0 0.0
    %138 = vmatpush1.msra.mxu0 0.0
    %139 = vmatprep.subr.mxu0 0.0
    %140 = vmatpush1.msra.mxu0 0.0
    %141 = vmatprep.subr.mxu0 0.0
    %142 = vmatpush1.msra.mxu0 0.0
    %143 = vmatprep.subr.mxu0 0.0
    %144 = vmatpush1.msra.mxu0 0.0
    %145 = vmatprep.subr.mxu0 0.0
    %146 = vmatpush1.msra.mxu0 0.0
    %147 = vmatprep.subr.mxu0 0.0
    %148 = vmatpush1.msra.mxu0 0.0
    %149 = vmatprep.subr.mxu0 0.0
    %150 = vmatpush1.msra.mxu0 0.0
    %151 = vmatprep.subr.mxu0 0.0
    %152 = vmatpush1.msra.mxu0 0.0
    %153 = vmatprep.subr.mxu0 0.0
    %154 = vmatpush1.msra.mxu0 0.0
    %155 = vmatprep.subr.mxu0 0.0
    %156 = vmatpush1.msra.mxu0 0.0
    %157 = vmatprep.subr.mxu0 0.0
    %158 = vmatpush1.msra.mxu0 0.0
    %159 = vmatprep.subr.mxu0 0.0
    %160 = vmatpush1.msra.mxu0 0.0
    %161 = vmatprep.subr.mxu0 0.0
    %162 = vmatpush1.msra.mxu0 0.0
    %163 = vmatprep.mubr.f32.mxu0 0.0
    %164 = vmatmul.mubr.f32.gmra.mrb[0].mxu0 %v88
    %v165 = vpop.f32.mrb[0].mxu0
    %v166 = vadd.f32 %v85, %v165
    %v167 = vpop.f32.mrb[0].mxu0
    %168 = vmatprep.mubr.f32.mxu0 0.0
    %169 = vmatmul.mubr.f32.gmra.mrb[0].mxu0 %v91
    %v170 = vpop.f32.mrb[0].mxu0
    %v171 = vadd.f32 %v85, %v170
    %v172 = vpop.f32.mrb[0].mxu0
    %173 = vmatprep.mubr.f32.mxu0 0.0
    %174 = vmatmul.mubr.f32.gmra.mrb[0].mxu0 %v94
    %v175 = vpop.f32.mrb[0].mxu0
    %v176 = vadd.f32 %v85, %v175
    %v177 = vpop.f32.mrb[0].mxu0
    %178 = vmatprep.mubr.f32.mxu0 0.0
    %179 = vmatmul.mubr.f32.gmra.mrb[0].mxu0 %v97
    %v180 = vpop.f32.mrb[0].mxu0
    %v181 = vadd.f32 %v85, %v180
    %v182 = vpop.f32.mrb[0].mxu0
    %183 = vdwg.mxu0
    %v184 = vld [vmem:[#allocation2] sm:$0xff]
    %v185 = vld [vmem:[#allocation2 + $0x8] sm:$0xff]
    %v186 = vld [vmem:[#allocation2 + $0x10] sm:$0xff]
    %v187 = vld [vmem:[#allocation2 + $0x18] sm:$0xff]
    %vm188 = vcmp.ge.s32.totalorder %v56, 4
    %vm189 = vcmp.ge.s32.totalorder %v57, 4
    %vm190 = vcmp.ge.s32.totalorder %v58, 4
    %vm191 = vcmp.ge.s32.totalorder %v59, 4
    %v192 = vsel %vm188, 1, 0
    %v193 = vsel %vm189, 1, 0
    %v194 = vsel %vm190, 1, 0
    %v195 = vsel %vm191, 1, 0
    %v196 = vcvt.s32.f32 %v192
    %v197 = vcvt.s32.f32 %v193
    %v198 = vcvt.s32.f32 %v194
    %v199 = vcvt.s32.f32 %v195
    %v200 = vmul.f32 %v184, %v196
    %v201 = vmul.f32 %v185, %v197
    %v202 = vmul.f32 %v186, %v198
    %v203 = vmul.f32 %v187, %v199
    %v204 = vld [vmem:[%s1] sm:$0xff]
    %v205 = vld [vmem:[%s1 + $0x8] sm:$0xff]
    %v206 = vld [vmem:[%s1 + $0x10] sm:$0xff]
    %v207 = vld [vmem:[%s1 + $0x18] sm:$0xff]
    %v208 = vld [vmem:[%s1 + $0x20] sm:$0xff]
    %v209 = vld [vmem:[%s1 + $0x28] sm:$0xff]
    %v210 = vld [vmem:[%s1 + $0x30] sm:$0xff]
    %v211 = vld [vmem:[%s1 + $0x38] sm:$0xff]
    %v213 = vsel %vm66, %v200, 0
    %v216 = vsel %vm66, %v201, 0
    %v219 = vsel %vm66, %v202, 0
    %v222 = vsel %vm66, %v203, 0
    %224 = vmatprep.subr.mxu0 0.0
    %225 = vmatpush1.msra.mxu0 %v204
    %226 = vmatprep.subr.mxu0 0.0
    %227 = vmatpush1.msra.mxu0 %v205
    %228 = vmatprep.subr.mxu0 0.0
    %229 = vmatpush1.msra.mxu0 %v206
    %230 = vmatprep.subr.mxu0 0.0
    %231 = vmatpush1.msra.mxu0 %v207
    %232 = vmatprep.subr.mxu0 0.0
    %233 = vmatpush1.msra.mxu0 %v208
    %234 = vmatprep.subr.mxu0 0.0
    %235 = vmatpush1.msra.mxu0 %v209
    %236 = vmatprep.subr.mxu0 0.0
    %237 = vmatpush1.msra.mxu0 %v210
    %238 = vmatprep.subr.mxu0 0.0
    %239 = vmatpush1.msra.mxu0 %v211
    %240 = vmatprep.subr.mxu0 0.0
    %241 = vmatpush1.msra.mxu0 0.0
    %242 = vmatprep.subr.mxu0 0.0
    %243 = vmatpush1.msra.mxu0 0.0
    %244 = vmatprep.subr.mxu0 0.0
    %245 = vmatpush1.msra.mxu0 0.0
    %246 = vmatprep.subr.mxu0 0.0
    %247 = vmatpush1.msra.mxu0 0.0
    %248 = vmatprep.subr.mxu0 0.0
    %249 = vmatpush1.msra.mxu0 0.0
    %250 = vmatprep.subr.mxu0 0.0
    %251 = vmatpush1.msra.mxu0 0.0
    %252 = vmatprep.subr.mxu0 0.0
    %253 = vmatpush1.msra.mxu0 0.0
    %254 = vmatprep.subr.mxu0 0.0
    %255 = vmatpush1.msra.mxu0 0.0
    %256 = vmatprep.subr.mxu0 0.0
    %257 = vmatpush1.msra.mxu0 0.0
    %258 = vmatprep.subr.mxu0 0.0
    %259 = vmatpush1.msra.mxu0 0.0
    %260 = vmatprep.subr.mxu0 0.0
    %261 = vmatpush1.msra.mxu0 0.0
    %262 = vmatprep.subr.mxu0 0.0
    %263 = vmatpush1.msra.mxu0 0.0
    %264 = vmatprep.subr.mxu0 0.0
    %265 = vmatpush1.msra.mxu0 0.0
    %266 = vmatprep.subr.mxu0 0.0
    %267 = vmatpush1.msra.mxu0 0.0
    %268 = vmatprep.subr.mxu0 0.0
    %269 = vmatpush1.msra.mxu0 0.0
    %270 = vmatprep.subr.mxu0 0.0
    %271 = vmatpush1.msra.mxu0 0.0
    %272 = vmatprep.subr.mxu0 0.0
    %273 = vmatpush1.msra.mxu0 0.0
    %274 = vmatprep.subr.mxu0 0.0
    %275 = vmatpush1.msra.mxu0 0.0
    %276 = vmatprep.subr.mxu0 0.0
    %277 = vmatpush1.msra.mxu0 0.0
    %278 = vmatprep.subr.mxu0 0.0
    %279 = vmatpush1.msra.mxu0 0.0
    %280 = vmatprep.subr.mxu0 0.0
    %281 = vmatpush1.msra.mxu0 0.0
    %282 = vmatprep.subr.mxu0 0.0
    %283 = vmatpush1.msra.mxu0 0.0
    %284 = vmatprep.subr.mxu0 0.0
    %285 = vmatpush1.msra.mxu0 0.0
    %286 = vmatprep.subr.mxu0 0.0
    %287 = vmatpush1.msra.mxu0 0.0
    %288 = vmatprep.mubr.f32.mxu0 0.0
    %289 = vmatmul.mubr.f32.gmra.mrb[0].mxu0 %v213
    %v290 = vpop.f32.mrb[0].mxu0
    %v291 = vadd.f32 0.0, %v290
    %v292 = vpop.f32.mrb[0].mxu0
    %293 = vmatprep.mubr.f32.mxu0 0.0
    %294 = vmatmul.mubr.f32.gmra.mrb[0].mxu0 %v216
    %v295 = vpop.f32.mrb[0].mxu0
    %v296 = vadd.f32 0.0, %v295
    %v297 = vpop.f32.mrb[0].mxu0
    %298 = vmatprep.mubr.f32.mxu0 0.0
    %299 = vmatmul.mubr.f32.gmra.mrb[0].mxu0 %v219
    %v300 = vpop.f32.mrb[0].mxu0
    %v301 = vadd.f32 0.0, %v300
    %v302 = vpop.f32.mrb[0].mxu0
    %303 = vmatprep.mubr.f32.mxu0 0.0
    %304 = vmatmul.mubr.f32.gmra.mrb[0].mxu0 %v222
    %v305 = vpop.f32.mrb[0].mxu0
    %v306 = vadd.f32 0.0, %v305
    %v307 = vpop.f32.mrb[0].mxu0
    %308 = vdwg.mxu0
    %v309 = vadd.f32 %v166, %v291
    %v310 = vadd.f32 %v171, %v296
    %v311 = vadd.f32 %v176, %v301
    %v312 = vadd.f32 %v181, %v306
    %v313 = vld [vmem:[#allocation2 + $0x1] sm:$0xff]
    %v314 = vld [vmem:[#allocation2 + $0x9] sm:$0xff]
    %v315 = vld [vmem:[#allocation2 + $0x11] sm:$0xff]
    %v316 = vld [vmem:[#allocation2 + $0x19] sm:$0xff]
    %vm317 = vcmp.ge.s32.totalorder %v56, 3
    %vm318 = vcmp.ge.s32.totalorder %v57, 3
    %vm319 = vcmp.ge.s32.totalorder %v58, 3
    %vm320 = vcmp.ge.s32.totalorder %v59, 3
    %v321 = vsel %vm317, 1, 0
    %v322 = vsel %vm318, 1, 0
    %v323 = vsel %vm319, 1, 0
    %v324 = vsel %vm320, 1, 0
    %v325 = vcvt.s32.f32 %v321
    %v326 = vcvt.s32.f32 %v322
    %v327 = vcvt.s32.f32 %v323
    %v328 = vcvt.s32.f32 %v324
    %v329 = vmul.f32 %v313, %v325
    %v330 = vmul.f32 %v314, %v326
    %v331 = vmul.f32 %v315, %v327
    %v332 = vmul.f32 %v316, %v328
    %s333 = scalar_lea.vmem %s1, 64
    %v334 = vld [vmem:[%s333] sm:$0xff]
    %v335 = vld [vmem:[%s333 + $0x8] sm:$0xff]
    %v336 = vld [vmem:[%s333 + $0x10] sm:$0xff]
    %v337 = vld [vmem:[%s333 + $0x18] sm:$0xff]
    %v338 = vld [vmem:[%s333 + $0x20] sm:$0xff]
    %v339 = vld [vmem:[%s333 + $0x28] sm:$0xff]
    %v340 = vld [vmem:[%s333 + $0x30] sm:$0xff]
    %v341 = vld [vmem:[%s333 + $0x38] sm:$0xff]
    %v343 = vsel %vm66, %v329, 0
    %v346 = vsel %vm66, %v330, 0
    %v349 = vsel %vm66, %v331, 0
    %v352 = vsel %vm66, %v332, 0
    %354 = vmatprep.subr.mxu0 0.0
    %355 = vmatpush1.msra.mxu0 %v334
    %356 = vmatprep.subr.mxu0 0.0
    %357 = vmatpush1.msra.mxu0 %v335
    %358 = vmatprep.subr.mxu0 0.0
    %359 = vmatpush1.msra.mxu0 %v336
    %360 = vmatprep.subr.mxu0 0.0
    %361 = vmatpush1.msra.mxu0 %v337
    %362 = vmatprep.subr.mxu0 0.0
    %363 = vmatpush1.msra.mxu0 %v338
    %364 = vmatprep.subr.mxu0 0.0
    %365 = vmatpush1.msra.mxu0 %v339
    %366 = vmatprep.subr.mxu0 0.0
    %367 = vmatpush1.msra.mxu0 %v340
    %368 = vmatprep.subr.mxu0 0.0
    %369 = vmatpush1.msra.mxu0 %v341
    %370 = vmatprep.subr.mxu0 0.0
    %371 = vmatpush1.msra.mxu0 0.0
    %372 = vmatprep.subr.mxu0 0.0
    %373 = vmatpush1.msra.mxu0 0.0
    %374 = vmatprep.subr.mxu0 0.0
    %375 = vmatpush1.msra.mxu0 0.0
    %376 = vmatprep.subr.mxu0 0.0
    %377 = vmatpush1.msra.mxu0 0.0
    %378 = vmatprep.subr.mxu0 0.0
    %379 = vmatpush1.msra.mxu0 0.0
    %380 = vmatprep.subr.mxu0 0.0
    %381 = vmatpush1.msra.mxu0 0.0
    %382 = vmatprep.subr.mxu0 0.0
    %383 = vmatpush1.msra.mxu0 0.0
    %384 = vmatprep.subr.mxu0 0.0
    %385 = vmatpush1.msra.mxu0 0.0
    %386 = vmatprep.subr.mxu0 0.0
    %387 = vmatpush1.msra.mxu0 0.0
    %388 = vmatprep.subr.mxu0 0.0
    %389 = vmatpush1.msra.mxu0 0.0
    %390 = vmatprep.subr.mxu0 0.0
    %391 = vmatpush1.msra.mxu0 0.0
    %392 = vmatprep.subr.mxu0 0.0
    %393 = vmatpush1.msra.mxu0 0.0
    %394 = vmatprep.subr.mxu0 0.0
    %395 = vmatpush1.msra.mxu0 0.0
    %396 = vmatprep.subr.mxu0 0.0
    %397 = vmatpush1.msra.mxu0 0.0
    %398 = vmatprep.subr.mxu0 0.0
    %399 = vmatpush1.msra.mxu0 0.0
    %400 = vmatprep.subr.mxu0 0.0
    %401 = vmatpush1.msra.mxu0 0.0
    %402 = vmatprep.subr.mxu0 0.0
    %403 = vmatpush1.msra.mxu0 0.0
    %404 = vmatprep.subr.mxu0 0.0
    %405 = vmatpush1.msra.mxu0 0.0
    %406 = vmatprep.subr.mxu0 0.0
    %407 = vmatpush1.msra.mxu0 0.0
    %408 = vmatprep.subr.mxu0 0.0
    %409 = vmatpush1.msra.mxu0 0.0
    %410 = vmatprep.subr.mxu0 0.0
    %411 = vmatpush1.msra.mxu0 0.0
    %412 = vmatprep.subr.mxu0 0.0
    %413 = vmatpush1.msra.mxu0 0.0
    %414 = vmatprep.subr.mxu0 0.0
    %415 = vmatpush1.msra.mxu0 0.0
    %416 = vmatprep.subr.mxu0 0.0
    %417 = vmatpush1.msra.mxu0 0.0
    %418 = vmatprep.mubr.f32.mxu0 0.0
    %419 = vmatmul.mubr.f32.gmra.mrb[0].mxu0 %v343
    %v420 = vpop.f32.mrb[0].mxu0
    %v421 = vadd.f32 0.0, %v420
    %v422 = vpop.f32.mrb[0].mxu0
    %423 = vmatprep.mubr.f32.mxu0 0.0
    %424 = vmatmul.mubr.f32.gmra.mrb[0].mxu0 %v346
    %v425 = vpop.f32.mrb[0].mxu0
    %v426 = vadd.f32 0.0, %v425
    %v427 = vpop.f32.mrb[0].mxu0
    %428 = vmatprep.mubr.f32.mxu0 0.0
    %429 = vmatmul.mubr.f32.gmra.mrb[0].mxu0 %v349
    %v430 = vpop.f32.mrb[0].mxu0
    %v431 = vadd.f32 0.0, %v430
    %v432 = vpop.f32.mrb[0].mxu0
    %433 = vmatprep.mubr.f32.mxu0 0.0
    %434 = vmatmul.mubr.f32.gmra.mrb[0].mxu0 %v352
    %v435 = vpop.f32.mrb[0].mxu0
    %v436 = vadd.f32 0.0, %v435
    %v437 = vpop.f32.mrb[0].mxu0
    %438 = vdwg.mxu0
    %v439 = vadd.f32 %v309, %v421
    %v440 = vadd.f32 %v310, %v426
    %v441 = vadd.f32 %v311, %v431
    %v442 = vadd.f32 %v312, %v436
    %v443 = vld [vmem:[#allocation2 + $0x2] sm:$0xff]
    %v444 = vld [vmem:[#allocation2 + $0xa] sm:$0xff]
    %v445 = vld [vmem:[#allocation2 + $0x12] sm:$0xff]
    %v446 = vld [vmem:[#allocation2 + $0x1a] sm:$0xff]
    %vm447 = vcmp.ge.s32.totalorder %v56, 2
    %vm448 = vcmp.ge.s32.totalorder %v57, 2
    %vm449 = vcmp.ge.s32.totalorder %v58, 2
    %vm450 = vcmp.ge.s32.totalorder %v59, 2
    %v451 = vsel %vm447, 1, 0
    %v452 = vsel %vm448, 1, 0
    %v453 = vsel %vm449, 1, 0
    %v454 = vsel %vm450, 1, 0
    %v455 = vcvt.s32.f32 %v451
    %v456 = vcvt.s32.f32 %v452
    %v457 = vcvt.s32.f32 %v453
    %v458 = vcvt.s32.f32 %v454
    %v459 = vmul.f32 %v443, %v455
    %v460 = vmul.f32 %v444, %v456
    %v461 = vmul.f32 %v445, %v457
    %v462 = vmul.f32 %v446, %v458
    %s463 = scalar_lea.vmem %s1, 128
    %v464 = vld [vmem:[%s463] sm:$0xff]
    %v465 = vld [vmem:[%s463 + $0x8] sm:$0xff]
    %v466 = vld [vmem:[%s463 + $0x10] sm:$0xff]
    %v467 = vld [vmem:[%s463 + $0x18] sm:$0xff]
    %v468 = vld [vmem:[%s463 + $0x20] sm:$0xff]
    %v469 = vld [vmem:[%s463 + $0x28] sm:$0xff]
    %v470 = vld [vmem:[%s463 + $0x30] sm:$0xff]
    %v471 = vld [vmem:[%s463 + $0x38] sm:$0xff]
    %v473 = vsel %vm66, %v459, 0
    %v476 = vsel %vm66, %v460, 0
    %v479 = vsel %vm66, %v461, 0
    %v482 = vsel %vm66, %v462, 0
    %484 = vmatprep.subr.mxu0 0.0
    %485 = vmatpush1.msra.mxu0 %v464
    %486 = vmatprep.subr.mxu0 0.0
    %487 = vmatpush1.msra.mxu0 %v465
    %488 = vmatprep.subr.mxu0 0.0
    %489 = vmatpush1.msra.mxu0 %v466
    %490 = vmatprep.subr.mxu0 0.0
    %491 = vmatpush1.msra.mxu0 %v467
    %492 = vmatprep.subr.mxu0 0.0
    %493 = vmatpush1.msra.mxu0 %v468
    %494 = vmatprep.subr.mxu0 0.0
    %495 = vmatpush1.msra.mxu0 %v469
    %496 = vmatprep.subr.mxu0 0.0
    %497 = vmatpush1.msra.mxu0 %v470
    %498 = vmatprep.subr.mxu0 0.0
    %499 = vmatpush1.msra.mxu0 %v471
    %500 = vmatprep.subr.mxu0 0.0
    %501 = vmatpush1.msra.mxu0 0.0
    %502 = vmatprep.subr.mxu0 0.0
    %503 = vmatpush1.msra.mxu0 0.0
    %504 = vmatprep.subr.mxu0 0.0
    %505 = vmatpush1.msra.mxu0 0.0
    %506 = vmatprep.subr.mxu0 0.0
    %507 = vmatpush1.msra.mxu0 0.0
    %508 = vmatprep.subr.mxu0 0.0
    %509 = vmatpush1.msra.mxu0 0.0
    %510 = vmatprep.subr.mxu0 0.0
    %511 = vmatpush1.msra.mxu0 0.0
    %512 = vmatprep.subr.mxu0 0.0
    %513 = vmatpush1.msra.mxu0 0.0
    %514 = vmatprep.subr.mxu0 0.0
    %515 = vmatpush1.msra.mxu0 0.0
    %516 = vmatprep.subr.mxu0 0.0
    %517 = vmatpush1.msra.mxu0 0.0
    %518 = vmatprep.subr.mxu0 0.0
    %519 = vmatpush1.msra.mxu0 0.0
    %520 = vmatprep.subr.mxu0 0.0
    %521 = vmatpush1.msra.mxu0 0.0
    %522 = vmatprep.subr.mxu0 0.0
    %523 = vmatpush1.msra.mxu0 0.0
    %524 = vmatprep.subr.mxu0 0.0
    %525 = vmatpush1.msra.mxu0 0.0
    %526 = vmatprep.subr.mxu0 0.0
    %527 = vmatpush1.msra.mxu0 0.0
    %528 = vmatprep.subr.mxu0 0.0
    %529 = vmatpush1.msra.mxu0 0.0
    %530 = vmatprep.subr.mxu0 0.0
    %531 = vmatpush1.msra.mxu0 0.0
    %532 = vmatprep.subr.mxu0 0.0
    %533 = vmatpush1.msra.mxu0 0.0
    %534 = vmatprep.subr.mxu0 0.0
    %535 = vmatpush1.msra.mxu0 0.0
    %536 = vmatprep.subr.mxu0 0.0
    %537 = vmatpush1.msra.mxu0 0.0
    %538 = vmatprep.subr.mxu0 0.0
    %539 = vmatpush1.msra.mxu0 0.0
    %540 = vmatprep.subr.mxu0 0.0
    %541 = vmatpush1.msra.mxu0 0.0
    %542 = vmatprep.subr.mxu0 0.0
    %543 = vmatpush1.msra.mxu0 0.0
    %544 = vmatprep.subr.mxu0 0.0
    %545 = vmatpush1.msra.mxu0 0.0
    %546 = vmatprep.subr.mxu0 0.0
    %547 = vmatpush1.msra.mxu0 0.0
    %548 = vmatprep.mubr.f32.mxu0 0.0
    %549 = vmatmul.mubr.f32.gmra.mrb[0].mxu0 %v473
    %v550 = vpop.f32.mrb[0].mxu0
    %v551 = vadd.f32 0.0, %v550
    %v552 = vpop.f32.mrb[0].mxu0
    %553 = vmatprep.mubr.f32.mxu0 0.0
    %554 = vmatmul.mubr.f32.gmra.mrb[0].mxu0 %v476
    %v555 = vpop.f32.mrb[0].mxu0
    %v556 = vadd.f32 0.0, %v555
    %v557 = vpop.f32.mrb[0].mxu0
    %558 = vmatprep.mubr.f32.mxu0 0.0
    %559 = vmatmul.mubr.f32.gmra.mrb[0].mxu0 %v479
    %v560 = vpop.f32.mrb[0].mxu0
    %v561 = vadd.f32 0.0, %v560
    %v562 = vpop.f32.mrb[0].mxu0
    %563 = vmatprep.mubr.f32.mxu0 0.0
    %564 = vmatmul.mubr.f32.gmra.mrb[0].mxu0 %v482
    %v565 = vpop.f32.mrb[0].mxu0
    %v566 = vadd.f32 0.0, %v565
    %v567 = vpop.f32.mrb[0].mxu0
    %568 = vdwg.mxu0
    %v569 = vadd.f32 %v439, %v551
    %v570 = vadd.f32 %v440, %v556
    %v571 = vadd.f32 %v441, %v561
    %v572 = vadd.f32 %v442, %v566
    %v573 = vld [vmem:[#allocation2 + $0x3] sm:$0xff]
    %v574 = vld [vmem:[#allocation2 + $0xb] sm:$0xff]
    %v575 = vld [vmem:[#allocation2 + $0x13] sm:$0xff]
    %v576 = vld [vmem:[#allocation2 + $0x1b] sm:$0xff]
    %vm577 = vcmp.ge.s32.totalorder %v56, 1
    %vm578 = vcmp.ge.s32.totalorder %v57, 1
    %vm579 = vcmp.ge.s32.totalorder %v58, 1
    %vm580 = vcmp.ge.s32.totalorder %v59, 1
    %v581 = vsel %vm577, 1, 0
    %v582 = vsel %vm578, 1, 0
    %v583 = vsel %vm579, 1, 0
    %v584 = vsel %vm580, 1, 0
    %v585 = vcvt.s32.f32 %v581
    %v586 = vcvt.s32.f32 %v582
    %v587 = vcvt.s32.f32 %v583
    %v588 = vcvt.s32.f32 %v584
    %v589 = vmul.f32 %v573, %v585
    %v590 = vmul.f32 %v574, %v586
    %v591 = vmul.f32 %v575, %v587
    %v592 = vmul.f32 %v576, %v588
    %s593 = scalar_lea.vmem %s1, 192
    %v594 = vld [vmem:[%s593] sm:$0xff]
    %v595 = vld [vmem:[%s593 + $0x8] sm:$0xff]
    %v596 = vld [vmem:[%s593 + $0x10] sm:$0xff]
    %v597 = vld [vmem:[%s593 + $0x18] sm:$0xff]
    %v598 = vld [vmem:[%s593 + $0x20] sm:$0xff]
    %v599 = vld [vmem:[%s593 + $0x28] sm:$0xff]
    %v600 = vld [vmem:[%s593 + $0x30] sm:$0xff]
    %v601 = vld [vmem:[%s593 + $0x38] sm:$0xff]
    %v603 = vsel %vm66, %v589, 0
    %v606 = vsel %vm66, %v590, 0
    %v609 = vsel %vm66, %v591, 0
    %v612 = vsel %vm66, %v592, 0
    %614 = vmatprep.subr.mxu0 0.0
    %615 = vmatpush1.msra.mxu0 %v594
    %616 = vmatprep.subr.mxu0 0.0
    %617 = vmatpush1.msra.mxu0 %v595
    %618 = vmatprep.subr.mxu0 0.0
    %619 = vmatpush1.msra.mxu0 %v596
    %620 = vmatprep.subr.mxu0 0.0
    %621 = vmatpush1.msra.mxu0 %v597
    %622 = vmatprep.subr.mxu0 0.0
    %623 = vmatpush1.msra.mxu0 %v598
    %624 = vmatprep.subr.mxu0 0.0
    %625 = vmatpush1.msra.mxu0 %v599
    %626 = vmatprep.subr.mxu0 0.0
    %627 = vmatpush1.msra.mxu0 %v600
    %628 = vmatprep.subr.mxu0 0.0
    %629 = vmatpush1.msra.mxu0 %v601
    %630 = vmatprep.subr.mxu0 0.0
    %631 = vmatpush1.msra.mxu0 0.0
    %632 = vmatprep.subr.mxu0 0.0
    %633 = vmatpush1.msra.mxu0 0.0
    %634 = vmatprep.subr.mxu0 0.0
    %635 = vmatpush1.msra.mxu0 0.0
    %636 = vmatprep.subr.mxu0 0.0
    %637 = vmatpush1.msra.mxu0 0.0
    %638 = vmatprep.subr.mxu0 0.0
    %639 = vmatpush1.msra.mxu0 0.0
    %640 = vmatprep.subr.mxu0 0.0
    %641 = vmatpush1.msra.mxu0 0.0
    %642 = vmatprep.subr.mxu0 0.0
    %643 = vmatpush1.msra.mxu0 0.0
    %644 = vmatprep.subr.mxu0 0.0
    %645 = vmatpush1.msra.mxu0 0.0
    %646 = vmatprep.subr.mxu0 0.0
    %647 = vmatpush1.msra.mxu0 0.0
    %648 = vmatprep.subr.mxu0 0.0
    %649 = vmatpush1.msra.mxu0 0.0
    %650 = vmatprep.subr.mxu0 0.0
    %651 = vmatpush1.msra.mxu0 0.0
    %652 = vmatprep.subr.mxu0 0.0
    %653 = vmatpush1.msra.mxu0 0.0
    %654 = vmatprep.subr.mxu0 0.0
    %655 = vmatpush1.msra.mxu0 0.0
    %656 = vmatprep.subr.mxu0 0.0
    %657 = vmatpush1.msra.mxu0 0.0
    %658 = vmatprep.subr.mxu0 0.0
    %659 = vmatpush1.msra.mxu0 0.0
    %660 = vmatprep.subr.mxu0 0.0
    %661 = vmatpush1.msra.mxu0 0.0
    %662 = vmatprep.subr.mxu0 0.0
    %663 = vmatpush1.msra.mxu0 0.0
    %664 = vmatprep.subr.mxu0 0.0
    %665 = vmatpush1.msra.mxu0 0.0
    %666 = vmatprep.subr.mxu0 0.0
    %667 = vmatpush1.msra.mxu0 0.0
    %668 = vmatprep.subr.mxu0 0.0
    %669 = vmatpush1.msra.mxu0 0.0
    %670 = vmatprep.subr.mxu0 0.0
    %671 = vmatpush1.msra.mxu0 0.0
    %672 = vmatprep.subr.mxu0 0.0
    %673 = vmatpush1.msra.mxu0 0.0
    %674 = vmatprep.subr.mxu0 0.0
    %675 = vmatpush1.msra.mxu0 0.0
    %676 = vmatprep.subr.mxu0 0.0
    %677 = vmatpush1.msra.mxu0 0.0
    %678 = vmatprep.mubr.f32.mxu0 0.0
    %679 = vmatmul.mubr.f32.gmra.mrb[0].mxu0 %v603
    %v680 = vpop.f32.mrb[0].mxu0
    %v681 = vadd.f32 0.0, %v680
    %v682 = vpop.f32.mrb[0].mxu0
    %683 = vmatprep.mubr.f32.mxu0 0.0
    %684 = vmatmul.mubr.f32.gmra.mrb[0].mxu0 %v606
    %v685 = vpop.f32.mrb[0].mxu0
    %v686 = vadd.f32 0.0, %v685
    %v687 = vpop.f32.mrb[0].mxu0
    %688 = vmatprep.mubr.f32.mxu0 0.0
    %689 = vmatmul.mubr.f32.gmra.mrb[0].mxu0 %v609
    %v690 = vpop.f32.mrb[0].mxu0
    %v691 = vadd.f32 0.0, %v690
    %v692 = vpop.f32.mrb[0].mxu0
    %693 = vmatprep.mubr.f32.mxu0 0.0
    %694 = vmatmul.mubr.f32.gmra.mrb[0].mxu0 %v612
    %v695 = vpop.f32.mrb[0].mxu0
    %v696 = vadd.f32 0.0, %v695
    %v697 = vpop.f32.mrb[0].mxu0
    %698 = vdwg.mxu0
    %v699 = vadd.f32 %v569, %v681
    %v700 = vadd.f32 %v570, %v686
    %v701 = vadd.f32 %v571, %v691
    %v702 = vadd.f32 %v572, %v696
    %vm703 = vcmp.gt.f32.partialorder %v699, 0.0
    %vm704 = vcmp.gt.f32.partialorder %v700, 0.0
    %vm705 = vcmp.gt.f32.partialorder %v701, 0.0
    %vm706 = vcmp.gt.f32.partialorder %v702, 0.0
    %v707 = vmul.f32 %v699, 0.26081526
    %v708 = vmul.f32 %v700, 0.26081526
    %v709 = vmul.f32 %v701, 0.26081526
    %v710 = vmul.f32 %v702, 0.26081526
    %v711 = vsel %vm703, %v699, %v707
    %v712 = vsel %vm704, %v700, %v708
    %v713 = vsel %vm705, %v701, %v709
    %v714 = vsel %vm706, %v702, %v710
    %vm715 = vcmask 257024
    %716 = vst.msk [vmem:[#allocation3] sm:$0xf] %vm715, 0.0
    %vm717 = vcmask 261120
    %718 = vst.msk [vmem:[#allocation3 + $0x4] sm:$0xff] %vm717, %v711
    %719 = vst.msk [vmem:[#allocation3 + $0xc] sm:$0xff] %vm717, %v712
    %720 = vst.msk [vmem:[#allocation3 + $0x14] sm:$0xff] %vm717, %v713
    %721 = vst.msk [vmem:[#allocation3 + $0x1c] sm:$0xff] %vm717, %v714
    %s722 = scalar_lea.vmem %s3, 128
    %v723 = vld [vmem:[%s722] sm:$0xff]
    %v724 = vld [vmem:[%s722 + $0x8] sm:$0xff]
    %v725 = vld [vmem:[%s722 + $0x10] sm:$0xff]
    %v726 = vld [vmem:[%s722 + $0x18] sm:$0xff]
    %v727 = vld [vmem:[%s4] sm:$0x1]
    %v729 = vlaneseq
    %v730 = vshrl.u32 %v729, 7
    %v731 = vsub.s32 0, %v730
    %v732 = vrot.slane %v727, %v731
    %v735 = vsel %vm717, %v711, 0
    %v738 = vsel %vm717, %v712, 0
    %v741 = vsel %vm717, %v713, 0
    %v744 = vsel %vm717, %v714, 0
    %746 = vmatprep.subr.mxu0 0.0
    %747 = vmatpush1.msra.mxu0 %v723
    %748 = vmatprep.subr.mxu0 0.0
    %749 = vmatpush1.msra.mxu0 %v724
    %750 = vmatprep.subr.mxu0 0.0
    %751 = vmatpush1.msra.mxu0 %v725
    %752 = vmatprep.subr.mxu0 0.0
    %753 = vmatpush1.msra.mxu0 %v726
    %754 = vmatprep.subr.mxu0 0.0
    %755 = vmatpush1.msra.mxu0 0.0
    %756 = vmatprep.subr.mxu0 0.0
    %757 = vmatpush1.msra.mxu0 0.0
    %758 = vmatprep.subr.mxu0 0.0
    %759 = vmatpush1.msra.mxu0 0.0
    %760 = vmatprep.subr.mxu0 0.0
    %761 = vmatpush1.msra.mxu0 0.0
    %762 = vmatprep.subr.mxu0 0.0
    %763 = vmatpush1.msra.mxu0 0.0
    %764 = vmatprep.subr.mxu0 0.0
    %765 = vmatpush1.msra.mxu0 0.0
    %766 = vmatprep.subr.mxu0 0.0
    %767 = vmatpush1.msra.mxu0 0.0
    %768 = vmatprep.subr.mxu0 0.0
    %769 = vmatpush1.msra.mxu0 0.0
    %770 = vmatprep.subr.mxu0 0.0
    %771 = vmatpush1.msra.mxu0 0.0
    %772 = vmatprep.subr.mxu0 0.0
    %773 = vmatpush1.msra.mxu0 0.0
    %774 = vmatprep.subr.mxu0 0.0
    %775 = vmatpush1.msra.mxu0 0.0
    %776 = vmatprep.subr.mxu0 0.0
    %777 = vmatpush1.msra.mxu0 0.0
    %778 = vmatprep.subr.mxu0 0.0
    %779 = vmatpush1.msra.mxu0 0.0
    %780 = vmatprep.subr.mxu0 0.0
    %781 = vmatpush1.msra.mxu0 0.0
    %782 = vmatprep.subr.mxu0 0.0
    %783 = vmatpush1.msra.mxu0 0.0
    %784 = vmatprep.subr.mxu0 0.0
    %785 = vmatpush1.msra.mxu0 0.0
    %786 = vmatprep.subr.mxu0 0.0
    %787 = vmatpush1.msra.mxu0 0.0
    %788 = vmatprep.subr.mxu0 0.0
    %789 = vmatpush1.msra.mxu0 0.0
    %790 = vmatprep.subr.mxu0 0.0
    %791 = vmatpush1.msra.mxu0 0.0
    %792 = vmatprep.subr.mxu0 0.0
    %793 = vmatpush1.msra.mxu0 0.0
    %794 = vmatprep.subr.mxu0 0.0
    %795 = vmatpush1.msra.mxu0 0.0
    %796 = vmatprep.subr.mxu0 0.0
    %797 = vmatpush1.msra.mxu0 0.0
    %798 = vmatprep.subr.mxu0 0.0
    %799 = vmatpush1.msra.mxu0 0.0
    %800 = vmatprep.subr.mxu0 0.0
    %801 = vmatpush1.msra.mxu0 0.0
    %802 = vmatprep.subr.mxu0 0.0
    %803 = vmatpush1.msra.mxu0 0.0
    %804 = vmatprep.subr.mxu0 0.0
    %805 = vmatpush1.msra.mxu0 0.0
    %806 = vmatprep.subr.mxu0 0.0
    %807 = vmatpush1.msra.mxu0 0.0
    %808 = vmatprep.subr.mxu0 0.0
    %809 = vmatpush1.msra.mxu0 0.0
    %810 = vmatprep.mubr.f32.mxu0 0.0
    %811 = vmatmul.mubr.f32.gmra.mrb[0].mxu0 %v735
    %v812 = vpop.f32.mrb[0].mxu0
    %v813 = vadd.f32 %v732, %v812
    %v814 = vpop.f32.mrb[0].mxu0
    %815 = vmatprep.mubr.f32.mxu0 0.0
    %816 = vmatmul.mubr.f32.gmra.mrb[0].mxu0 %v738
    %v817 = vpop.f32.mrb[0].mxu0
    %v818 = vadd.f32 %v732, %v817
    %v819 = vpop.f32.mrb[0].mxu0
    %820 = vmatprep.mubr.f32.mxu0 0.0
    %821 = vmatmul.mubr.f32.gmra.mrb[0].mxu0 %v741
    %v822 = vpop.f32.mrb[0].mxu0
    %v823 = vadd.f32 %v732, %v822
    %v824 = vpop.f32.mrb[0].mxu0
    %825 = vmatprep.mubr.f32.mxu0 0.0
    %826 = vmatmul.mubr.f32.gmra.mrb[0].mxu0 %v744
    %v827 = vpop.f32.mrb[0].mxu0
    %v828 = vadd.f32 %v732, %v827
    %v829 = vpop.f32.mrb[0].mxu0
    %830 = vdwg.mxu0
    %v831 = vld [vmem:[#allocation3] sm:$0xff]
    %v832 = vld [vmem:[#allocation3 + $0x8] sm:$0xff]
    %v833 = vld [vmem:[#allocation3 + $0x10] sm:$0xff]
    %v834 = vld [vmem:[#allocation3 + $0x18] sm:$0xff]
    %v835 = vmul.f32 %v831, %v196
    %v836 = vmul.f32 %v832, %v197
    %v837 = vmul.f32 %v833, %v198
    %v838 = vmul.f32 %v834, %v199
    %v839 = vld [vmem:[%s3] sm:$0xff]
    %v840 = vld [vmem:[%s3 + $0x8] sm:$0xff]
    %v841 = vld [vmem:[%s3 + $0x10] sm:$0xff]
    %v842 = vld [vmem:[%s3 + $0x18] sm:$0xff]
    %v844 = vsel %vm717, %v835, 0
    %v847 = vsel %vm717, %v836, 0
    %v850 = vsel %vm717, %v837, 0
    %v853 = vsel %vm717, %v838, 0
    %855 = vmatprep.subr.mxu0 0.0
    %856 = vmatpush1.msra.mxu0 %v839
    %857 = vmatprep.subr.mxu0 0.0
    %858 = vmatpush1.msra.mxu0 %v840
    %859 = vmatprep.subr.mxu0 0.0
    %860 = vmatpush1.msra.mxu0 %v841
    %861 = vmatprep.subr.mxu0 0.0
    %862 = vmatpush1.msra.mxu0 %v842
    %863 = vmatprep.subr.mxu0 0.0
    %864 = vmatpush1.msra.mxu0 0.0
    %865 = vmatprep.subr.mxu0 0.0
    %866 = vmatpush1.msra.mxu0 0.0
    %867 = vmatprep.subr.mxu0 0.0
    %868 = vmatpush1.msra.mxu0 0.0
    %869 = vmatprep.subr.mxu0 0.0
    %870 = vmatpush1.msra.mxu0 0.0
    %871 = vmatprep.subr.mxu0 0.0
    %872 = vmatpush1.msra.mxu0 0.0
    %873 = vmatprep.subr.mxu0 0.0
    %874 = vmatpush1.msra.mxu0 0.0
    %875 = vmatprep.subr.mxu0 0.0
    %876 = vmatpush1.msra.mxu0 0.0
    %877 = vmatprep.subr.mxu0 0.0
    %878 = vmatpush1.msra.mxu0 0.0
    %879 = vmatprep.subr.mxu0 0.0
    %880 = vmatpush1.msra.mxu0 0.0
    %881 = vmatprep.subr.mxu0 0.0
    %882 = vmatpush1.msra.mxu0 0.0
    %883 = vmatprep.subr.mxu0 0.0
    %884 = vmatpush1.msra.mxu0 0.0
    %885 = vmatprep.subr.mxu0 0.0
    %886 = vmatpush1.msra.mxu0 0.0
    %887 = vmatprep.subr.mxu0 0.0
    %888 = vmatpush1.msra.mxu0 0.0
    %889 = vmatprep.subr.mxu0 0.0
    %890 = vmatpush1.msra.mxu0 0.0
    %891 = vmatprep.subr.mxu0 0.0
    %892 = vmatpush1.msra.mxu0 0.0
    %893 = vmatprep.subr.mxu0 0.0
    %894 = vmatpush1.msra.mxu0 0.0
    %895 = vmatprep.subr.mxu0 0.0
    %896 = vmatpush1.msra.mxu0 0.0
    %897 = vmatprep.subr.mxu0 0.0
    %898 = vmatpush1.msra.mxu0 0.0
    %899 = vmatprep.subr.mxu0 0.0
    %900 = vmatpush1.msra.mxu0 0.0
    %901 = vmatprep.subr.mxu0 0.0
    %902 = vmatpush1.msra.mxu0 0.0
    %903 = vmatprep.subr.mxu0 0.0
    %904 = vmatpush1.msra.mxu0 0.0
    %905 = vmatprep.subr.mxu0 0.0
    %906 = vmatpush1.msra.mxu0 0.0
    %907 = vmatprep.subr.mxu0 0.0
    %908 = vmatpush1.msra.mxu0 0.0
    %909 = vmatprep.subr.mxu0 0.0
    %910 = vmatpush1.msra.mxu0 0.0
    %911 = vmatprep.subr.mxu0 0.0
    %912 = vmatpush1.msra.mxu0 0.0
    %913 = vmatprep.subr.mxu0 0.0
    %914 = vmatpush1.msra.mxu0 0.0
    %915 = vmatprep.subr.mxu0 0.0
    %916 = vmatpush1.msra.mxu0 0.0
    %917 = vmatprep.subr.mxu0 0.0
    %918 = vmatpush1.msra.mxu0 0.0
    %919 = vmatprep.mubr.f32.mxu0 0.0
    %920 = vmatmul.mubr.f32.gmra.mrb[0].mxu0 %v844
    %v921 = vpop.f32.mrb[0].mxu0
    %v922 = vadd.f32 0.0, %v921
    %v923 = vpop.f32.mrb[0].mxu0
    %924 = vmatprep.mubr.f32.mxu0 0.0
    %925 = vmatmul.mubr.f32.gmra.mrb[0].mxu0 %v847
    %v926 = vpop.f32.mrb[0].mxu0
    %v927 = vadd.f32 0.0, %v926
    %v928 = vpop.f32.mrb[0].mxu0
    %929 = vmatprep.mubr.f32.mxu0 0.0
    %930 = vmatmul.mubr.f32.gmra.mrb[0].mxu0 %v850
    %v931 = vpop.f32.mrb[0].mxu0
    %v932 = vadd.f32 0.0, %v931
    %v933 = vpop.f32.mrb[0].mxu0
    %934 = vmatprep.mubr.f32.mxu0 0.0
    %935 = vmatmul.mubr.f32.gmra.mrb[0].mxu0 %v853
    %v936 = vpop.f32.mrb[0].mxu0
    %v937 = vadd.f32 0.0, %v936
    %v938 = vpop.f32.mrb[0].mxu0
    %939 = vdwg.mxu0
    %v940 = vadd.f32 %v813, %v922
    %v941 = vadd.f32 %v818, %v927
    %v942 = vadd.f32 %v823, %v932
    %v943 = vadd.f32 %v828, %v937
    %v944 = vld [vmem:[#allocation3 + $0x1] sm:$0xff]
    %v945 = vld [vmem:[#allocation3 + $0x9] sm:$0xff]
    %v946 = vld [vmem:[#allocation3 + $0x11] sm:$0xff]
    %v947 = vld [vmem:[#allocation3 + $0x19] sm:$0xff]
    %v948 = vmul.f32 %v944, %v325
    %v949 = vmul.f32 %v945, %v326
    %v950 = vmul.f32 %v946, %v327
    %v951 = vmul.f32 %v947, %v328
    %s952 = scalar_lea.vmem %s3, 32
    %v953 = vld [vmem:[%s952] sm:$0xff]
    %v954 = vld [vmem:[%s952 + $0x8] sm:$0xff]
    %v955 = vld [vmem:[%s952 + $0x10] sm:$0xff]
    %v956 = vld [vmem:[%s952 + $0x18] sm:$0xff]
    %v958 = vsel %vm717, %v948, 0
    %v961 = vsel %vm717, %v949, 0
    %v964 = vsel %vm717, %v950, 0
    %v967 = vsel %vm717, %v951, 0
    %969 = vmatprep.subr.mxu0 0.0
    %970 = vmatpush1.msra.mxu0 %v953
    %971 = vmatprep.subr.mxu0 0.0
    %972 = vmatpush1.msra.mxu0 %v954
    %973 = vmatprep.subr.mxu0 0.0
    %974 = vmatpush1.msra.mxu0 %v955
    %975 = vmatprep.subr.mxu0 0.0
    %976 = vmatpush1.msra.mxu0 %v956
    %977 = vmatprep.subr.mxu0 0.0
    %978 = vmatpush1.msra.mxu0 0.0
    %979 = vmatprep.subr.mxu0 0.0
    %980 = vmatpush1.msra.mxu0 0.0
    %981 = vmatprep.subr.mxu0 0.0
    %982 = vmatpush1.msra.mxu0 0.0
    %983 = vmatprep.subr.mxu0 0.0
    %984 = vmatpush1.msra.mxu0 0.0
    %985 = vmatprep.subr.mxu0 0.0
    %986 = vmatpush1.msra.mxu0 0.0
    %987 = vmatprep.subr.mxu0 0.0
    %988 = vmatpush1.msra.mxu0 0.0
    %989 = vmatprep.subr.mxu0 0.0
    %990 = vmatpush1.msra.mxu0 0.0
    %991 = vmatprep.subr.mxu0 0.0
    %992 = vmatpush1.msra.mxu0 0.0
    %993 = vmatprep.subr.mxu0 0.0
    %994 = vmatpush1.msra.mxu0 0.0
    %995 = vmatprep.subr.mxu0 0.0
    %996 = vmatpush1.msra.mxu0 0.0
    %997 = vmatprep.subr.mxu0 0.0
    %998 = vmatpush1.msra.mxu0 0.0
    %999 = vmatprep.subr.mxu0 0.0
    %1000 = vmatpush1.msra.mxu0 0.0
    %1001 = vmatprep.subr.mxu0 0.0
    %1002 = vmatpush1.msra.mxu0 0.0
    %1003 = vmatprep.subr.mxu0 0.0
    %1004 = vmatpush1.msra.mxu0 0.0
    %1005 = vmatprep.subr.mxu0 0.0
    %1006 = vmatpush1.msra.mxu0 0.0
    %1007 = vmatprep.subr.mxu0 0.0
    %1008 = vmatpush1.msra.mxu0 0.0
    %1009 = vmatprep.subr.mxu0 0.0
    %1010 = vmatpush1.msra.mxu0 0.0
    %1011 = vmatprep.subr.mxu0 0.0
    %1012 = vmatpush1.msra.mxu0 0.0
    %1013 = vmatprep.subr.mxu0 0.0
    %1014 = vmatpush1.msra.mxu0 0.0
    %1015 = vmatprep.subr.mxu0 0.0
    %1016 = vmatpush1.msra.mxu0 0.0
    %1017 = vmatprep.subr.mxu0 0.0
    %1018 = vmatpush1.msra.mxu0 0.0
    %1019 = vmatprep.subr.mxu0 0.0
    %1020 = vmatpush1.msra.mxu0 0.0
    %1021 = vmatprep.subr.mxu0 0.0
    %1022 = vmatpush1.msra.mxu0 0.0
    %1023 = vmatprep.subr.mxu0 0.0
    %1024 = vmatpush1.msra.mxu0 0.0
    %1025 = vmatprep.subr.mxu0 0.0
    %1026 = vmatpush1.msra.mxu0 0.0
    %1027 = vmatprep.subr.mxu0 0.0
    %1028 = vmatpush1.msra.mxu0 0.0
    %1029 = vmatprep.subr.mxu0 0.0
    %1030 = vmatpush1.msra.mxu0 0.0
    %1031 = vmatprep.subr.mxu0 0.0
    %1032 = vmatpush1.msra.mxu0 0.0
    %1033 = vmatprep.mubr.f32.mxu0 0.0
    %1034 = vmatmul.mubr.f32.gmra.mrb[0].mxu0 %v958
    %v1035 = vpop.f32.mrb[0].mxu0
    %v1036 = vadd.f32 0.0, %v1035
    %v1037 = vpop.f32.mrb[0].mxu0
    %1038 = vmatprep.mubr.f32.mxu0 0.0
    %1039 = vmatmul.mubr.f32.gmra.mrb[0].mxu0 %v961
    %v1040 = vpop.f32.mrb[0].mxu0
    %v1041 = vadd.f32 0.0, %v1040
    %v1042 = vpop.f32.mrb[0].mxu0
    %1043 = vmatprep.mubr.f32.mxu0 0.0
    %1044 = vmatmul.mubr.f32.gmra.mrb[0].mxu0 %v964
    %v1045 = vpop.f32.mrb[0].mxu0
    %v1046 = vadd.f32 0.0, %v1045
    %v1047 = vpop.f32.mrb[0].mxu0
    %1048 = vmatprep.mubr.f32.mxu0 0.0
    %1049 = vmatmul.mubr.f32.gmra.mrb[0].mxu0 %v967
    %v1050 = vpop.f32.mrb[0].mxu0
    %v1051 = vadd.f32 0.0, %v1050
    %v1052 = vpop.f32.mrb[0].mxu0
    %1053 = vdwg.mxu0
    %v1054 = vadd.f32 %v940, %v1036
    %v1055 = vadd.f32 %v941, %v1041
    %v1056 = vadd.f32 %v942, %v1046
    %v1057 = vadd.f32 %v943, %v1051
    %v1058 = vld [vmem:[#allocation3 + $0x2] sm:$0xff]
    %v1059 = vld [vmem:[#allocation3 + $0xa] sm:$0xff]
    %v1060 = vld [vmem:[#allocation3 + $0x12] sm:$0xff]
    %v1061 = vld [vmem:[#allocation3 + $0x1a] sm:$0xff]
    %v1062 = vmul.f32 %v1058, %v455
    %v1063 = vmul.f32 %v1059, %v456
    %v1064 = vmul.f32 %v1060, %v457
    %v1065 = vmul.f32 %v1061, %v458
    %s1066 = scalar_lea.vmem %s3, 64
    %v1067 = vld [vmem:[%s1066] sm:$0xff]
    %v1068 = vld [vmem:[%s1066 + $0x8] sm:$0xff]
    %v1069 = vld [vmem:[%s1066 + $0x10] sm:$0xff]
    %v1070 = vld [vmem:[%s1066 + $0x18] sm:$0xff]
    %v1072 = vsel %vm717, %v1062, 0
    %v1075 = vsel %vm717, %v1063, 0
    %v1078 = vsel %vm717, %v1064, 0
    %v1081 = vsel %vm717, %v1065, 0
    %1083 = vmatprep.subr.mxu0 0.0
    %1084 = vmatpush1.msra.mxu0 %v1067
    %1085 = vmatprep.subr.mxu0 0.0
    %1086 = vmatpush1.msra.mxu0 %v1068
    %1087 = vmatprep.subr.mxu0 0.0
    %1088 = vmatpush1.msra.mxu0 %v1069
    %1089 = vmatprep.subr.mxu0 0.0
    %1090 = vmatpush1.msra.mxu0 %v1070
    %1091 = vmatprep.subr.mxu0 0.0
    %1092 = vmatpush1.msra.mxu0 0.0
    %1093 = vmatprep.subr.mxu0 0.0
    %1094 = vmatpush1.msra.mxu0 0.0
    %1095 = vmatprep.subr.mxu0 0.0
    %1096 = vmatpush1.msra.mxu0 0.0
    %1097 = vmatprep.subr.mxu0 0.0
    %1098 = vmatpush1.msra.mxu0 0.0
    %1099 = vmatprep.subr.mxu0 0.0
    %1100 = vmatpush1.msra.mxu0 0.0
    %1101 = vmatprep.subr.mxu0 0.0
    %1102 = vmatpush1.msra.mxu0 0.0
    %1103 = vmatprep.subr.mxu0 0.0
    %1104 = vmatpush1.msra.mxu0 0.0
    %1105 = vmatprep.subr.mxu0 0.0
    %1106 = vmatpush1.msra.mxu0 0.0
    %1107 = vmatprep.subr.mxu0 0.0
    %1108 = vmatpush1.msra.mxu0 0.0
    %1109 = vmatprep.subr.mxu0 0.0
    %1110 = vmatpush1.msra.mxu0 0.0
    %1111 = vmatprep.subr.mxu0 0.0
    %1112 = vmatpush1.msra.mxu0 0.0
    %1113 = vmatprep.subr.mxu0 0.0
    %1114 = vmatpush1.msra.mxu0 0.0
    %1115 = vmatprep.subr.mxu0 0.0
    %1116 = vmatpush1.msra.mxu0 0.0
    %1117 = vmatprep.subr.mxu0 0.0
    %1118 = vmatpush1.msra.mxu0 0.0
    %1119 = vmatprep.subr.mxu0 0.0
    %1120 = vmatpush1.msra.mxu0 0.0
    %1121 = vmatprep.subr.mxu0 0.0
    %1122 = vmatpush1.msra.mxu0 0.0
    %1123 = vmatprep.subr.mxu0 0.0
    %1124 = vmatpush1.msra.mxu0 0.0
    %1125 = vmatprep.subr.mxu0 0.0
    %1126 = vmatpush1.msra.mxu0 0.0
    %1127 = vmatprep.subr.mxu0 0.0
    %1128 = vmatpush1.msra.mxu0 0.0
    %1129 = vmatprep.subr.mxu0 0.0
    %1130 = vmatpush1.msra.mxu0 0.0
    %1131 = vmatprep.subr.mxu0 0.0
    %1132 = vmatpush1.msra.mxu0 0.0
    %1133 = vmatprep.subr.mxu0 0.0
    %1134 = vmatpush1.msra.mxu0 0.0
    %1135 = vmatprep.subr.mxu0 0.0
    %1136 = vmatpush1.msra.mxu0 0.0
    %1137 = vmatprep.subr.mxu0 0.0
    %1138 = vmatpush1.msra.mxu0 0.0
    %1139 = vmatprep.subr.mxu0 0.0
    %1140 = vmatpush1.msra.mxu0 0.0
    %1141 = vmatprep.subr.mxu0 0.0
    %1142 = vmatpush1.msra.mxu0 0.0
    %1143 = vmatprep.subr.mxu0 0.0
    %1144 = vmatpush1.msra.mxu0 0.0
    %1145 = vmatprep.subr.mxu0 0.0
    %1146 = vmatpush1.msra.mxu0 0.0
    %1147 = vmatprep.mubr.f32.mxu0 0.0
    %1148 = vmatmul.mubr.f32.gmra.mrb[0].mxu0 %v1072
    %v1149 = vpop.f32.mrb[0].mxu0
    %v1150 = vadd.f32 0.0, %v1149
    %v1151 = vpop.f32.mrb[0].mxu0
    %1152 = vmatprep.mubr.f32.mxu0 0.0
    %1153 = vmatmul.mubr.f32.gmra.mrb[0].mxu0 %v1075
    %v1154 = vpop.f32.mrb[0].mxu0
    %v1155 = vadd.f32 0.0, %v1154
    %v1156 = vpop.f32.mrb[0].mxu0
    %1157 = vmatprep.mubr.f32.mxu0 0.0
    %1158 = vmatmul.mubr.f32.gmra.mrb[0].mxu0 %v1078
    %v1159 = vpop.f32.mrb[0].mxu0
    %v1160 = vadd.f32 0.0, %v1159
    %v1161 = vpop.f32.mrb[0].mxu0
    %1162 = vmatprep.mubr.f32.mxu0 0.0
    %1163 = vmatmul.mubr.f32.gmra.mrb[0].mxu0 %v1081
    %v1164 = vpop.f32.mrb[0].mxu0
    %v1165 = vadd.f32 0.0, %v1164
    %v1166 = vpop.f32.mrb[0].mxu0
    %1167 = vdwg.mxu0
    %v1168 = vadd.f32 %v1054, %v1150
    %v1169 = vadd.f32 %v1055, %v1155
    %v1170 = vadd.f32 %v1056, %v1160
    %v1171 = vadd.f32 %v1057, %v1165
    %v1172 = vld [vmem:[#allocation3 + $0x3] sm:$0xff]
    %v1173 = vld [vmem:[#allocation3 + $0xb] sm:$0xff]
    %v1174 = vld [vmem:[#allocation3 + $0x13] sm:$0xff]
    %v1175 = vld [vmem:[#allocation3 + $0x1b] sm:$0xff]
    %v1176 = vmul.f32 %v1172, %v585
    %v1177 = vmul.f32 %v1173, %v586
    %v1178 = vmul.f32 %v1174, %v587
    %v1179 = vmul.f32 %v1175, %v588
    %s1180 = scalar_lea.vmem %s3, 96
    %v1181 = vld [vmem:[%s1180] sm:$0xff]
    %v1182 = vld [vmem:[%s1180 + $0x8] sm:$0xff]
    %v1183 = vld [vmem:[%s1180 + $0x10] sm:$0xff]
    %v1184 = vld [vmem:[%s1180 + $0x18] sm:$0xff]
    %v1186 = vsel %vm717, %v1176, 0
    %v1189 = vsel %vm717, %v1177, 0
    %v1192 = vsel %vm717, %v1178, 0
    %v1195 = vsel %vm717, %v1179, 0
    %1197 = vmatprep.subr.mxu0 0.0
    %1198 = vmatpush1.msra.mxu0 %v1181
    %1199 = vmatprep.subr.mxu0 0.0
    %1200 = vmatpush1.msra.mxu0 %v1182
    %1201 = vmatprep.subr.mxu0 0.0
    %1202 = vmatpush1.msra.mxu0 %v1183
    %1203 = vmatprep.subr.mxu0 0.0
    %1204 = vmatpush1.msra.mxu0 %v1184
    %1205 = vmatprep.subr.mxu0 0.0
    %1206 = vmatpush1.msra.mxu0 0.0
    %1207 = vmatprep.subr.mxu0 0.0
    %1208 = vmatpush1.msra.mxu0 0.0
    %1209 = vmatprep.subr.mxu0 0.0
    %1210 = vmatpush1.msra.mxu0 0.0
    %1211 = vmatprep.subr.mxu0 0.0
    %1212 = vmatpush1.msra.mxu0 0.0
    %1213 = vmatprep.subr.mxu0 0.0
    %1214 = vmatpush1.msra.mxu0 0.0
    %1215 = vmatprep.subr.mxu0 0.0
    %1216 = vmatpush1.msra.mxu0 0.0
    %1217 = vmatprep.subr.mxu0 0.0
    %1218 = vmatpush1.msra.mxu0 0.0
    %1219 = vmatprep.subr.mxu0 0.0
    %1220 = vmatpush1.msra.mxu0 0.0
    %1221 = vmatprep.subr.mxu0 0.0
    %1222 = vmatpush1.msra.mxu0 0.0
    %1223 = vmatprep.subr.mxu0 0.0
    %1224 = vmatpush1.msra.mxu0 0.0
    %1225 = vmatprep.subr.mxu0 0.0
    %1226 = vmatpush1.msra.mxu0 0.0
    %1227 = vmatprep.subr.mxu0 0.0
    %1228 = vmatpush1.msra.mxu0 0.0
    %1229 = vmatprep.subr.mxu0 0.0
    %1230 = vmatpush1.msra.mxu0 0.0
    %1231 = vmatprep.subr.mxu0 0.0
    %1232 = vmatpush1.msra.mxu0 0.0
    %1233 = vmatprep.subr.mxu0 0.0
    %1234 = vmatpush1.msra.mxu0 0.0
    %1235 = vmatprep.subr.mxu0 0.0
    %1236 = vmatpush1.msra.mxu0 0.0
    %1237 = vmatprep.subr.mxu0 0.0
    %1238 = vmatpush1.msra.mxu0 0.0
    %1239 = vmatprep.subr.mxu0 0.0
    %1240 = vmatpush1.msra.mxu0 0.0
    %1241 = vmatprep.subr.mxu0 0.0
    %1242 = vmatpush1.msra.mxu0 0.0
    %1243 = vmatprep.subr.mxu0 0.0
    %1244 = vmatpush1.msra.mxu0 0.0
    %1245 = vmatprep.subr.mxu0 0.0
    %1246 = vmatpush1.msra.mxu0 0.0
    %1247 = vmatprep.subr.mxu0 0.0
    %1248 = vmatpush1.msra.mxu0 0.0
    %1249 = vmatprep.subr.mxu0 0.0
    %1250 = vmatpush1.msra.mxu0 0.0
    %1251 = vmatprep.subr.mxu0 0.0
    %1252 = vmatpush1.msra.mxu0 0.0
    %1253 = vmatprep.subr.mxu0 0.0
    %1254 = vmatpush1.msra.mxu0 0.0
    %1255 = vmatprep.subr.mxu0 0.0
    %1256 = vmatpush1.msra.mxu0 0.0
    %1257 = vmatprep.subr.mxu0 0.0
    %1258 = vmatpush1.msra.mxu0 0.0
    %1259 = vmatprep.subr.mxu0 0.0
    %1260 = vmatpush1.msra.mxu0 0.0
    %1261 = vmatprep.mubr.f32.mxu0 0.0
    %1262 = vmatmul.mubr.f32.gmra.mrb[0].mxu0 %v1186
    %v1263 = vpop.f32.mrb[0].mxu0
    %v1264 = vadd.f32 0.0, %v1263
    %v1265 = vpop.f32.mrb[0].mxu0
    %1266 = vmatprep.mubr.f32.mxu0 0.0
    %1267 = vmatmul.mubr.f32.gmra.mrb[0].mxu0 %v1189
    %v1268 = vpop.f32.mrb[0].mxu0
    %v1269 = vadd.f32 0.0, %v1268
    %v1270 = vpop.f32.mrb[0].mxu0
    %1271 = vmatprep.mubr.f32.mxu0 0.0
    %1272 = vmatmul.mubr.f32.gmra.mrb[0].mxu0 %v1192
    %v1273 = vpop.f32.mrb[0].mxu0
    %v1274 = vadd.f32 0.0, %v1273
    %v1275 = vpop.f32.mrb[0].mxu0
    %1276 = vmatprep.mubr.f32.mxu0 0.0
    %1277 = vmatmul.mubr.f32.gmra.mrb[0].mxu0 %v1195
    %v1278 = vpop.f32.mrb[0].mxu0
    %v1279 = vadd.f32 0.0, %v1278
    %v1280 = vpop.f32.mrb[0].mxu0
    %1281 = vdwg.mxu0
    %v1282 = vadd.f32 %v1168, %v1264
    %v1283 = vadd.f32 %v1169, %v1269
    %v1284 = vadd.f32 %v1170, %v1274
    %v1285 = vadd.f32 %v1171, %v1279
    %vm1286 = vcmp.gt.f32.partialorder %v1282, 0.0
    %vm1287 = vcmp.gt.f32.partialorder %v1283, 0.0
    %vm1288 = vcmp.gt.f32.partialorder %v1284, 0.0
    %vm1289 = vcmp.gt.f32.partialorder %v1285, 0.0
    %v1290 = vmul.f32 %v1282, 0.26081526
    %v1291 = vmul.f32 %v1283, 0.26081526
    %v1292 = vmul.f32 %v1284, 0.26081526
    %v1293 = vmul.f32 %v1285, 0.26081526
    %v1294 = vsel %vm1286, %v1282, %v1290
    %v1295 = vsel %vm1287, %v1283, %v1291
    %v1296 = vsel %vm1288, %v1284, %v1292
    %v1297 = vsel %vm1289, %v1285, %v1293
    %v1298 = vld [vmem:[%s5] sm:$0xff]
    %v1299 = vld [vmem:[%s5 + $0x8] sm:$0xff]
    %v1300 = vld [vmem:[%s5 + $0x10] sm:$0xff]
    %v1301 = vld [vmem:[%s5 + $0x18] sm:$0xff]
    %v1302 = vld [vmem:[%s5 + $0x20] sm:$0xff]
    %v1303 = vld [vmem:[%s5 + $0x28] sm:$0xff]
    %v1304 = vld [vmem:[%s5 + $0x30] sm:$0xff]
    %v1305 = vld [vmem:[%s5 + $0x38] sm:$0xff]
    %v1306 = vld [vmem:[%s6] sm:$0x1]
    %v1308 = vlaneseq
    %v1309 = vshrl.u32 %v1308, 7
    %v1310 = vsub.s32 0, %v1309
    %v1311 = vrot.slane %v1306, %v1310
    %1313 = vmatprep.subr.mxu0 0.0
    %1314 = vmatpush1.msra.mxu0 %v1298
    %1315 = vmatprep.subr.mxu0 0.0
    %1316 = vmatpush1.msra.mxu0 %v1299
    %1317 = vmatprep.subr.mxu0 0.0
    %1318 = vmatpush1.msra.mxu0 %v1300
    %1319 = vmatprep.subr.mxu0 0.0
    %1320 = vmatpush1.msra.mxu0 %v1301
    %1321 = vmatprep.subr.mxu0 0.0
    %1322 = vmatpush1.msra.mxu0 %v1302
    %1323 = vmatprep.subr.mxu0 0.0
    %1324 = vmatpush1.msra.mxu0 %v1303
    %1325 = vmatprep.subr.mxu0 0.0
    %1326 = vmatpush1.msra.mxu0 %v1304
    %1327 = vmatprep.subr.mxu0 0.0
    %1328 = vmatpush1.msra.mxu0 %v1305
    %1329 = vmatprep.subr.mxu0 0.0
    %1330 = vmatpush1.msra.mxu0 0.0
    %1331 = vmatprep.subr.mxu0 0.0
    %1332 = vmatpush1.msra.mxu0 0.0
    %1333 = vmatprep.subr.mxu0 0.0
    %1334 = vmatpush1.msra.mxu0 0.0
    %1335 = vmatprep.subr.mxu0 0.0
    %1336 = vmatpush1.msra.mxu0 0.0
    %1337 = vmatprep.subr.mxu0 0.0
    %1338 = vmatpush1.msra.mxu0 0.0
    %1339 = vmatprep.subr.mxu0 0.0
    %1340 = vmatpush1.msra.mxu0 0.0
    %1341 = vmatprep.subr.mxu0 0.0
    %1342 = vmatpush1.msra.mxu0 0.0
    %1343 = vmatprep.subr.mxu0 0.0
    %1344 = vmatpush1.msra.mxu0 0.0
    %1345 = vmatprep.subr.mxu0 0.0
    %1346 = vmatpush1.msra.mxu0 0.0
    %1347 = vmatprep.subr.mxu0 0.0
    %1348 = vmatpush1.msra.mxu0 0.0
    %1349 = vmatprep.subr.mxu0 0.0
    %1350 = vmatpush1.msra.mxu0 0.0
    %1351 = vmatprep.subr.mxu0 0.0
    %1352 = vmatpush1.msra.mxu0 0.0
    %1353 = vmatprep.subr.mxu0 0.0
    %1354 = vmatpush1.msra.mxu0 0.0
    %1355 = vmatprep.subr.mxu0 0.0
    %1356 = vmatpush1.msra.mxu0 0.0
    %1357 = vmatprep.subr.mxu0 0.0
    %1358 = vmatpush1.msra.mxu0 0.0
    %1359 = vmatprep.subr.mxu0 0.0
    %1360 = vmatpush1.msra.mxu0 0.0
    %1361 = vmatprep.subr.mxu0 0.0
    %1362 = vmatpush1.msra.mxu0 0.0
    %1363 = vmatprep.subr.mxu0 0.0
    %1364 = vmatpush1.msra.mxu0 0.0
    %1365 = vmatprep.subr.mxu0 0.0
    %1366 = vmatpush1.msra.mxu0 0.0
    %1367 = vmatprep.subr.mxu0 0.0
    %1368 = vmatpush1.msra.mxu0 0.0
    %1369 = vmatprep.subr.mxu0 0.0
    %1370 = vmatpush1.msra.mxu0 0.0
    %1371 = vmatprep.subr.mxu0 0.0
    %1372 = vmatpush1.msra.mxu0 0.0
    %1373 = vmatprep.subr.mxu0 0.0
    %1374 = vmatpush1.msra.mxu0 0.0
    %1375 = vmatprep.subr.mxu0 0.0
    %1376 = vmatpush1.msra.mxu0 0.0
    %1377 = vmatprep.mubr.f32.mxu0 0.0
    %1378 = vmatmul.mubr.f32.gmra.mrb[0].mxu0 %v88
    %v1379 = vpop.f32.mrb[0].mxu0
    %v1380 = vadd.f32 %v1311, %v1379
    %v1381 = vpop.f32.mrb[0].mxu0
    %1382 = vmatprep.mubr.f32.mxu0 0.0
    %1383 = vmatmul.mubr.f32.gmra.mrb[0].mxu0 %v91
    %v1384 = vpop.f32.mrb[0].mxu0
    %v1385 = vadd.f32 %v1311, %v1384
    %v1386 = vpop.f32.mrb[0].mxu0
    %1387 = vmatprep.mubr.f32.mxu0 0.0
    %1388 = vmatmul.mubr.f32.gmra.mrb[0].mxu0 %v94
    %v1389 = vpop.f32.mrb[0].mxu0
    %v1390 = vadd.f32 %v1311, %v1389
    %v1391 = vpop.f32.mrb[0].mxu0
    %1392 = vmatprep.mubr.f32.mxu0 0.0
    %1393 = vmatmul.mubr.f32.gmra.mrb[0].mxu0 %v97
    %v1394 = vpop.f32.mrb[0].mxu0
    %v1395 = vadd.f32 %v1311, %v1394
    %v1396 = vpop.f32.mrb[0].mxu0
    %1397 = vdwg.mxu0
    %v1398 = vadd.f32 %v1294, %v1380
    %v1399 = vadd.f32 %v1295, %v1385
    %v1400 = vadd.f32 %v1296, %v1390
    %v1401 = vadd.f32 %v1297, %v1395
    %v1402 = vmax.f32 %v1398, 0.0
    %v1403 = vmax.f32 %v1399, 0.0
    %v1404 = vmax.f32 %v1400, 0.0
    %v1405 = vmax.f32 %v1401, 0.0
    %1406 = vst.msk [vmem:[#allocation4] sm:$0xff] %vm717, 0.0
    %1407 = vst.msk [vmem:[#allocation4 + $0x8] sm:$0xff] %vm717, %v1402
    %1408 = vst.msk [vmem:[#allocation4 + $0x10] sm:$0xff] %vm717, %v1403
    %1409 = vst.msk [vmem:[#allocation4 + $0x18] sm:$0xff] %vm717, %v1404
    %1410 = vst.msk [vmem:[#allocation4 + $0x20] sm:$0xff] %vm717, %v1405
    %s1411 = scalar_lea.vmem %s7, 128
    %v1412 = vld [vmem:[%s1411] sm:$0xff]
    %v1413 = vld [vmem:[%s1411 + $0x8] sm:$0xff]
    %v1414 = vld [vmem:[%s1411 + $0x10] sm:$0xff]
    %v1415 = vld [vmem:[%s1411 + $0x18] sm:$0xff]
    %v1416 = vld [vmem:[%s8] sm:$0x1]
    %v1418 = vlaneseq
    %v1419 = vshrl.u32 %v1418, 7
    %v1420 = vsub.s32 0, %v1419
    %v1421 = vrot.slane %v1416, %v1420
    %v1424 = vsel %vm717, %v1402, 0
    %v1427 = vsel %vm717, %v1403, 0
    %v1430 = vsel %vm717, %v1404, 0
    %v1433 = vsel %vm717, %v1405, 0
    %1435 = vmatprep.subr.mxu0 0.0
    %1436 = vmatpush1.msra.mxu0 %v1412
    %1437 = vmatprep.subr.mxu0 0.0
    %1438 = vmatpush1.msra.mxu0 %v1413
    %1439 = vmatprep.subr.mxu0 0.0
    %1440 = vmatpush1.msra.mxu0 %v1414
    %1441 = vmatprep.subr.mxu0 0.0
    %1442 = vmatpush1.msra.mxu0 %v1415
    %1443 = vmatprep.subr.mxu0 0.0
    %1444 = vmatpush1.msra.mxu0 0.0
    %1445 = vmatprep.subr.mxu0 0.0
    %1446 = vmatpush1.msra.mxu0 0.0
    %1447 = vmatprep.subr.mxu0 0.0
    %1448 = vmatpush1.msra.mxu0 0.0
    %1449 = vmatprep.subr.mxu0 0.0
    %1450 = vmatpush1.msra.mxu0 0.0
    %1451 = vmatprep.subr.mxu0 0.0
    %1452 = vmatpush1.msra.mxu0 0.0
    %1453 = vmatprep.subr.mxu0 0.0
    %1454 = vmatpush1.msra.mxu0 0.0
    %1455 = vmatprep.subr.mxu0 0.0
    %1456 = vmatpush1.msra.mxu0 0.0
    %1457 = vmatprep.subr.mxu0 0.0
    %1458 = vmatpush1.msra.mxu0 0.0
    %1459 = vmatprep.subr.mxu0 0.0
    %1460 = vmatpush1.msra.mxu0 0.0
    %1461 = vmatprep.subr.mxu0 0.0
    %1462 = vmatpush1.msra.mxu0 0.0
    %1463 = vmatprep.subr.mxu0 0.0
    %1464 = vmatpush1.msra.mxu0 0.0
    %1465 = vmatprep.subr.mxu0 0.0
    %1466 = vmatpush1.msra.mxu0 0.0
    %1467 = vmatprep.subr.mxu0 0.0
    %1468 = vmatpush1.msra.mxu0 0.0
    %1469 = vmatprep.subr.mxu0 0.0
    %1470 = vmatpush1.msra.mxu0 0.0
    %1471 = vmatprep.subr.mxu0 0.0
    %1472 = vmatpush1.msra.mxu0 0.0
    %1473 = vmatprep.subr.mxu0 0.0
    %1474 = vmatpush1.msra.mxu0 0.0
    %1475 = vmatprep.subr.mxu0 0.0
    %1476 = vmatpush1.msra.mxu0 0.0
    %1477 = vmatprep.subr.mxu0 0.0
    %1478 = vmatpush1.msra.mxu0 0.0
    %1479 = vmatprep.subr.mxu0 0.0
    %1480 = vmatpush1.msra.mxu0 0.0
    %1481 = vmatprep.subr.mxu0 0.0
    %1482 = vmatpush1.msra.mxu0 0.0
    %1483 = vmatprep.subr.mxu0 0.0
    %1484 = vmatpush1.msra.mxu0 0.0
    %1485 = vmatprep.subr.mxu0 0.0
    %1486 = vmatpush1.msra.mxu0 0.0
    %1487 = vmatprep.subr.mxu0 0.0
    %1488 = vmatpush1.msra.mxu0 0.0
    %1489 = vmatprep.subr.mxu0 0.0
    %1490 = vmatpush1.msra.mxu0 0.0
    %1491 = vmatprep.subr.mxu0 0.0
    %1492 = vmatpush1.msra.mxu0 0.0
    %1493 = vmatprep.subr.mxu0 0.0
    %1494 = vmatpush1.msra.mxu0 0.0
    %1495 = vmatprep.subr.mxu0 0.0
    %1496 = vmatpush1.msra.mxu0 0.0
    %1497 = vmatprep.subr.mxu0 0.0
    %1498 = vmatpush1.msra.mxu0 0.0
    %1499 = vmatprep.mubr.f32.mxu0 0.0
    %1500 = vmatmul.mubr.f32.gmra.mrb[0].mxu0 %v1424
    %v1501 = vpop.f32.mrb[0].mxu0
    %v1502 = vadd.f32 %v1421, %v1501
    %v1503 = vpop.f32.mrb[0].mxu0
    %1504 = vmatprep.mubr.f32.mxu0 0.0
    %1505 = vmatmul.mubr.f32.gmra.mrb[0].mxu0 %v1427
    %v1506 = vpop.f32.mrb[0].mxu0
    %v1507 = vadd.f32 %v1421, %v1506
    %v1508 = vpop.f32.mrb[0].mxu0
    %1509 = vmatprep.mubr.f32.mxu0 0.0
    %1510 = vmatmul.mubr.f32.gmra.mrb[0].mxu0 %v1430
    %v1511 = vpop.f32.mrb[0].mxu0
    %v1512 = vadd.f32 %v1421, %v1511
    %v1513 = vpop.f32.mrb[0].mxu0
    %1514 = vmatprep.mubr.f32.mxu0 0.0
    %1515 = vmatmul.mubr.f32.gmra.mrb[0].mxu0 %v1433
    %v1516 = vpop.f32.mrb[0].mxu0
    %v1517 = vadd.f32 %v1421, %v1516
    %v1518 = vpop.f32.mrb[0].mxu0
    %1519 = vdwg.mxu0
    %v1520 = vld [vmem:[#allocation4] sm:$0xff]
    %v1521 = vld [vmem:[#allocation4 + $0x8] sm:$0xff]
    %v1522 = vld [vmem:[#allocation4 + $0x10] sm:$0xff]
    %v1523 = vld [vmem:[#allocation4 + $0x18] sm:$0xff]
    %vm1524 = vcmp.ge.s32.totalorder %v56, 8
    %vm1525 = vcmp.ge.s32.totalorder %v57, 8
    %vm1526 = vcmp.ge.s32.totalorder %v58, 8
    %vm1527 = vcmp.ge.s32.totalorder %v59, 8
    %v1528 = vsel %vm1524, 1, 0
    %v1529 = vsel %vm1525, 1, 0
    %v1530 = vsel %vm1526, 1, 0
    %v1531 = vsel %vm1527, 1, 0
    %v1532 = vcvt.s32.f32 %v1528
    %v1533 = vcvt.s32.f32 %v1529
    %v1534 = vcvt.s32.f32 %v1530
    %v1535 = vcvt.s32.f32 %v1531
    %v1536 = vmul.f32 %v1520, %v1532
    %v1537 = vmul.f32 %v1521, %v1533
    %v1538 = vmul.f32 %v1522, %v1534
    %v1539 = vmul.f32 %v1523, %v1535
    %v1540 = vld [vmem:[%s7] sm:$0xff]
    %v1541 = vld [vmem:[%s7 + $0x8] sm:$0xff]
    %v1542 = vld [vmem:[%s7 + $0x10] sm:$0xff]
    %v1543 = vld [vmem:[%s7 + $0x18] sm:$0xff]
    %v1545 = vsel %vm717, %v1536, 0
    %v1548 = vsel %vm717, %v1537, 0
    %v1551 = vsel %vm717, %v1538, 0
    %v1554 = vsel %vm717, %v1539, 0
    %1556 = vmatprep.subr.mxu0 0.0
    %1557 = vmatpush1.msra.mxu0 %v1540
    %1558 = vmatprep.subr.mxu0 0.0
    %1559 = vmatpush1.msra.mxu0 %v1541
    %1560 = vmatprep.subr.mxu0 0.0
    %1561 = vmatpush1.msra.mxu0 %v1542
    %1562 = vmatprep.subr.mxu0 0.0
    %1563 = vmatpush1.msra.mxu0 %v1543
    %1564 = vmatprep.subr.mxu0 0.0
    %1565 = vmatpush1.msra.mxu0 0.0
    %1566 = vmatprep.subr.mxu0 0.0
    %1567 = vmatpush1.msra.mxu0 0.0
    %1568 = vmatprep.subr.mxu0 0.0
    %1569 = vmatpush1.msra.mxu0 0.0
    %1570 = vmatprep.subr.mxu0 0.0
    %1571 = vmatpush1.msra.mxu0 0.0
    %1572 = vmatprep.subr.mxu0 0.0
    %1573 = vmatpush1.msra.mxu0 0.0
    %1574 = vmatprep.subr.mxu0 0.0
    %1575 = vmatpush1.msra.mxu0 0.0
    %1576 = vmatprep.subr.mxu0 0.0
    %1577 = vmatpush1.msra.mxu0 0.0
    %1578 = vmatprep.subr.mxu0 0.0
    %1579 = vmatpush1.msra.mxu0 0.0
    %1580 = vmatprep.subr.mxu0 0.0
    %1581 = vmatpush1.msra.mxu0 0.0
    %1582 = vmatprep.subr.mxu0 0.0
    %1583 = vmatpush1.msra.mxu0 0.0
    %1584 = vmatprep.subr.mxu0 0.0
    %1585 = vmatpush1.msra.mxu0 0.0
    %1586 = vmatprep.subr.mxu0 0.0
    %1587 = vmatpush1.msra.mxu0 0.0
    %1588 = vmatprep.subr.mxu0 0.0
    %1589 = vmatpush1.msra.mxu0 0.0
    %1590 = vmatprep.subr.mxu0 0.0
    %1591 = vmatpush1.msra.mxu0 0.0
    %1592 = vmatprep.subr.mxu0 0.0
    %1593 = vmatpush1.msra.mxu0 0.0
    %1594 = vmatprep.subr.mxu0 0.0
    %1595 = vmatpush1.msra.mxu0 0.0
    %1596 = vmatprep.subr.mxu0 0.0
    %1597 = vmatpush1.msra.mxu0 0.0
    %1598 = vmatprep.subr.mxu0 0.0
    %1599 = vmatpush1.msra.mxu0 0.0
    %1600 = vmatprep.subr.mxu0 0.0
    %1601 = vmatpush1.msra.mxu0 0.0
    %1602 = vmatprep.subr.mxu0 0.0
    %1603 = vmatpush1.msra.mxu0 0.0
    %1604 = vmatprep.subr.mxu0 0.0
    %1605 = vmatpush1.msra.mxu0 0.0
    %1606 = vmatprep.subr.mxu0 0.0
    %1607 = vmatpush1.msra.mxu0 0.0
    %1608 = vmatprep.subr.mxu0 0.0
    %1609 = vmatpush1.msra.mxu0 0.0
    %1610 = vmatprep.subr.mxu0 0.0
    %1611 = vmatpush1.msra.mxu0 0.0
    %1612 = vmatprep.subr.mxu0 0.0
    %1613 = vmatpush1.msra.mxu0 0.0
    %1614 = vmatprep.subr.mxu0 0.0
    %1615 = vmatpush1.msra.mxu0 0.0
    %1616 = vmatprep.subr.mxu0 0.0
    %1617 = vmatpush1.msra.mxu0 0.0
    %1618 = vmatprep.subr.mxu0 0.0
    %1619 = vmatpush1.msra.mxu0 0.0
    %1620 = vmatprep.mubr.f32.mxu0 0.0
    %1621 = vmatmul.mubr.f32.gmra.mrb[0].mxu0 %v1545
    %v1622 = vpop.f32.mrb[0].mxu0
    %v1623 = vadd.f32 0.0, %v1622
    %v1624 = vpop.f32.mrb[0].mxu0
    %1625 = vmatprep.mubr.f32.mxu0 0.0
    %1626 = vmatmul.mubr.f32.gmra.mrb[0].mxu0 %v1548
    %v1627 = vpop.f32.mrb[0].mxu0
    %v1628 = vadd.f32 0.0, %v1627
    %v1629 = vpop.f32.mrb[0].mxu0
    %1630 = vmatprep.mubr.f32.mxu0 0.0
    %1631 = vmatmul.mubr.f32.gmra.mrb[0].mxu0 %v1551
    %v1632 = vpop.f32.mrb[0].mxu0
    %v1633 = vadd.f32 0.0, %v1632
    %v1634 = vpop.f32.mrb[0].mxu0
    %1635 = vmatprep.mubr.f32.mxu0 0.0
    %1636 = vmatmul.mubr.f32.gmra.mrb[0].mxu0 %v1554
    %v1637 = vpop.f32.mrb[0].mxu0
    %v1638 = vadd.f32 0.0, %v1637
    %v1639 = vpop.f32.mrb[0].mxu0
    %1640 = vdwg.mxu0
    %v1641 = vadd.f32 %v1502, %v1623
    %v1642 = vadd.f32 %v1507, %v1628
    %v1643 = vadd.f32 %v1512, %v1633
    %v1644 = vadd.f32 %v1517, %v1638
    %v1645 = vld [vmem:[#allocation4 + $0x2] sm:$0xff]
    %v1646 = vld [vmem:[#allocation4 + $0xa] sm:$0xff]
    %v1647 = vld [vmem:[#allocation4 + $0x12] sm:$0xff]
    %v1648 = vld [vmem:[#allocation4 + $0x1a] sm:$0xff]
    %vm1649 = vcmp.ge.s32.totalorder %v56, 6
    %vm1650 = vcmp.ge.s32.totalorder %v57, 6
    %vm1651 = vcmp.ge.s32.totalorder %v58, 6
    %vm1652 = vcmp.ge.s32.totalorder %v59, 6
    %v1653 = vsel %vm1649, 1, 0
    %v1654 = vsel %vm1650, 1, 0
    %v1655 = vsel %vm1651, 1, 0
    %v1656 = vsel %vm1652, 1, 0
    %v1657 = vcvt.s32.f32 %v1653
    %v1658 = vcvt.s32.f32 %v1654
    %v1659 = vcvt.s32.f32 %v1655
    %v1660 = vcvt.s32.f32 %v1656
    %v1661 = vmul.f32 %v1645, %v1657
    %v1662 = vmul.f32 %v1646, %v1658
    %v1663 = vmul.f32 %v1647, %v1659
    %v1664 = vmul.f32 %v1648, %v1660
    %s1665 = scalar_lea.vmem %s7, 32
    %v1666 = vld [vmem:[%s1665] sm:$0xff]
    %v1667 = vld [vmem:[%s1665 + $0x8] sm:$0xff]
    %v1668 = vld [vmem:[%s1665 + $0x10] sm:$0xff]
    %v1669 = vld [vmem:[%s1665 + $0x18] sm:$0xff]
    %v1671 = vsel %vm717, %v1661, 0
    %v1674 = vsel %vm717, %v1662, 0
    %v1677 = vsel %vm717, %v1663, 0
    %v1680 = vsel %vm717, %v1664, 0
    %1682 = vmatprep.subr.mxu0 0.0
    %1683 = vmatpush1.msra.mxu0 %v1666
    %1684 = vmatprep.subr.mxu0 0.0
    %1685 = vmatpush1.msra.mxu0 %v1667
    %1686 = vmatprep.subr.mxu0 0.0
    %1687 = vmatpush1.msra.mxu0 %v1668
    %1688 = vmatprep.subr.mxu0 0.0
    %1689 = vmatpush1.msra.mxu0 %v1669
    %1690 = vmatprep.subr.mxu0 0.0
    %1691 = vmatpush1.msra.mxu0 0.0
    %1692 = vmatprep.subr.mxu0 0.0
    %1693 = vmatpush1.msra.mxu0 0.0
    %1694 = vmatprep.subr.mxu0 0.0
    %1695 = vmatpush1.msra.mxu0 0.0
    %1696 = vmatprep.subr.mxu0 0.0
    %1697 = vmatpush1.msra.mxu0 0.0
    %1698 = vmatprep.subr.mxu0 0.0
    %1699 = vmatpush1.msra.mxu0 0.0
    %1700 = vmatprep.subr.mxu0 0.0
    %1701 = vmatpush1.msra.mxu0 0.0
    %1702 = vmatprep.subr.mxu0 0.0
    %1703 = vmatpush1.msra.mxu0 0.0
    %1704 = vmatprep.subr.mxu0 0.0
    %1705 = vmatpush1.msra.mxu0 0.0
    %1706 = vmatprep.subr.mxu0 0.0
    %1707 = vmatpush1.msra.mxu0 0.0
    %1708 = vmatprep.subr.mxu0 0.0
    %1709 = vmatpush1.msra.mxu0 0.0
    %1710 = vmatprep.subr.mxu0 0.0
    %1711 = vmatpush1.msra.mxu0 0.0
    %1712 = vmatprep.subr.mxu0 0.0
    %1713 = vmatpush1.msra.mxu0 0.0
    %1714 = vmatprep.subr.mxu0 0.0
    %1715 = vmatpush1.msra.mxu0 0.0
    %1716 = vmatprep.subr.mxu0 0.0
    %1717 = vmatpush1.msra.mxu0 0.0
    %1718 = vmatprep.subr.mxu0 0.0
    %1719 = vmatpush1.msra.mxu0 0.0
    %1720 = vmatprep.subr.mxu0 0.0
    %1721 = vmatpush1.msra.mxu0 0.0
    %1722 = vmatprep.subr.mxu0 0.0
    %1723 = vmatpush1.msra.mxu0 0.0
    %1724 = vmatprep.subr.mxu0 0.0
    %1725 = vmatpush1.msra.mxu0 0.0
    %1726 = vmatprep.subr.mxu0 0.0
    %1727 = vmatpush1.msra.mxu0 0.0
    %1728 = vmatprep.subr.mxu0 0.0
    %1729 = vmatpush1.msra.mxu0 0.0
    %1730 = vmatprep.subr.mxu0 0.0
    %1731 = vmatpush1.msra.mxu0 0.0
    %1732 = vmatprep.subr.mxu0 0.0
    %1733 = vmatpush1.msra.mxu0 0.0
    %1734 = vmatprep.subr.mxu0 0.0
    %1735 = vmatpush1.msra.mxu0 0.0
    %1736 = vmatprep.subr.mxu0 0.0
    %1737 = vmatpush1.msra.mxu0 0.0
    %1738 = vmatprep.subr.mxu0 0.0
    %1739 = vmatpush1.msra.mxu0 0.0
    %1740 = vmatprep.subr.mxu0 0.0
    %1741 = vmatpush1.msra.mxu0 0.0
    %1742 = vmatprep.subr.mxu0 0.0
    %1743 = vmatpush1.msra.mxu0 0.0
    %1744 = vmatprep.subr.mxu0 0.0
    %1745 = vmatpush1.msra.mxu0 0.0
    %1746 = vmatprep.mubr.f32.mxu0 0.0
    %1747 = vmatmul.mubr.f32.gmra.mrb[0].mxu0 %v1671
    %v1748 = vpop.f32.mrb[0].mxu0
    %v1749 = vadd.f32 0.0, %v1748
    %v1750 = vpop.f32.mrb[0].mxu0
    %1751 = vmatprep.mubr.f32.mxu0 0.0
    %1752 = vmatmul.mubr.f32.gmra.mrb[0].mxu0 %v1674
    %v1753 = vpop.f32.mrb[0].mxu0
    %v1754 = vadd.f32 0.0, %v1753
    %v1755 = vpop.f32.mrb[0].mxu0
    %1756 = vmatprep.mubr.f32.mxu0 0.0
    %1757 = vmatmul.mubr.f32.gmra.mrb[0].mxu0 %v1677
    %v1758 = vpop.f32.mrb[0].mxu0
    %v1759 = vadd.f32 0.0, %v1758
    %v1760 = vpop.f32.mrb[0].mxu0
    %1761 = vmatprep.mubr.f32.mxu0 0.0
    %1762 = vmatmul.mubr.f32.gmra.mrb[0].mxu0 %v1680
    %v1763 = vpop.f32.mrb[0].mxu0
    %v1764 = vadd.f32 0.0, %v1763
    %v1765 = vpop.f32.mrb[0].mxu0
    %1766 = vdwg.mxu0
    %v1767 = vadd.f32 %v1641, %v1749
    %v1768 = vadd.f32 %v1642, %v1754
    %v1769 = vadd.f32 %v1643, %v1759
    %v1770 = vadd.f32 %v1644, %v1764
    %v1771 = vld [vmem:[#allocation4 + $0x4] sm:$0xff]
    %v1772 = vld [vmem:[#allocation4 + $0xc] sm:$0xff]
    %v1773 = vld [vmem:[#allocation4 + $0x14] sm:$0xff]
    %v1774 = vld [vmem:[#allocation4 + $0x1c] sm:$0xff]
    %v1775 = vmul.f32 %v1771, %v196
    %v1776 = vmul.f32 %v1772, %v197
    %v1777 = vmul.f32 %v1773, %v198
    %v1778 = vmul.f32 %v1774, %v199
    %s1779 = scalar_lea.vmem %s7, 64
    %v1780 = vld [vmem:[%s1779] sm:$0xff]
    %v1781 = vld [vmem:[%s1779 + $0x8] sm:$0xff]
    %v1782 = vld [vmem:[%s1779 + $0x10] sm:$0xff]
    %v1783 = vld [vmem:[%s1779 + $0x18] sm:$0xff]
    %v1785 = vsel %vm717, %v1775, 0
    %v1788 = vsel %vm717, %v1776, 0
    %v1791 = vsel %vm717, %v1777, 0
    %v1794 = vsel %vm717, %v1778, 0
    %1796 = vmatprep.subr.mxu0 0.0
    %1797 = vmatpush1.msra.mxu0 %v1780
    %1798 = vmatprep.subr.mxu0 0.0
    %1799 = vmatpush1.msra.mxu0 %v1781
    %1800 = vmatprep.subr.mxu0 0.0
    %1801 = vmatpush1.msra.mxu0 %v1782
    %1802 = vmatprep.subr.mxu0 0.0
    %1803 = vmatpush1.msra.mxu0 %v1783
    %1804 = vmatprep.subr.mxu0 0.0
    %1805 = vmatpush1.msra.mxu0 0.0
    %1806 = vmatprep.subr.mxu0 0.0
    %1807 = vmatpush1.msra.mxu0 0.0
    %1808 = vmatprep.subr.mxu0 0.0
    %1809 = vmatpush1.msra.mxu0 0.0
    %1810 = vmatprep.subr.mxu0 0.0
    %1811 = vmatpush1.msra.mxu0 0.0
    %1812 = vmatprep.subr.mxu0 0.0
    %1813 = vmatpush1.msra.mxu0 0.0
    %1814 = vmatprep.subr.mxu0 0.0
    %1815 = vmatpush1.msra.mxu0 0.0
    %1816 = vmatprep.subr.mxu0 0.0
    %1817 = vmatpush1.msra.mxu0 0.0
    %1818 = vmatprep.subr.mxu0 0.0
    %1819 = vmatpush1.msra.mxu0 0.0
    %1820 = vmatprep.subr.mxu0 0.0
    %1821 = vmatpush1.msra.mxu0 0.0
    %1822 = vmatprep.subr.mxu0 0.0
    %1823 = vmatpush1.msra.mxu0 0.0
    %1824 = vmatprep.subr.mxu0 0.0
    %1825 = vmatpush1.msra.mxu0 0.0
    %1826 = vmatprep.subr.mxu0 0.0
    %1827 = vmatpush1.msra.mxu0 0.0
    %1828 = vmatprep.subr.mxu0 0.0
    %1829 = vmatpush1.msra.mxu0 0.0
    %1830 = vmatprep.subr.mxu0 0.0
    %1831 = vmatpush1.msra.mxu0 0.0
    %1832 = vmatprep.subr.mxu0 0.0
    %1833 = vmatpush1.msra.mxu0 0.0
    %1834 = vmatprep.subr.mxu0 0.0
    %1835 = vmatpush1.msra.mxu0 0.0
    %1836 = vmatprep.subr.mxu0 0.0
    %1837 = vmatpush1.msra.mxu0 0.0
    %1838 = vmatprep.subr.mxu0 0.0
    %1839 = vmatpush1.msra.mxu0 0.0
    %1840 = vmatprep.subr.mxu0 0.0
    %1841 = vmatpush1.msra.mxu0 0.0
    %1842 = vmatprep.subr.mxu0 0.0
    %1843 = vmatpush1.msra.mxu0 0.0
    %1844 = vmatprep.subr.mxu0 0.0
    %1845 = vmatpush1.msra.mxu0 0.0
    %1846 = vmatprep.subr.mxu0 0.0
    %1847 = vmatpush1.msra.mxu0 0.0
    %1848 = vmatprep.subr.mxu0 0.0
    %1849 = vmatpush1.msra.mxu0 0.0
    %1850 = vmatprep.subr.mxu0 0.0
    %1851 = vmatpush1.msra.mxu0 0.0
    %1852 = vmatprep.subr.mxu0 0.0
    %1853 = vmatpush1.msra.mxu0 0.0
    %1854 = vmatprep.subr.mxu0 0.0
    %1855 = vmatpush1.msra.mxu0 0.0
    %1856 = vmatprep.subr.mxu0 0.0
    %1857 = vmatpush1.msra.mxu0 0.0
    %1858 = vmatprep.subr.mxu0 0.0
    %1859 = vmatpush1.msra.mxu0 0.0
    %1860 = vmatprep.mubr.f32.mxu0 0.0
    %1861 = vmatmul.mubr.f32.gmra.mrb[0].mxu0 %v1785
    %v1862 = vpop.f32.mrb[0].mxu0
    %v1863 = vadd.f32 0.0, %v1862
    %v1864 = vpop.f32.mrb[0].mxu0
    %1865 = vmatprep.mubr.f32.mxu0 0.0
    %1866 = vmatmul.mubr.f32.gmra.mrb[0].mxu0 %v1788
    %v1867 = vpop.f32.mrb[0].mxu0
    %v1868 = vadd.f32 0.0, %v1867
    %v1869 = vpop.f32.mrb[0].mxu0
    %1870 = vmatprep.mubr.f32.mxu0 0.0
    %1871 = vmatmul.mubr.f32.gmra.mrb[0].mxu0 %v1791
    %v1872 = vpop.f32.mrb[0].mxu0
    %v1873 = vadd.f32 0.0, %v1872
    %v1874 = vpop.f32.mrb[0].mxu0
    %1875 = vmatprep.mubr.f32.mxu0 0.0
    %1876 = vmatmul.mubr.f32.gmra.mrb[0].mxu0 %v1794
    %v1877 = vpop.f32.mrb[0].mxu0
    %v1878 = vadd.f32 0.0, %v1877
    %v1879 = vpop.f32.mrb[0].mxu0
    %1880 = vdwg.mxu0
    %v1881 = vadd.f32 %v1767, %v1863
    %v1882 = vadd.f32 %v1768, %v1868
    %v1883 = vadd.f32 %v1769, %v1873
    %v1884 = vadd.f32 %v1770, %v1878
    %v1885 = vld [vmem:[#allocation4 + $0x6] sm:$0xff]
    %v1886 = vld [vmem:[#allocation4 + $0xe] sm:$0xff]
    %v1887 = vld [vmem:[#allocation4 + $0x16] sm:$0xff]
    %v1888 = vld [vmem:[#allocation4 + $0x1e] sm:$0xff]
    %v1889 = vmul.f32 %v1885, %v455
    %v1890 = vmul.f32 %v1886, %v456
    %v1891 = vmul.f32 %v1887, %v457
    %v1892 = vmul.f32 %v1888, %v458
    %s1893 = scalar_lea.vmem %s7, 96
    %v1894 = vld [vmem:[%s1893] sm:$0xff]
    %v1895 = vld [vmem:[%s1893 + $0x8] sm:$0xff]
    %v1896 = vld [vmem:[%s1893 + $0x10] sm:$0xff]
    %v1897 = vld [vmem:[%s1893 + $0x18] sm:$0xff]
    %v1899 = vsel %vm717, %v1889, 0
    %v1902 = vsel %vm717, %v1890, 0
    %v1905 = vsel %vm717, %v1891, 0
    %v1908 = vsel %vm717, %v1892, 0
    %1910 = vmatprep.subr.mxu0 0.0
    %1911 = vmatpush1.msra.mxu0 %v1894
    %1912 = vmatprep.subr.mxu0 0.0
    %1913 = vmatpush1.msra.mxu0 %v1895
    %1914 = vmatprep.subr.mxu0 0.0
    %1915 = vmatpush1.msra.mxu0 %v1896
    %1916 = vmatprep.subr.mxu0 0.0
    %1917 = vmatpush1.msra.mxu0 %v1897
    %1918 = vmatprep.subr.mxu0 0.0
    %1919 = vmatpush1.msra.mxu0 0.0
    %1920 = vmatprep.subr.mxu0 0.0
    %1921 = vmatpush1.msra.mxu0 0.0
    %1922 = vmatprep.subr.mxu0 0.0
    %1923 = vmatpush1.msra.mxu0 0.0
    %1924 = vmatprep.subr.mxu0 0.0
    %1925 = vmatpush1.msra.mxu0 0.0
    %1926 = vmatprep.subr.mxu0 0.0
    %1927 = vmatpush1.msra.mxu0 0.0
    %1928 = vmatprep.subr.mxu0 0.0
    %1929 = vmatpush1.msra.mxu0 0.0
    %1930 = vmatprep.subr.mxu0 0.0
    %1931 = vmatpush1.msra.mxu0 0.0
    %1932 = vmatprep.subr.mxu0 0.0
    %1933 = vmatpush1.msra.mxu0 0.0
    %1934 = vmatprep.subr.mxu0 0.0
    %1935 = vmatpush1.msra.mxu0 0.0
    %1936 = vmatprep.subr.mxu0 0.0
    %1937 = vmatpush1.msra.mxu0 0.0
    %1938 = vmatprep.subr.mxu0 0.0
    %1939 = vmatpush1.msra.mxu0 0.0
    %1940 = vmatprep.subr.mxu0 0.0
    %1941 = vmatpush1.msra.mxu0 0.0
    %1942 = vmatprep.subr.mxu0 0.0
    %1943 = vmatpush1.msra.mxu0 0.0
    %1944 = vmatprep.subr.mxu0 0.0
    %1945 = vmatpush1.msra.mxu0 0.0
    %1946 = vmatprep.subr.mxu0 0.0
    %1947 = vmatpush1.msra.mxu0 0.0
    %1948 = vmatprep.subr.mxu0 0.0
    %1949 = vmatpush1.msra.mxu0 0.0
    %1950 = vmatprep.subr.mxu0 0.0
    %1951 = vmatpush1.msra.mxu0 0.0
    %1952 = vmatprep.subr.mxu0 0.0
    %1953 = vmatpush1.msra.mxu0 0.0
    %1954 = vmatprep.subr.mxu0 0.0
    %1955 = vmatpush1.msra.mxu0 0.0
    %1956 = vmatprep.subr.mxu0 0.0
    %1957 = vmatpush1.msra.mxu0 0.0
    %1958 = vmatprep.subr.mxu0 0.0
    %1959 = vmatpush1.msra.mxu0 0.0
    %1960 = vmatprep.subr.mxu0 0.0
    %1961 = vmatpush1.msra.mxu0 0.0
    %1962 = vmatprep.subr.mxu0 0.0
    %1963 = vmatpush1.msra.mxu0 0.0
    %1964 = vmatprep.subr.mxu0 0.0
    %1965 = vmatpush1.msra.mxu0 0.0
    %1966 = vmatprep.subr.mxu0 0.0
    %1967 = vmatpush1.msra.mxu0 0.0
    %1968 = vmatprep.subr.mxu0 0.0
    %1969 = vmatpush1.msra.mxu0 0.0
    %1970 = vmatprep.subr.mxu0 0.0
    %1971 = vmatpush1.msra.mxu0 0.0
    %1972 = vmatprep.subr.mxu0 0.0
    %1973 = vmatpush1.msra.mxu0 0.0
    %1974 = vmatprep.mubr.f32.mxu0 0.0
    %1975 = vmatmul.mubr.f32.gmra.mrb[0].mxu0 %v1899
    %v1976 = vpop.f32.mrb[0].mxu0
    %v1977 = vadd.f32 0.0, %v1976
    %v1978 = vpop.f32.mrb[0].mxu0
    %1979 = vmatprep.mubr.f32.mxu0 0.0
    %1980 = vmatmul.mubr.f32.gmra.mrb[0].mxu0 %v1902
    %v1981 = vpop.f32.mrb[0].mxu0
    %v1982 = vadd.f32 0.0, %v1981
    %v1983 = vpop.f32.mrb[0].mxu0
    %1984 = vmatprep.mubr.f32.mxu0 0.0
    %1985 = vmatmul.mubr.f32.gmra.mrb[0].mxu0 %v1905
    %v1986 = vpop.f32.mrb[0].mxu0
    %v1987 = vadd.f32 0.0, %v1986
    %v1988 = vpop.f32.mrb[0].mxu0
    %1989 = vmatprep.mubr.f32.mxu0 0.0
    %1990 = vmatmul.mubr.f32.gmra.mrb[0].mxu0 %v1908
    %v1991 = vpop.f32.mrb[0].mxu0
    %v1992 = vadd.f32 0.0, %v1991
    %v1993 = vpop.f32.mrb[0].mxu0
    %1994 = vdwg.mxu0
    %v1995 = vadd.f32 %v1881, %v1977
    %v1996 = vadd.f32 %v1882, %v1982
    %v1997 = vadd.f32 %v1883, %v1987
    %v1998 = vadd.f32 %v1884, %v1992
    %vm1999 = vcmp.gt.f32.partialorder %v1995, 0.0
    %vm2000 = vcmp.gt.f32.partialorder %v1996, 0.0
    %vm2001 = vcmp.gt.f32.partialorder %v1997, 0.0
    %vm2002 = vcmp.gt.f32.partialorder %v1998, 0.0
    %v2003 = vmul.f32 %v1995, 0.26081526
    %v2004 = vmul.f32 %v1996, 0.26081526
    %v2005 = vmul.f32 %v1997, 0.26081526
    %v2006 = vmul.f32 %v1998, 0.26081526
    %v2007 = vsel %vm1999, %v1995, %v2003
    %v2008 = vsel %vm2000, %v1996, %v2004
    %v2009 = vsel %vm2001, %v1997, %v2005
    %v2010 = vsel %vm2002, %v1998, %v2006
    %2011 = vst.msk [vmem:[#allocation5] sm:$0xff] %vm66, 0.0
    %2012 = vst.msk [vmem:[#allocation5 + $0x8] sm:$0xff] %vm66, %v2007
    %2013 = vst.msk [vmem:[#allocation5 + $0x10] sm:$0xff] %vm66, %v2008
    %2014 = vst.msk [vmem:[#allocation5 + $0x18] sm:$0xff] %vm66, %v2009
    %2015 = vst.msk [vmem:[#allocation5 + $0x20] sm:$0xff] %vm66, %v2010
    %s2016 = scalar_lea.vmem %s9, 256
    %v2017 = vld [vmem:[%s2016] sm:$0xff]
    %v2018 = vld [vmem:[%s2016 + $0x8] sm:$0xff]
    %v2019 = vld [vmem:[%s2016 + $0x10] sm:$0xff]
    %v2020 = vld [vmem:[%s2016 + $0x18] sm:$0xff]
    %v2021 = vld [vmem:[%s2016 + $0x20] sm:$0xff]
    %v2022 = vld [vmem:[%s2016 + $0x28] sm:$0xff]
    %v2023 = vld [vmem:[%s2016 + $0x30] sm:$0xff]
    %v2024 = vld [vmem:[%s2016 + $0x38] sm:$0xff]
    %v2025 = vld [vmem:[%s10] sm:$0x1]
    %v2027 = vlaneseq
    %v2028 = vshrl.u32 %v2027, 7
    %v2029 = vsub.s32 0, %v2028
    %v2030 = vrot.slane %v2025, %v2029
    %v2033 = vsel %vm66, %v2007, 0
    %v2036 = vsel %vm66, %v2008, 0
    %v2039 = vsel %vm66, %v2009, 0
    %v2042 = vsel %vm66, %v2010, 0
    %2044 = vmatprep.subr.mxu0 0.0
    %2045 = vmatpush1.msra.mxu0 %v2017
    %2046 = vmatprep.subr.mxu0 0.0
    %2047 = vmatpush1.msra.mxu0 %v2018
    %2048 = vmatprep.subr.mxu0 0.0
    %2049 = vmatpush1.msra.mxu0 %v2019
    %2050 = vmatprep.subr.mxu0 0.0
    %2051 = vmatpush1.msra.mxu0 %v2020
    %2052 = vmatprep.subr.mxu0 0.0
    %2053 = vmatpush1.msra.mxu0 %v2021
    %2054 = vmatprep.subr.mxu0 0.0
    %2055 = vmatpush1.msra.mxu0 %v2022
    %2056 = vmatprep.subr.mxu0 0.0
    %2057 = vmatpush1.msra.mxu0 %v2023
    %2058 = vmatprep.subr.mxu0 0.0
    %2059 = vmatpush1.msra.mxu0 %v2024
    %2060 = vmatprep.subr.mxu0 0.0
    %2061 = vmatpush1.msra.mxu0 0.0
    %2062 = vmatprep.subr.mxu0 0.0
    %2063 = vmatpush1.msra.mxu0 0.0
    %2064 = vmatprep.subr.mxu0 0.0
    %2065 = vmatpush1.msra.mxu0 0.0
    %2066 = vmatprep.subr.mxu0 0.0
    %2067 = vmatpush1.msra.mxu0 0.0
    %2068 = vmatprep.subr.mxu0 0.0
    %2069 = vmatpush1.msra.mxu0 0.0
    %2070 = vmatprep.subr.mxu0 0.0
    %2071 = vmatpush1.msra.mxu0 0.0
    %2072 = vmatprep.subr.mxu0 0.0
    %2073 = vmatpush1.msra.mxu0 0.0
    %2074 = vmatprep.subr.mxu0 0.0
    %2075 = vmatpush1.msra.mxu0 0.0
    %2076 = vmatprep.subr.mxu0 0.0
    %2077 = vmatpush1.msra.mxu0 0.0
    %2078 = vmatprep.subr.mxu0 0.0
    %2079 = vmatpush1.msra.mxu0 0.0
    %2080 = vmatprep.subr.mxu0 0.0
    %2081 = vmatpush1.msra.mxu0 0.0
    %2082 = vmatprep.subr.mxu0 0.0
    %2083 = vmatpush1.msra.mxu0 0.0
    %2084 = vmatprep.subr.mxu0 0.0
    %2085 = vmatpush1.msra.mxu0 0.0
    %2086 = vmatprep.subr.mxu0 0.0
    %2087 = vmatpush1.msra.mxu0 0.0
    %2088 = vmatprep.subr.mxu0 0.0
    %2089 = vmatpush1.msra.mxu0 0.0
    %2090 = vmatprep.subr.mxu0 0.0
    %2091 = vmatpush1.msra.mxu0 0.0
    %2092 = vmatprep.subr.mxu0 0.0
    %2093 = vmatpush1.msra.mxu0 0.0
    %2094 = vmatprep.subr.mxu0 0.0
    %2095 = vmatpush1.msra.mxu0 0.0
    %2096 = vmatprep.subr.mxu0 0.0
    %2097 = vmatpush1.msra.mxu0 0.0
    %2098 = vmatprep.subr.mxu0 0.0
    %2099 = vmatpush1.msra.mxu0 0.0
    %2100 = vmatprep.subr.mxu0 0.0
    %2101 = vmatpush1.msra.mxu0 0.0
    %2102 = vmatprep.subr.mxu0 0.0
    %2103 = vmatpush1.msra.mxu0 0.0
    %2104 = vmatprep.subr.mxu0 0.0
    %2105 = vmatpush1.msra.mxu0 0.0
    %2106 = vmatprep.subr.mxu0 0.0
    %2107 = vmatpush1.msra.mxu0 0.0
    %2108 = vmatprep.mubr.f32.mxu0 0.0
    %2109 = vmatmul.mubr.f32.gmra.mrb[0].mxu0 %v2033
    %v2110 = vpop.f32.mrb[0].mxu0
    %v2111 = vadd.f32 %v2030, %v2110
    %v2112 = vpop.f32.mrb[0].mxu0
    %2113 = vmatprep.mubr.f32.mxu0 0.0
    %2114 = vmatmul.mubr.f32.gmra.mrb[0].mxu0 %v2036
    %v2115 = vpop.f32.mrb[0].mxu0
    %v2116 = vadd.f32 %v2030, %v2115
    %v2117 = vpop.f32.mrb[0].mxu0
    %2118 = vmatprep.mubr.f32.mxu0 0.0
    %2119 = vmatmul.mubr.f32.gmra.mrb[0].mxu0 %v2039
    %v2120 = vpop.f32.mrb[0].mxu0
    %v2121 = vadd.f32 %v2030, %v2120
    %v2122 = vpop.f32.mrb[0].mxu0
    %2123 = vmatprep.mubr.f32.mxu0 0.0
    %2124 = vmatmul.mubr.f32.gmra.mrb[0].mxu0 %v2042
    %v2125 = vpop.f32.mrb[0].mxu0
    %v2126 = vadd.f32 %v2030, %v2125
    %v2127 = vpop.f32.mrb[0].mxu0
    %2128 = vdwg.mxu0
    %v2129 = vld [vmem:[#allocation5] sm:$0xff]
    %v2130 = vld [vmem:[#allocation5 + $0x8] sm:$0xff]
    %v2131 = vld [vmem:[#allocation5 + $0x10] sm:$0xff]
    %v2132 = vld [vmem:[#allocation5 + $0x18] sm:$0xff]
    %v2133 = vmul.f32 %v2129, %v1532
    %v2134 = vmul.f32 %v2130, %v1533
    %v2135 = vmul.f32 %v2131, %v1534
    %v2136 = vmul.f32 %v2132, %v1535
    %v2137 = vld [vmem:[%s9] sm:$0xff]
    %v2138 = vld [vmem:[%s9 + $0x8] sm:$0xff]
    %v2139 = vld [vmem:[%s9 + $0x10] sm:$0xff]
    %v2140 = vld [vmem:[%s9 + $0x18] sm:$0xff]
    %v2141 = vld [vmem:[%s9 + $0x20] sm:$0xff]
    %v2142 = vld [vmem:[%s9 + $0x28] sm:$0xff]
    %v2143 = vld [vmem:[%s9 + $0x30] sm:$0xff]
    %v2144 = vld [vmem:[%s9 + $0x38] sm:$0xff]
    %v2146 = vsel %vm66, %v2133, 0
    %v2149 = vsel %vm66, %v2134, 0
    %v2152 = vsel %vm66, %v2135, 0
    %v2155 = vsel %vm66, %v2136, 0
    %2157 = vmatprep.subr.mxu0 0.0
    %2158 = vmatpush1.msra.mxu0 %v2137
    %2159 = vmatprep.subr.mxu0 0.0
    %2160 = vmatpush1.msra.mxu0 %v2138
    %2161 = vmatprep.subr.mxu0 0.0
    %2162 = vmatpush1.msra.mxu0 %v2139
    %2163 = vmatprep.subr.mxu0 0.0
    %2164 = vmatpush1.msra.mxu0 %v2140
    %2165 = vmatprep.subr.mxu0 0.0
    %2166 = vmatpush1.msra.mxu0 %v2141
    %2167 = vmatprep.subr.mxu0 0.0
    %2168 = vmatpush1.msra.mxu0 %v2142
    %2169 = vmatprep.subr.mxu0 0.0
    %2170 = vmatpush1.msra.mxu0 %v2143
    %2171 = vmatprep.subr.mxu0 0.0
    %2172 = vmatpush1.msra.mxu0 %v2144
    %2173 = vmatprep.subr.mxu0 0.0
    %2174 = vmatpush1.msra.mxu0 0.0
    %2175 = vmatprep.subr.mxu0 0.0
    %2176 = vmatpush1.msra.mxu0 0.0
    %2177 = vmatprep.subr.mxu0 0.0
    %2178 = vmatpush1.msra.mxu0 0.0
    %2179 = vmatprep.subr.mxu0 0.0
    %2180 = vmatpush1.msra.mxu0 0.0
    %2181 = vmatprep.subr.mxu0 0.0
    %2182 = vmatpush1.msra.mxu0 0.0
    %2183 = vmatprep.subr.mxu0 0.0
    %2184 = vmatpush1.msra.mxu0 0.0
    %2185 = vmatprep.subr.mxu0 0.0
    %2186 = vmatpush1.msra.mxu0 0.0
    %2187 = vmatprep.subr.mxu0 0.0
    %2188 = vmatpush1.msra.mxu0 0.0
    %2189 = vmatprep.subr.mxu0 0.0
    %2190 = vmatpush1.msra.mxu0 0.0
    %2191 = vmatprep.subr.mxu0 0.0
    %2192 = vmatpush1.msra.mxu0 0.0
    %2193 = vmatprep.subr.mxu0 0.0
    %2194 = vmatpush1.msra.mxu0 0.0
    %2195 = vmatprep.subr.mxu0 0.0
    %2196 = vmatpush1.msra.mxu0 0.0
    %2197 = vmatprep.subr.mxu0 0.0
    %2198 = vmatpush1.msra.mxu0 0.0
    %2199 = vmatprep.subr.mxu0 0.0
    %2200 = vmatpush1.msra.mxu0 0.0
    %2201 = vmatprep.subr.mxu0 0.0
    %2202 = vmatpush1.msra.mxu0 0.0
    %2203 = vmatprep.subr.mxu0 0.0
    %2204 = vmatpush1.msra.mxu0 0.0
    %2205 = vmatprep.subr.mxu0 0.0
    %2206 = vmatpush1.msra.mxu0 0.0
    %2207 = vmatprep.subr.mxu0 0.0
    %2208 = vmatpush1.msra.mxu0 0.0
    %2209 = vmatprep.subr.mxu0 0.0
    %2210 = vmatpush1.msra.mxu0 0.0
    %2211 = vmatprep.subr.mxu0 0.0
    %2212 = vmatpush1.msra.mxu0 0.0
    %2213 = vmatprep.subr.mxu0 0.0
    %2214 = vmatpush1.msra.mxu0 0.0
    %2215 = vmatprep.subr.mxu0 0.0
    %2216 = vmatpush1.msra.mxu0 0.0
    %2217 = vmatprep.subr.mxu0 0.0
    %2218 = vmatpush1.msra.mxu0 0.0
    %2219 = vmatprep.subr.mxu0 0.0
    %2220 = vmatpush1.msra.mxu0 0.0
    %2221 = vmatprep.mubr.f32.mxu0 0.0
    %2222 = vmatmul.mubr.f32.gmra.mrb[0].mxu0 %v2146
    %v2223 = vpop.f32.mrb[0].mxu0
    %v2224 = vadd.f32 0.0, %v2223
    %v2225 = vpop.f32.mrb[0].mxu0
    %2226 = vmatprep.mubr.f32.mxu0 0.0
    %2227 = vmatmul.mubr.f32.gmra.mrb[0].mxu0 %v2149
    %v2228 = vpop.f32.mrb[0].mxu0
    %v2229 = vadd.f32 0.0, %v2228
    %v2230 = vpop.f32.mrb[0].mxu0
    %2231 = vmatprep.mubr.f32.mxu0 0.0
    %2232 = vmatmul.mubr.f32.gmra.mrb[0].mxu0 %v2152
    %v2233 = vpop.f32.mrb[0].mxu0
    %v2234 = vadd.f32 0.0, %v2233
    %v2235 = vpop.f32.mrb[0].mxu0
    %2236 = vmatprep.mubr.f32.mxu0 0.0
    %2237 = vmatmul.mubr.f32.gmra.mrb[0].mxu0 %v2155
    %v2238 = vpop.f32.mrb[0].mxu0
    %v2239 = vadd.f32 0.0, %v2238
    %v2240 = vpop.f32.mrb[0].mxu0
    %2241 = vdwg.mxu0
    %v2242 = vadd.f32 %v2111, %v2224
    %v2243 = vadd.f32 %v2116, %v2229
    %v2244 = vadd.f32 %v2121, %v2234
    %v2245 = vadd.f32 %v2126, %v2239
    %v2246 = vld [vmem:[#allocation5 + $0x2] sm:$0xff]
    %v2247 = vld [vmem:[#allocation5 + $0xa] sm:$0xff]
    %v2248 = vld [vmem:[#allocation5 + $0x12] sm:$0xff]
    %v2249 = vld [vmem:[#allocation5 + $0x1a] sm:$0xff]
    %v2250 = vmul.f32 %v2246, %v1657
    %v2251 = vmul.f32 %v2247, %v1658
    %v2252 = vmul.f32 %v2248, %v1659
    %v2253 = vmul.f32 %v2249, %v1660
    %s2254 = scalar_lea.vmem %s9, 64
    %v2255 = vld [vmem:[%s2254] sm:$0xff]
    %v2256 = vld [vmem:[%s2254 + $0x8] sm:$0xff]
    %v2257 = vld [vmem:[%s2254 + $0x10] sm:$0xff]
    %v2258 = vld [vmem:[%s2254 + $0x18] sm:$0xff]
    %v2259 = vld [vmem:[%s2254 + $0x20] sm:$0xff]
    %v2260 = vld [vmem:[%s2254 + $0x28] sm:$0xff]
    %v2261 = vld [vmem:[%s2254 + $0x30] sm:$0xff]
    %v2262 = vld [vmem:[%s2254 + $0x38] sm:$0xff]
    %v2264 = vsel %vm66, %v2250, 0
    %v2267 = vsel %vm66, %v2251, 0
    %v2270 = vsel %vm66, %v2252, 0
    %v2273 = vsel %vm66, %v2253, 0
    %2275 = vmatprep.subr.mxu0 0.0
    %2276 = vmatpush1.msra.mxu0 %v2255
    %2277 = vmatprep.subr.mxu0 0.0
    %2278 = vmatpush1.msra.mxu0 %v2256
    %2279 = vmatprep.subr.mxu0 0.0
    %2280 = vmatpush1.msra.mxu0 %v2257
    %2281 = vmatprep.subr.mxu0 0.0
    %2282 = vmatpush1.msra.mxu0 %v2258
    %2283 = vmatprep.subr.mxu0 0.0
    %2284 = vmatpush1.msra.mxu0 %v2259
    %2285 = vmatprep.subr.mxu0 0.0
    %2286 = vmatpush1.msra.mxu0 %v2260
    %2287 = vmatprep.subr.mxu0 0.0
    %2288 = vmatpush1.msra.mxu0 %v2261
    %2289 = vmatprep.subr.mxu0 0.0
    %2290 = vmatpush1.msra.mxu0 %v2262
    %2291 = vmatprep.subr.mxu0 0.0
    %2292 = vmatpush1.msra.mxu0 0.0
    %2293 = vmatprep.subr.mxu0 0.0
    %2294 = vmatpush1.msra.mxu0 0.0
    %2295 = vmatprep.subr.mxu0 0.0
    %2296 = vmatpush1.msra.mxu0 0.0
    %2297 = vmatprep.subr.mxu0 0.0
    %2298 = vmatpush1.msra.mxu0 0.0
    %2299 = vmatprep.subr.mxu0 0.0
    %2300 = vmatpush1.msra.mxu0 0.0
    %2301 = vmatprep.subr.mxu0 0.0
    %2302 = vmatpush1.msra.mxu0 0.0
    %2303 = vmatprep.subr.mxu0 0.0
    %2304 = vmatpush1.msra.mxu0 0.0
    %2305 = vmatprep.subr.mxu0 0.0
    %2306 = vmatpush1.msra.mxu0 0.0
    %2307 = vmatprep.subr.mxu0 0.0
    %2308 = vmatpush1.msra.mxu0 0.0
    %2309 = vmatprep.subr.mxu0 0.0
    %2310 = vmatpush1.msra.mxu0 0.0
    %2311 = vmatprep.subr.mxu0 0.0
    %2312 = vmatpush1.msra.mxu0 0.0
    %2313 = vmatprep.subr.mxu0 0.0
    %2314 = vmatpush1.msra.mxu0 0.0
    %2315 = vmatprep.subr.mxu0 0.0
    %2316 = vmatpush1.msra.mxu0 0.0
    %2317 = vmatprep.subr.mxu0 0.0
    %2318 = vmatpush1.msra.mxu0 0.0
    %2319 = vmatprep.subr.mxu0 0.0
    %2320 = vmatpush1.msra.mxu0 0.0
    %2321 = vmatprep.subr.mxu0 0.0
    %2322 = vmatpush1.msra.mxu0 0.0
    %2323 = vmatprep.subr.mxu0 0.0
    %2324 = vmatpush1.msra.mxu0 0.0
    %2325 = vmatprep.subr.mxu0 0.0
    %2326 = vmatpush1.msra.mxu0 0.0
    %2327 = vmatprep.subr.mxu0 0.0
    %2328 = vmatpush1.msra.mxu0 0.0
    %2329 = vmatprep.subr.mxu0 0.0
    %2330 = vmatpush1.msra.mxu0 0.0
    %2331 = vmatprep.subr.mxu0 0.0
    %2332 = vmatpush1.msra.mxu0 0.0
    %2333 = vmatprep.subr.mxu0 0.0
    %2334 = vmatpush1.msra.mxu0 0.0
    %2335 = vmatprep.subr.mxu0 0.0
    %2336 = vmatpush1.msra.mxu0 0.0
    %2337 = vmatprep.subr.mxu0 0.0
    %2338 = vmatpush1.msra.mxu0 0.0
    %2339 = vmatprep.mubr.f32.mxu0 0.0
    %2340 = vmatmul.mubr.f32.gmra.mrb[0].mxu0 %v2264
    %v2341 = vpop.f32.mrb[0].mxu0
    %v2342 = vadd.f32 0.0, %v2341
    %v2343 = vpop.f32.mrb[0].mxu0
    %2344 = vmatprep.mubr.f32.mxu0 0.0
    %2345 = vmatmul.mubr.f32.gmra.mrb[0].mxu0 %v2267
    %v2346 = vpop.f32.mrb[0].mxu0
    %v2347 = vadd.f32 0.0, %v2346
    %v2348 = vpop.f32.mrb[0].mxu0
    %2349 = vmatprep.mubr.f32.mxu0 0.0
    %2350 = vmatmul.mubr.f32.gmra.mrb[0].mxu0 %v2270
    %v2351 = vpop.f32.mrb[0].mxu0
    %v2352 = vadd.f32 0.0, %v2351
    %v2353 = vpop.f32.mrb[0].mxu0
    %2354 = vmatprep.mubr.f32.mxu0 0.0
    %2355 = vmatmul.mubr.f32.gmra.mrb[0].mxu0 %v2273
    %v2356 = vpop.f32.mrb[0].mxu0
    %v2357 = vadd.f32 0.0, %v2356
    %v2358 = vpop.f32.mrb[0].mxu0
    %2359 = vdwg.mxu0
    %v2360 = vadd.f32 %v2242, %v2342
    %v2361 = vadd.f32 %v2243, %v2347
    %v2362 = vadd.f32 %v2244, %v2352
    %v2363 = vadd.f32 %v2245, %v2357
    %v2364 = vld [vmem:[#allocation5 + $0x4] sm:$0xff]
    %v2365 = vld [vmem:[#allocation5 + $0xc] sm:$0xff]
    %v2366 = vld [vmem:[#allocation5 + $0x14] sm:$0xff]
    %v2367 = vld [vmem:[#allocation5 + $0x1c] sm:$0xff]
    %v2368 = vmul.f32 %v2364, %v196
    %v2369 = vmul.f32 %v2365, %v197
    %v2370 = vmul.f32 %v2366, %v198
    %v2371 = vmul.f32 %v2367, %v199
    %s2372 = scalar_lea.vmem %s9, 128
    %v2373 = vld [vmem:[%s2372] sm:$0xff]
    %v2374 = vld [vmem:[%s2372 + $0x8] sm:$0xff]
    %v2375 = vld [vmem:[%s2372 + $0x10] sm:$0xff]
    %v2376 = vld [vmem:[%s2372 + $0x18] sm:$0xff]
    %v2377 = vld [vmem:[%s2372 + $0x20] sm:$0xff]
    %v2378 = vld [vmem:[%s2372 + $0x28] sm:$0xff]
    %v2379 = vld [vmem:[%s2372 + $0x30] sm:$0xff]
    %v2380 = vld [vmem:[%s2372 + $0x38] sm:$0xff]
    %v2382 = vsel %vm66, %v2368, 0
    %v2385 = vsel %vm66, %v2369, 0
    %v2388 = vsel %vm66, %v2370, 0
    %v2391 = vsel %vm66, %v2371, 0
    %2393 = vmatprep.subr.mxu0 0.0
    %2394 = vmatpush1.msra.mxu0 %v2373
    %2395 = vmatprep.subr.mxu0 0.0
    %2396 = vmatpush1.msra.mxu0 %v2374
    %2397 = vmatprep.subr.mxu0 0.0
    %2398 = vmatpush1.msra.mxu0 %v2375
    %2399 = vmatprep.subr.mxu0 0.0
    %2400 = vmatpush1.msra.mxu0 %v2376
    %2401 = vmatprep.subr.mxu0 0.0
    %2402 = vmatpush1.msra.mxu0 %v2377
    %2403 = vmatprep.subr.mxu0 0.0
    %2404 = vmatpush1.msra.mxu0 %v2378
    %2405 = vmatprep.subr.mxu0 0.0
    %2406 = vmatpush1.msra.mxu0 %v2379
    %2407 = vmatprep.subr.mxu0 0.0
    %2408 = vmatpush1.msra.mxu0 %v2380
    %2409 = vmatprep.subr.mxu0 0.0
    %2410 = vmatpush1.msra.mxu0 0.0
    %2411 = vmatprep.subr.mxu0 0.0
    %2412 = vmatpush1.msra.mxu0 0.0
    %2413 = vmatprep.subr.mxu0 0.0
    %2414 = vmatpush1.msra.mxu0 0.0
    %2415 = vmatprep.subr.mxu0 0.0
    %2416 = vmatpush1.msra.mxu0 0.0
    %2417 = vmatprep.subr.mxu0 0.0
    %2418 = vmatpush1.msra.mxu0 0.0
    %2419 = vmatprep.subr.mxu0 0.0
    %2420 = vmatpush1.msra.mxu0 0.0
    %2421 = vmatprep.subr.mxu0 0.0
    %2422 = vmatpush1.msra.mxu0 0.0
    %2423 = vmatprep.subr.mxu0 0.0
    %2424 = vmatpush1.msra.mxu0 0.0
    %2425 = vmatprep.subr.mxu0 0.0
    %2426 = vmatpush1.msra.mxu0 0.0
    %2427 = vmatprep.subr.mxu0 0.0
    %2428 = vmatpush1.msra.mxu0 0.0
    %2429 = vmatprep.subr.mxu0 0.0
    %2430 = vmatpush1.msra.mxu0 0.0
    %2431 = vmatprep.subr.mxu0 0.0
    %2432 = vmatpush1.msra.mxu0 0.0
    %2433 = vmatprep.subr.mxu0 0.0
    %2434 = vmatpush1.msra.mxu0 0.0
    %2435 = vmatprep.subr.mxu0 0.0
    %2436 = vmatpush1.msra.mxu0 0.0
    %2437 = vmatprep.subr.mxu0 0.0
    %2438 = vmatpush1.msra.mxu0 0.0
    %2439 = vmatprep.subr.mxu0 0.0
    %2440 = vmatpush1.msra.mxu0 0.0
    %2441 = vmatprep.subr.mxu0 0.0
    %2442 = vmatpush1.msra.mxu0 0.0
    %2443 = vmatprep.subr.mxu0 0.0
    %2444 = vmatpush1.msra.mxu0 0.0
    %2445 = vmatprep.subr.mxu0 0.0
    %2446 = vmatpush1.msra.mxu0 0.0
    %2447 = vmatprep.subr.mxu0 0.0
    %2448 = vmatpush1.msra.mxu0 0.0
    %2449 = vmatprep.subr.mxu0 0.0
    %2450 = vmatpush1.msra.mxu0 0.0
    %2451 = vmatprep.subr.mxu0 0.0
    %2452 = vmatpush1.msra.mxu0 0.0
    %2453 = vmatprep.subr.mxu0 0.0
    %2454 = vmatpush1.msra.mxu0 0.0
    %2455 = vmatprep.subr.mxu0 0.0
    %2456 = vmatpush1.msra.mxu0 0.0
    %2457 = vmatprep.mubr.f32.mxu0 0.0
    %2458 = vmatmul.mubr.f32.gmra.mrb[0].mxu0 %v2382
    %v2459 = vpop.f32.mrb[0].mxu0
    %v2460 = vadd.f32 0.0, %v2459
    %v2461 = vpop.f32.mrb[0].mxu0
    %2462 = vmatprep.mubr.f32.mxu0 0.0
    %2463 = vmatmul.mubr.f32.gmra.mrb[0].mxu0 %v2385
    %v2464 = vpop.f32.mrb[0].mxu0
    %v2465 = vadd.f32 0.0, %v2464
    %v2466 = vpop.f32.mrb[0].mxu0
    %2467 = vmatprep.mubr.f32.mxu0 0.0
    %2468 = vmatmul.mubr.f32.gmra.mrb[0].mxu0 %v2388
    %v2469 = vpop.f32.mrb[0].mxu0
    %v2470 = vadd.f32 0.0, %v2469
    %v2471 = vpop.f32.mrb[0].mxu0
    %2472 = vmatprep.mubr.f32.mxu0 0.0
    %2473 = vmatmul.mubr.f32.gmra.mrb[0].mxu0 %v2391
    %v2474 = vpop.f32.mrb[0].mxu0
    %v2475 = vadd.f32 0.0, %v2474
    %v2476 = vpop.f32.mrb[0].mxu0
    %2477 = vdwg.mxu0
    %v2478 = vadd.f32 %v2360, %v2460
    %v2479 = vadd.f32 %v2361, %v2465
    %v2480 = vadd.f32 %v2362, %v2470
    %v2481 = vadd.f32 %v2363, %v2475
    %v2482 = vld [vmem:[#allocation5 + $0x6] sm:$0xff]
    %v2483 = vld [vmem:[#allocation5 + $0xe] sm:$0xff]
    %v2484 = vld [vmem:[#allocation5 + $0x16] sm:$0xff]
    %v2485 = vld [vmem:[#allocation5 + $0x1e] sm:$0xff]
    %v2486 = vmul.f32 %v2482, %v455
    %v2487 = vmul.f32 %v2483, %v456
    %v2488 = vmul.f32 %v2484, %v457
    %v2489 = vmul.f32 %v2485, %v458
    %s2490 = scalar_lea.vmem %s9, 192
    %v2491 = vld [vmem:[%s2490] sm:$0xff]
    %v2492 = vld [vmem:[%s2490 + $0x8] sm:$0xff]
    %v2493 = vld [vmem:[%s2490 + $0x10] sm:$0xff]
    %v2494 = vld [vmem:[%s2490 + $0x18] sm:$0xff]
    %v2495 = vld [vmem:[%s2490 + $0x20] sm:$0xff]
    %v2496 = vld [vmem:[%s2490 + $0x28] sm:$0xff]
    %v2497 = vld [vmem:[%s2490 + $0x30] sm:$0xff]
    %v2498 = vld [vmem:[%s2490 + $0x38] sm:$0xff]
    %v2500 = vsel %vm66, %v2486, 0
    %v2503 = vsel %vm66, %v2487, 0
    %v2506 = vsel %vm66, %v2488, 0
    %v2509 = vsel %vm66, %v2489, 0
    %2511 = vmatprep.subr.mxu0 0.0
    %2512 = vmatpush1.msra.mxu0 %v2491
    %2513 = vmatprep.subr.mxu0 0.0
    %2514 = vmatpush1.msra.mxu0 %v2492
    %2515 = vmatprep.subr.mxu0 0.0
    %2516 = vmatpush1.msra.mxu0 %v2493
    %2517 = vmatprep.subr.mxu0 0.0
    %2518 = vmatpush1.msra.mxu0 %v2494
    %2519 = vmatprep.subr.mxu0 0.0
    %2520 = vmatpush1.msra.mxu0 %v2495
    %2521 = vmatprep.subr.mxu0 0.0
    %2522 = vmatpush1.msra.mxu0 %v2496
    %2523 = vmatprep.subr.mxu0 0.0
    %2524 = vmatpush1.msra.mxu0 %v2497
    %2525 = vmatprep.subr.mxu0 0.0
    %2526 = vmatpush1.msra.mxu0 %v2498
    %2527 = vmatprep.subr.mxu0 0.0
    %2528 = vmatpush1.msra.mxu0 0.0
    %2529 = vmatprep.subr.mxu0 0.0
    %2530 = vmatpush1.msra.mxu0 0.0
    %2531 = vmatprep.subr.mxu0 0.0
    %2532 = vmatpush1.msra.mxu0 0.0
    %2533 = vmatprep.subr.mxu0 0.0
    %2534 = vmatpush1.msra.mxu0 0.0
    %2535 = vmatprep.subr.mxu0 0.0
    %2536 = vmatpush1.msra.mxu0 0.0
    %2537 = vmatprep.subr.mxu0 0.0
    %2538 = vmatpush1.msra.mxu0 0.0
    %2539 = vmatprep.subr.mxu0 0.0
    %2540 = vmatpush1.msra.mxu0 0.0
    %2541 = vmatprep.subr.mxu0 0.0
    %2542 = vmatpush1.msra.mxu0 0.0
    %2543 = vmatprep.subr.mxu0 0.0
    %2544 = vmatpush1.msra.mxu0 0.0
    %2545 = vmatprep.subr.mxu0 0.0
    %2546 = vmatpush1.msra.mxu0 0.0
    %2547 = vmatprep.subr.mxu0 0.0
    %2548 = vmatpush1.msra.mxu0 0.0
    %2549 = vmatprep.subr.mxu0 0.0
    %2550 = vmatpush1.msra.mxu0 0.0
    %2551 = vmatprep.subr.mxu0 0.0
    %2552 = vmatpush1.msra.mxu0 0.0
    %2553 = vmatprep.subr.mxu0 0.0
    %2554 = vmatpush1.msra.mxu0 0.0
    %2555 = vmatprep.subr.mxu0 0.0
    %2556 = vmatpush1.msra.mxu0 0.0
    %2557 = vmatprep.subr.mxu0 0.0
    %2558 = vmatpush1.msra.mxu0 0.0
    %2559 = vmatprep.subr.mxu0 0.0
    %2560 = vmatpush1.msra.mxu0 0.0
    %2561 = vmatprep.subr.mxu0 0.0
    %2562 = vmatpush1.msra.mxu0 0.0
    %2563 = vmatprep.subr.mxu0 0.0
    %2564 = vmatpush1.msra.mxu0 0.0
    %2565 = vmatprep.subr.mxu0 0.0
    %2566 = vmatpush1.msra.mxu0 0.0
    %2567 = vmatprep.subr.mxu0 0.0
    %2568 = vmatpush1.msra.mxu0 0.0
    %2569 = vmatprep.subr.mxu0 0.0
    %2570 = vmatpush1.msra.mxu0 0.0
    %2571 = vmatprep.subr.mxu0 0.0
    %2572 = vmatpush1.msra.mxu0 0.0
    %2573 = vmatprep.subr.mxu0 0.0
    %2574 = vmatpush1.msra.mxu0 0.0
    %2575 = vmatprep.mubr.f32.mxu0 0.0
    %2576 = vmatmul.mubr.f32.gmra.mrb[0].mxu0 %v2500
    %v2577 = vpop.f32.mrb[0].mxu0
    %v2578 = vadd.f32 0.0, %v2577
    %v2579 = vpop.f32.mrb[0].mxu0
    %2580 = vmatprep.mubr.f32.mxu0 0.0
    %2581 = vmatmul.mubr.f32.gmra.mrb[0].mxu0 %v2503
    %v2582 = vpop.f32.mrb[0].mxu0
    %v2583 = vadd.f32 0.0, %v2582
    %v2584 = vpop.f32.mrb[0].mxu0
    %2585 = vmatprep.mubr.f32.mxu0 0.0
    %2586 = vmatmul.mubr.f32.gmra.mrb[0].mxu0 %v2506
    %v2587 = vpop.f32.mrb[0].mxu0
    %v2588 = vadd.f32 0.0, %v2587
    %v2589 = vpop.f32.mrb[0].mxu0
    %2590 = vmatprep.mubr.f32.mxu0 0.0
    %2591 = vmatmul.mubr.f32.gmra.mrb[0].mxu0 %v2509
    %v2592 = vpop.f32.mrb[0].mxu0
    %v2593 = vadd.f32 0.0, %v2592
    %v2594 = vpop.f32.mrb[0].mxu0
    %2595 = vdwg.mxu0
    %v2596 = vadd.f32 %v2478, %v2578
    %v2597 = vadd.f32 %v2479, %v2583
    %v2598 = vadd.f32 %v2480, %v2588
    %v2599 = vadd.f32 %v2481, %v2593
    %vm2600 = vcmp.gt.f32.partialorder %v2596, 0.0
    %vm2601 = vcmp.gt.f32.partialorder %v2597, 0.0
    %vm2602 = vcmp.gt.f32.partialorder %v2598, 0.0
    %vm2603 = vcmp.gt.f32.partialorder %v2599, 0.0
    %v2604 = vmul.f32 %v2596, 0.26081526
    %v2605 = vmul.f32 %v2597, 0.26081526
    %v2606 = vmul.f32 %v2598, 0.26081526
    %v2607 = vmul.f32 %v2599, 0.26081526
    %v2608 = vsel %vm2600, %v2596, %v2604
    %v2609 = vsel %vm2601, %v2597, %v2605
    %v2610 = vsel %vm2602, %v2598, %v2606
    %v2611 = vsel %vm2603, %v2599, %v2607
    %v2612 = vld [vmem:[%s11] sm:$0xff]
    %v2613 = vld [vmem:[%s11 + $0x8] sm:$0xff]
    %v2614 = vld [vmem:[%s11 + $0x10] sm:$0xff]
    %v2615 = vld [vmem:[%s11 + $0x18] sm:$0xff]
    %v2616 = vld [vmem:[%s12] sm:$0x1]
    %v2618 = vlaneseq
    %v2619 = vshrl.u32 %v2618, 7
    %v2620 = vsub.s32 0, %v2619
    %v2621 = vrot.slane %v2616, %v2620
    %2623 = vmatprep.subr.mxu0 0.0
    %2624 = vmatpush1.msra.mxu0 %v2612
    %2625 = vmatprep.subr.mxu0 0.0
    %2626 = vmatpush1.msra.mxu0 %v2613
    %2627 = vmatprep.subr.mxu0 0.0
    %2628 = vmatpush1.msra.mxu0 %v2614
    %2629 = vmatprep.subr.mxu0 0.0
    %2630 = vmatpush1.msra.mxu0 %v2615
    %2631 = vmatprep.subr.mxu0 0.0
    %2632 = vmatpush1.msra.mxu0 0.0
    %2633 = vmatprep.subr.mxu0 0.0
    %2634 = vmatpush1.msra.mxu0 0.0
    %2635 = vmatprep.subr.mxu0 0.0
    %2636 = vmatpush1.msra.mxu0 0.0
    %2637 = vmatprep.subr.mxu0 0.0
    %2638 = vmatpush1.msra.mxu0 0.0
    %2639 = vmatprep.subr.mxu0 0.0
    %2640 = vmatpush1.msra.mxu0 0.0
    %2641 = vmatprep.subr.mxu0 0.0
    %2642 = vmatpush1.msra.mxu0 0.0
    %2643 = vmatprep.subr.mxu0 0.0
    %2644 = vmatpush1.msra.mxu0 0.0
    %2645 = vmatprep.subr.mxu0 0.0
    %2646 = vmatpush1.msra.mxu0 0.0
    %2647 = vmatprep.subr.mxu0 0.0
    %2648 = vmatpush1.msra.mxu0 0.0
    %2649 = vmatprep.subr.mxu0 0.0
    %2650 = vmatpush1.msra.mxu0 0.0
    %2651 = vmatprep.subr.mxu0 0.0
    %2652 = vmatpush1.msra.mxu0 0.0
    %2653 = vmatprep.subr.mxu0 0.0
    %2654 = vmatpush1.msra.mxu0 0.0
    %2655 = vmatprep.subr.mxu0 0.0
    %2656 = vmatpush1.msra.mxu0 0.0
    %2657 = vmatprep.subr.mxu0 0.0
    %2658 = vmatpush1.msra.mxu0 0.0
    %2659 = vmatprep.subr.mxu0 0.0
    %2660 = vmatpush1.msra.mxu0 0.0
    %2661 = vmatprep.subr.mxu0 0.0
    %2662 = vmatpush1.msra.mxu0 0.0
    %2663 = vmatprep.subr.mxu0 0.0
    %2664 = vmatpush1.msra.mxu0 0.0
    %2665 = vmatprep.subr.mxu0 0.0
    %2666 = vmatpush1.msra.mxu0 0.0
    %2667 = vmatprep.subr.mxu0 0.0
    %2668 = vmatpush1.msra.mxu0 0.0
    %2669 = vmatprep.subr.mxu0 0.0
    %2670 = vmatpush1.msra.mxu0 0.0
    %2671 = vmatprep.subr.mxu0 0.0
    %2672 = vmatpush1.msra.mxu0 0.0
    %2673 = vmatprep.subr.mxu0 0.0
    %2674 = vmatpush1.msra.mxu0 0.0
    %2675 = vmatprep.subr.mxu0 0.0
    %2676 = vmatpush1.msra.mxu0 0.0
    %2677 = vmatprep.subr.mxu0 0.0
    %2678 = vmatpush1.msra.mxu0 0.0
    %2679 = vmatprep.subr.mxu0 0.0
    %2680 = vmatpush1.msra.mxu0 0.0
    %2681 = vmatprep.subr.mxu0 0.0
    %2682 = vmatpush1.msra.mxu0 0.0
    %2683 = vmatprep.subr.mxu0 0.0
    %2684 = vmatpush1.msra.mxu0 0.0
    %2685 = vmatprep.subr.mxu0 0.0
    %2686 = vmatpush1.msra.mxu0 0.0
    %2687 = vmatprep.mubr.f32.mxu0 0.0
    %2688 = vmatmul.mubr.f32.gmra.mrb[0].mxu0 %v1424
    %v2689 = vpop.f32.mrb[0].mxu0
    %v2690 = vadd.f32 %v2621, %v2689
    %v2691 = vpop.f32.mrb[0].mxu0
    %2692 = vmatprep.mubr.f32.mxu0 0.0
    %2693 = vmatmul.mubr.f32.gmra.mrb[0].mxu0 %v1427
    %v2694 = vpop.f32.mrb[0].mxu0
    %v2695 = vadd.f32 %v2621, %v2694
    %v2696 = vpop.f32.mrb[0].mxu0
    %2697 = vmatprep.mubr.f32.mxu0 0.0
    %2698 = vmatmul.mubr.f32.gmra.mrb[0].mxu0 %v1430
    %v2699 = vpop.f32.mrb[0].mxu0
    %v2700 = vadd.f32 %v2621, %v2699
    %v2701 = vpop.f32.mrb[0].mxu0
    %2702 = vmatprep.mubr.f32.mxu0 0.0
    %2703 = vmatmul.mubr.f32.gmra.mrb[0].mxu0 %v1433
    %v2704 = vpop.f32.mrb[0].mxu0
    %v2705 = vadd.f32 %v2621, %v2704
    %v2706 = vpop.f32.mrb[0].mxu0
    %2707 = vdwg.mxu0
    %v2708 = vadd.f32 %v2608, %v2690
    %v2709 = vadd.f32 %v2609, %v2695
    %v2710 = vadd.f32 %v2610, %v2700
    %v2711 = vadd.f32 %v2611, %v2705
    %v2712 = vmax.f32 %v2708, 0.0
    %v2713 = vmax.f32 %v2709, 0.0
    %v2714 = vmax.f32 %v2710, 0.0
    %v2715 = vmax.f32 %v2711, 0.0
    %v2716 = vld [vmem:[%s13] sm:$0xff]
    %v2717 = vld [vmem:[%s13 + $0x8] sm:$0xff]
    %v2718 = vld [vmem:[%s13 + $0x10] sm:$0xff]
    %v2719 = vld [vmem:[%s13 + $0x18] sm:$0xff]
    %v2720 = vld [vmem:[%s13 + $0x20] sm:$0xff]
    %v2721 = vld [vmem:[%s13 + $0x28] sm:$0xff]
    %v2722 = vld [vmem:[%s13 + $0x30] sm:$0xff]
    %v2723 = vld [vmem:[%s13 + $0x38] sm:$0xff]
    %v2724 = vld [vmem:[%s14] sm:$0x1]
    %v2726 = vlaneseq
    %v2727 = vshrl.u32 %v2726, 7
    %v2728 = vsub.s32 0, %v2727
    %v2729 = vrot.slane %v2724, %v2728
    %v2732 = vsel %vm66, %v2712, 0
    %v2735 = vsel %vm66, %v2713, 0
    %v2738 = vsel %vm66, %v2714, 0
    %v2741 = vsel %vm66, %v2715, 0
    %2743 = vmatprep.subr.mxu0 0.0
    %2744 = vmatpush1.msra.mxu0 %v2716
    %2745 = vmatprep.subr.mxu0 0.0
    %2746 = vmatpush1.msra.mxu0 %v2717
    %2747 = vmatprep.subr.mxu0 0.0
    %2748 = vmatpush1.msra.mxu0 %v2718
    %2749 = vmatprep.subr.mxu0 0.0
    %2750 = vmatpush1.msra.mxu0 %v2719
    %2751 = vmatprep.subr.mxu0 0.0
    %2752 = vmatpush1.msra.mxu0 %v2720
    %2753 = vmatprep.subr.mxu0 0.0
    %2754 = vmatpush1.msra.mxu0 %v2721
    %2755 = vmatprep.subr.mxu0 0.0
    %2756 = vmatpush1.msra.mxu0 %v2722
    %2757 = vmatprep.subr.mxu0 0.0
    %2758 = vmatpush1.msra.mxu0 %v2723
    %2759 = vmatprep.subr.mxu0 0.0
    %2760 = vmatpush1.msra.mxu0 0.0
    %2761 = vmatprep.subr.mxu0 0.0
    %2762 = vmatpush1.msra.mxu0 0.0
    %2763 = vmatprep.subr.mxu0 0.0
    %2764 = vmatpush1.msra.mxu0 0.0
    %2765 = vmatprep.subr.mxu0 0.0
    %2766 = vmatpush1.msra.mxu0 0.0
    %2767 = vmatprep.subr.mxu0 0.0
    %2768 = vmatpush1.msra.mxu0 0.0
    %2769 = vmatprep.subr.mxu0 0.0
    %2770 = vmatpush1.msra.mxu0 0.0
    %2771 = vmatprep.subr.mxu0 0.0
    %2772 = vmatpush1.msra.mxu0 0.0
    %2773 = vmatprep.subr.mxu0 0.0
    %2774 = vmatpush1.msra.mxu0 0.0
    %2775 = vmatprep.subr.mxu0 0.0
    %2776 = vmatpush1.msra.mxu0 0.0
    %2777 = vmatprep.subr.mxu0 0.0
    %2778 = vmatpush1.msra.mxu0 0.0
    %2779 = vmatprep.subr.mxu0 0.0
    %2780 = vmatpush1.msra.mxu0 0.0
    %2781 = vmatprep.subr.mxu0 0.0
    %2782 = vmatpush1.msra.mxu0 0.0
    %2783 = vmatprep.subr.mxu0 0.0
    %2784 = vmatpush1.msra.mxu0 0.0
    %2785 = vmatprep.subr.mxu0 0.0
    %2786 = vmatpush1.msra.mxu0 0.0
    %2787 = vmatprep.subr.mxu0 0.0
    %2788 = vmatpush1.msra.mxu0 0.0
    %2789 = vmatprep.subr.mxu0 0.0
    %2790 = vmatpush1.msra.mxu0 0.0
    %2791 = vmatprep.subr.mxu0 0.0
    %2792 = vmatpush1.msra.mxu0 0.0
    %2793 = vmatprep.subr.mxu0 0.0
    %2794 = vmatpush1.msra.mxu0 0.0
    %2795 = vmatprep.subr.mxu0 0.0
    %2796 = vmatpush1.msra.mxu0 0.0
    %2797 = vmatprep.subr.mxu0 0.0
    %2798 = vmatpush1.msra.mxu0 0.0
    %2799 = vmatprep.subr.mxu0 0.0
    %2800 = vmatpush1.msra.mxu0 0.0
    %2801 = vmatprep.subr.mxu0 0.0
    %2802 = vmatpush1.msra.mxu0 0.0
    %2803 = vmatprep.subr.mxu0 0.0
    %2804 = vmatpush1.msra.mxu0 0.0
    %2805 = vmatprep.subr.mxu0 0.0
    %2806 = vmatpush1.msra.mxu0 0.0
    %2807 = vmatprep.mubr.f32.mxu0 0.0
    %2808 = vmatmul.mubr.f32.gmra.mrb[0].mxu0 %v2732
    %v2809 = vpop.f32.mrb[0].mxu0
    %v2810 = vpop.f32.mrb[0].mxu0
    %2811 = vmatprep.mubr.f32.mxu0 0.0
    %2812 = vmatmul.mubr.f32.gmra.mrb[0].mxu0 %v2735
    %v2813 = vpop.f32.mrb[0].mxu0
    %v2814 = vadd.f32 %v2729, %v2813
    %v2815 = vpop.f32.mrb[0].mxu0
    %2816 = vmatprep.mubr.f32.mxu0 0.0
    %2817 = vmatmul.mubr.f32.gmra.mrb[0].mxu0 %v2738
    %v2818 = vpop.f32.mrb[0].mxu0
    %v2819 = vpop.f32.mrb[0].mxu0
    %2820 = vmatprep.mubr.f32.mxu0 0.0
    %2821 = vmatmul.mubr.f32.gmra.mrb[0].mxu0 %v2741
    %v2822 = vpop.f32.mrb[0].mxu0
    %v2823 = vadd.f32 %v2729, %v2822
    %v2824 = vpop.f32.mrb[0].mxu0
    %2825 = vdwg.mxu0
    %vm2826 = vcmask 31751
    %2827 = vst.msk [vmem:[#allocation6 - $0x7] sm:$0x80] %vm2826, %v2814
    %2828 = vst.msk [vmem:[#allocation6 - $0x6] sm:$0x80] %vm2826, %v2823
    // Predicated region
    $region62: #{tcn_model_forward.1} parent=1 // pred_check
      _
    $region63: #{tcn_model_forward.1} parent=1 // pred_check_branch
      %2830 = sbr.rel (0) target = $region65
    $region64: #{tcn_model_forward.1} parent=1 // pred_region
      %s2832 = ssub.s32 32, 32
      %2833 = vsyncadd [#allocation7], %s2832
      %s2835 = sshll.u32 [#allocation6], 4
      %s2836 = int_to_ptr.vmem [resolvable:$true] %s2835
      %2838 = dma.vmem_to_hbm [thread:$0]  %s2836, 32, %s15, [#allocation7]
    $region65: #{tcn_model_forward.1} parent=1 // pred_fallthru
      _
    // Predicated region
    $region66: #{tcn_model_forward.1} parent=1 // pred_check
      _
    $region67: #{tcn_model_forward.1} parent=1 // pred_check_branch
      %2840 = sbr.rel (0) target = $region69
    $region68: #{tcn_model_forward.1} parent=1 // pred_region
      %2841 = dma.done [#allocation7], 32
    $region69: #{tcn_model_forward.1} parent=1 // pred_fallthru
      _
    %2842 = vsyncpa [#allocation7], 1

</llo_original>
